<compile_context>
chip_gen: v7x
topology: tpu7x:2x2x1
jax: 0.10.0
libtpu: 0.0.40
codegen_flags: <defaults>
</compile_context>

<pallas_src>
import functools

import jax
import jax.numpy as jnp
from jax.experimental import pallas as pl
from jax.experimental.pallas import tpu as pltpu

EPS = 1e-5

# ---- model configuration ----------------------------------------------------------
N_FILTERS = [8]
KERNEL_SIZES = [4]
STRIDES = [4]
RNN_HID = 16
NC1, NC2 = 2, 3
T, B, S1 = 8, 2, 16

F = N_FILTERS[0]        # 8   conv filters
K = KERNEL_SIZES[0]     # 4   conv kernel == pool kernel
ST = STRIDES[0]         # 4   conv stride == pool stride
H = RNN_HID             # 16
G3 = 3 * H              # 48  GRU gate width (r|z|n)
LC = S1 // K            # 4   conv positions per 16-length segment
FE = LC * F             # 32  expanded conv width (position-major, filter-minor)
LANES = 128             # lane-dense operand / output width
AUG = 8                 # ones/zeros augmentation block (keeps K a multiple of 8)

# Structural assumptions the fused kernel relies on (all hold for this config):
#   stride == kernel, segment length divisible by K (Lp == 1 per segment), and
#   RNN_HID == S1 so branch-2's rnn_out1 half reuses the same expanded conv weight.
assert ST == K and S1 == LC * K and H == S1

# ---- packed-weight row offsets (static; 8-aligned) ---------------------------------
ROWS_A = S1 + AUG        # 24  fused conv1|conv2 weights (+bias row)
ROWS_B = 2 * F + AUG     # 24  fused GRU input projections (+bias row)
ROWS_REC = 2 * H + AUG   # 40  merged recurrent weights (+bhh row)
ROWS_C2 = H + AUG        # 24  conv2 applied to rnn_out1 (+be2 row)
ROWS_G2B = F             # 8   GRU2 input-proj rows for pool window 1
ROWS_FC = 2 * H + AUG    # 40  fused fc1|fc2 (+bias row)


def _align8(n):
    return ((n + 7) // 8) * 8


OFF_A = 0
OFF_B = OFF_A + _align8(ROWS_A)       # 24
OFF_REC = OFF_B + _align8(ROWS_B)     # 48
OFF_C2 = OFF_REC + _align8(ROWS_REC)  # 88
OFF_G2B = OFF_C2 + _align8(ROWS_C2)   # 112
OFF_FC = OFF_G2B + _align8(ROWS_G2B)  # 120
TOTAL_ROWS = OFF_FC + _align8(ROWS_FC)  # 160


# ==================== fused forward kernel ==========================================
def _hedln_fused_kernel(x_ref, wp_ref, out_ref, *, t_steps, batch):
    f32 = jnp.float32
    n = t_steps * batch
    x = x_ref[...]                                                  # (N, S1)

    def ones_pad(rows):
        # (rows, AUG): first column 1 (selects the bias row of the packed weights),
        # remaining columns 0 (hit zero-padded weight rows).
        lane = jax.lax.broadcasted_iota(jnp.int32, (rows, AUG), 1)
        return (lane == 0).astype(f32)

    pad_n = ones_pad(n)
    pad_b = ones_pad(batch)

    def mm(lhs, row_off, nrows):
        return jnp.dot(lhs, wp_ref[row_off:row_off + nrows, :],
                       preferred_element_type=f32)

    # ---- hoisted: conv+BN+ReLU+maxpool for BOTH branches in one matmul -------------
    # column layout: 4 position-chunks of [branch1 feats (F) | branch2 feats (F)]
    c = jnp.maximum(mm(jnp.concatenate([x, pad_n], axis=1), OFF_A, ROWS_A), 0.0)
    oc = jnp.maximum(jnp.maximum(c[:, 0:2 * F], c[:, 2 * F:4 * F]),
                     jnp.maximum(c[:, 4 * F:6 * F], c[:, 6 * F:8 * F]))   # (N, 2F)

    # ---- hoisted: both GRU input projections in one matmul -------------------------
    gi = mm(jnp.concatenate([oc, pad_n], axis=1), OFF_B, ROWS_B)    # (N, 128)
    gi1_all = gi[:, 0:G3]                                           # gi1 (incl bih1)
    gi2base_all = gi[:, G3:2 * G3]                                  # gi2 base (incl bih2)

    # weights reused every step of the unrolled recurrence: read once
    w_rec = wp_ref[OFF_REC:OFF_REC + ROWS_REC, :]                   # (2H+8, 128)
    w_c2 = wp_ref[OFF_C2:OFF_C2 + ROWS_C2, :]                       # (H+8, 128)
    w_g2b = wp_ref[OFF_G2B:OFF_G2B + ROWS_G2B, :]                   # (F, 128)

    def gru_gates(gi_t, gh_t, h_prev):
        rz = jax.nn.sigmoid(gi_t[:, 0:2 * H] + gh_t[:, 0:2 * H])
        r, z = rz[:, 0:H], rz[:, H:2 * H]
        n_gate = jnp.tanh(gi_t[:, 2 * H:G3] + r * gh_t[:, 2 * H:G3])
        return (1.0 - z) * n_gate + z * h_prev

    h1 = jnp.zeros((batch, H), f32)
    h2 = jnp.zeros((batch, H), f32)
    haug = jnp.concatenate([h1, pad_b, h2], axis=1)                 # (B, 2H+AUG)
    hs = []
    for t in range(t_steps):                                        # fully unrolled
        lo = t * batch
        # one merged recurrent matmul for both GRUs (full bhh folded via ones lane)
        gh = jnp.dot(haug, w_rec, preferred_element_type=f32)       # (B, 128)
        # -- GRU1 step t
        h1 = gru_gates(gi1_all[lo:lo + batch, :], gh[:, 0:G3], h1)
        # -- branch 2: conv+BN+ReLU+pool on rnn_out1[t] (pool window 1), then proj
        c2 = jnp.maximum(
            jnp.dot(jnp.concatenate([h1, pad_b], axis=1), w_c2,
                    preferred_element_type=f32), 0.0)               # (B, 128)
        col1 = jnp.maximum(jnp.maximum(c2[:, 0:F], c2[:, F:2 * F]),
                           jnp.maximum(c2[:, 2 * F:3 * F], c2[:, 3 * F:4 * F]))
        gi2 = gi2base_all[lo:lo + batch, :] + jnp.dot(
            col1, w_g2b, preferred_element_type=f32)[:, 0:G3]
        # -- GRU2 step t
        h2 = gru_gates(gi2, gh[:, G3:2 * G3], h2)
        haug = jnp.concatenate([h1, pad_b, h2], axis=1)
        hs.append(haug)

    # ---- fused fc1|fc2 + sigmoid: one lane-dense (N, 128) store ---------------------
    rnn_aug = jnp.concatenate(hs, axis=0)                           # (N, 2H+AUG)
    out_ref[...] = jax.nn.sigmoid(
        jnp.dot(rnn_aug, wp_ref[OFF_FC:OFF_FC + ROWS_FC, :],
                preferred_element_type=f32))


# ==================== host-side parameter folding & packing =========================
def _fold_bn(w, b, gamma, beta, mean, var):
    scale = gamma * jax.lax.rsqrt(var + EPS)
    return w * scale[:, None, None], (b - mean) * scale + beta


def _expand_conv(wf):
    # (F,1,K) -> block-diagonal (LC*K, LC*F): We[p*K+k, p*F+f] = wf[f,0,k]
    return jnp.kron(jnp.eye(LC, dtype=jnp.float32), wf.reshape(F, K).T)


def prepare_params(p):
    """One-time BN folding + operand packing (inference-style). Returns wpack."""
    (w1, b1, g1, bt1, mu1, v1), = p["cnn1"]
    (w2, b2, g2, bt2, mu2, v2), = p["cnn2"]
    w1f, b1f = _fold_bn(w1, b1, g1, bt1, mu1, v1)
    w2f, b2f = _fold_bn(w2, b2, g2, bt2, mu2, v2)
    we1, be1 = _expand_conv(w1f), jnp.tile(b1f, LC)      # (16,32), (32,)
    we2, be2 = _expand_conv(w2f), jnp.tile(b2f, LC)

    wih1, whh1, bih1, bhh1 = p["gru1"]
    wih2, whh2, bih2, bhh2 = p["gru2"]
    wih2T = wih2.T                   # (2F, 3H); row i multiplies feature i = c*2+l
    wih2aT = wih2T[0::2, :]          # l == 0 -> pool window 0 (x half)
    wih2bT = wih2T[1::2, :]          # l == 1 -> pool window 1 (rnn_out1 half)
    fc1w, fc1b = p["fc1"]
    fc2w, fc2b = p["fc2"]

    W = jnp.zeros((TOTAL_ROWS, LANES), jnp.float32)

    # --- W_A: fused conv1|conv2 on x, position-interleaved columns, bias in ones row.
    wa = jnp.concatenate([we1.reshape(S1, LC, 1, F),
                          we2.reshape(S1, LC, 1, F)], axis=2).reshape(S1, 2 * FE)
    ba = jnp.concatenate([be1.reshape(LC, 1, F),
                          be2.reshape(LC, 1, F)], axis=1).reshape(2 * FE)
    W = W.at[OFF_A:OFF_A + S1, 0:2 * FE].set(wa)
    W = W.at[OFF_A + S1, 0:2 * FE].set(ba)

    # --- W_B: GRU input projections (gi1 | gi2_base); bih + nothing else (bhh stays
    #     inside the recurrent matmul so the n-gate r*(Wh h + bhh_n) stays exact).
    W = W.at[OFF_B:OFF_B + F, 0:G3].set(wih1.T)
    W = W.at[OFF_B + F:OFF_B + 2 * F, G3:2 * G3].set(wih2aT)
    W = W.at[OFF_B + 2 * F, 0:G3].set(bih1)
    W = W.at[OFF_B + 2 * F, G3:2 * G3].set(bih2)

    # --- W_REC: merged recurrent weights (block-diagonal) + full bhh in ones row.
    W = W.at[OFF_REC:OFF_REC + H, 0:G3].set(whh1.T)
    W = W.at[OFF_REC + H, 0:G3].set(bhh1)
    W = W.at[OFF_REC + H, G3:2 * G3].set(bhh2)
    W = W.at[OFF_REC + H + AUG:OFF_REC + 2 * H + AUG, G3:2 * G3].set(whh2.T)

    # --- W_C2: conv2 applied to rnn_out1[t] (pool window 1), be2 in ones row.
    W = W.at[OFF_C2:OFF_C2 + H, 0:FE].set(we2)
    W = W.at[OFF_C2 + H, 0:FE].set(be2)

    # --- W_G2B: GRU2 input-projection rows for pool window 1 (odd interleave rows).
    W = W.at[OFF_G2B:OFF_G2B + F, 0:G3].set(wih2bT)

    # --- W_FC: fused fc1|fc2 with biases in ones row.
    W = W.at[OFF_FC:OFF_FC + H, 0:NC1].set(fc1w.T)
    W = W.at[OFF_FC + H, 0:NC1].set(fc1b)
    W = W.at[OFF_FC + H, NC1:NC1 + NC2].set(fc2b)
    W = W.at[OFF_FC + H + AUG:OFF_FC + 2 * H + AUG, NC1:NC1 + NC2].set(fc2w.T)
    return W


# ==================== full forward (single pallas_call) =============================
def hedln_cr_forward(x, wpack):
    Tn, Bn, S = x.shape
    N = Tn * Bn
    vmem = pl.BlockSpec(memory_space=pltpu.MemorySpace.VMEM)
    out = pl.pallas_call(
        functools.partial(_hedln_fused_kernel, t_steps=Tn, batch=Bn),
        out_shape=jax.ShapeDtypeStruct((N, LANES), jnp.float32),
        in_specs=[vmem, vmem],
        out_specs=vmem,
    )(x.reshape(N, S), wpack)
    # cheap host-side slices of the single lane-dense output
    logits1 = out[:, 0:NC1].reshape(Tn, Bn, NC1)
    logits2 = out[:, NC1:NC1 + NC2].reshape(Tn, Bn, NC2)
    return logits1, logits2


# ==================== pure-JAX reference (for correctness check) ====================
def _ref_conv_block(x3d, w, b, gamma, beta, mean, var, Kk, Ss):
    _, _, L = x3d.shape
    Lc = (L - Kk) // Ss + 1
    Lp = (Lc - Kk) // Ss + 1
    conv = jnp.stack([jnp.einsum("nck,fck->nf", x3d[:, :, p * Ss:p * Ss + Kk], w)
                      for p in range(Lc)], axis=2) + b[None, :, None]
    y = (conv - mean[None, :, None]) * (gamma * jax.lax.rsqrt(var + EPS))[None, :, None] \
        + beta[None, :, None]
    y = jnp.maximum(y, 0.0)
    return jnp.stack([jnp.max(y[:, :, q * Ss:q * Ss + Kk], axis=2) for q in range(Lp)],
                     axis=2)


def _ref_gru(x, wih, whh, bih, bhh):
    Hh = whh.shape[1]

    def step(h, x_t):
        gi = x_t @ wih.T + bih
        gh = h @ whh.T + bhh
        r = jax.nn.sigmoid(gi[:, :Hh] + gh[:, :Hh])
        z = jax.nn.sigmoid(gi[:, Hh:2 * Hh] + gh[:, Hh:2 * Hh])
        nn = jnp.tanh(gi[:, 2 * Hh:] + r * gh[:, 2 * Hh:])
        h_new = (1.0 - z) * nn + z * h
        return h_new, h_new

    _, out = jax.lax.scan(step, jnp.zeros((x.shape[1], Hh), jnp.float32), x)
    return out


def reference_forward(x, p):
    Tn, Bn, S = x.shape
    h1 = x.reshape(Tn * Bn, 1, S)
    for (w, b, g, bt, mu, var), Kk, Ss in zip(p["cnn1"], KERNEL_SIZES, STRIDES):
        h1 = _ref_conv_block(h1, w, b, g, bt, mu, var, Kk, Ss)
    r1 = _ref_gru(h1.reshape(Tn, Bn, -1), *p["gru1"])
    l1 = jax.nn.sigmoid(r1.reshape(Tn * Bn, -1) @ p["fc1"][0].T + p["fc1"][1]
                        ).reshape(Tn, Bn, NC1)
    h2 = jnp.concatenate([x, r1], axis=2).reshape(Tn * Bn, 1, -1)
    for (w, b, g, bt, mu, var), Kk, Ss in zip(p["cnn2"], KERNEL_SIZES, STRIDES):
        h2 = _ref_conv_block(h2, w, b, g, bt, mu, var, Kk, Ss)
    r2 = _ref_gru(h2.reshape(Tn, Bn, -1), *p["gru2"])
    l2 = jax.nn.sigmoid(r2.reshape(Tn * Bn, -1) @ p["fc2"][0].T + p["fc2"][1]
                        ).reshape(Tn, Bn, NC2)
    return l1, l2


# ==================== deterministic parameter init ==================================
def init_params(key):
    ks = jax.random.split(key, 24)

    def nrm(k, shape, s=0.2):
        return (s * jax.random.normal(k, shape)).astype(jnp.float32)

    def bn(k0, k1, k2, k3):
        return (1.0 + nrm(k0, (F,), 0.1),                  # gamma
                nrm(k1, (F,), 0.1),                        # beta
                nrm(k2, (F,), 0.1),                        # running_mean
                1.0 + 0.1 * jnp.abs(jax.random.normal(k3, (F,))).astype(jnp.float32))

    p = {}
    p["cnn1"] = [(nrm(ks[0], (F, 1, K)), nrm(ks[1], (F,))) + bn(ks[2], ks[3], ks[4], ks[5])]
    p["gru1"] = (nrm(ks[6], (G3, F)), nrm(ks[7], (G3, H)),
                 nrm(ks[8], (G3,)), nrm(ks[9], (G3,)))
    p["fc1"] = (nrm(ks[10], (NC1, H)), nrm(ks[11], (NC1,)))
    p["cnn2"] = [(nrm(ks[12], (F, 1, K)), nrm(ks[13], (F,))) + bn(ks[14], ks[15], ks[16], ks[17])]
    p["gru2"] = (nrm(ks[18], (G3, 2 * F)), nrm(ks[19], (G3, H)),
                 nrm(ks[20], (G3,)), nrm(ks[21], (G3,)))
    p["fc2"] = (nrm(ks[22], (NC2, H)), nrm(ks[23], (NC2,)))
    return p


if __name__ == "__main__":
    key = jax.random.PRNGKey(0)
    pkey, xkey = jax.random.split(key)
    params = init_params(pkey)
    x = jax.random.normal(xkey, (T, B, S1), dtype=jnp.float32)

    wpack = prepare_params(params)            # one-time BN folding + operand packing
    fwd = jax.jit(hedln_cr_forward)
    logits1, logits2 = fwd(x, wpack)
    jax.block_until_ready((logits1, logits2))

    # reference at highest matmul precision so the tolerance mostly reflects the kernel
    with jax.default_matmul_precision("highest"):
        ref1, ref2 = reference_forward(x, params)

    assert logits1.shape == (T, B, NC1) and logits2.shape == (T, B, NC2)
    # Tightened from 1e-2; remaining slack covers MXU f32 pass-precision differences
    # between the in-kernel dots and the HIGHEST-precision XLA reference.
    assert jnp.allclose(logits1, ref1, atol=5e-3, rtol=5e-3), \
        float(jnp.max(jnp.abs(logits1 - ref1)))
    assert jnp.allclose(logits2, ref2, atol=5e-3, rtol=5e-3), \
        float(jnp.max(jnp.abs(logits2 - ref2)))
    print("KERNEL_OK")
</pallas_src>

<mosaic_0001>
module attributes {stable_mosaic.version = 11 : i64} {
  func.func @_hedln_fused_kernel(%arg0: memref<16x16xf32, #tpu.memory_space<vmem>>, %arg1: memref<160x128xf32, #tpu.memory_space<vmem>>, %arg2: memref<16x128xf32, #tpu.memory_space<vmem>>) attributes {dimension_semantics = [], scalar_prefetch = 0 : i64, scratch_operands = 0 : i64, tpu.core_type = #tpu.core_type<tc>} {
    %c0 = arith.constant 0 : index
    %c0_0 = arith.constant 0 : index
    %0 = vector.load %arg0[%c0, %c0_0] : memref<16x16xf32, #tpu.memory_space<vmem>>, vector<16x16xf32>
    %1 = tpu.iota {dimensions = array<i32: 1>} : vector<16x8xi32>
    %c0_i32 = arith.constant 0 : i32
    %2 = vector.broadcast %c0_i32 : i32 to vector<16x8xi32>
    %3 = arith.cmpi eq, %1, %2 : vector<16x8xi32>
    %4 = arith.extui %3 : vector<16x8xi1> to vector<16x8xi32>
    %5 = arith.sitofp %4 : vector<16x8xi32> to vector<16x8xf32>
    %6 = tpu.iota {dimensions = array<i32: 1>} : vector<2x8xi32>
    %c0_i32_1 = arith.constant 0 : i32
    %7 = vector.broadcast %c0_i32_1 : i32 to vector<2x8xi32>
    %8 = arith.cmpi eq, %6, %7 : vector<2x8xi32>
    %9 = arith.extui %8 : vector<2x8xi1> to vector<2x8xi32>
    %10 = arith.sitofp %9 : vector<2x8xi32> to vector<2x8xf32>
    %11 = tpu.concatenate %0, %5 in 1 : vector<16x16xf32>, vector<16x8xf32> -> vector<16x24xf32>
    %c0_2 = arith.constant 0 : index
    %c0_3 = arith.constant 0 : index
    %12 = vector.load %arg1[%c0_2, %c0_3] : memref<160x128xf32, #tpu.memory_space<vmem>>, vector<24x128xf32>
    %cst = arith.constant dense<0.000000e+00> : vector<16x128xf32>
    %13 = tpu.matmul %11, %12, %cst {dimension_numbers = #tpu.dot_dimension_numbers<[1], [0], [0], [1], [0, 0, 1, 1], [], []>} : vector<16x24xf32>, vector<24x128xf32>, vector<16x128xf32> -> vector<16x128xf32>
    %cst_4 = arith.constant 0.000000e+00 : f32
    %14 = vector.broadcast %cst_4 : f32 to vector<16x128xf32>
    %15 = arith.maximumf %13, %14 : vector<16x128xf32>
    %16 = vector.extract_strided_slice %15 {offsets = [0, 0], sizes = [16, 16], strides = [1, 1]} : vector<16x128xf32> to vector<16x16xf32>
    %17 = vector.extract_strided_slice %15 {offsets = [0, 16], sizes = [16, 16], strides = [1, 1]} : vector<16x128xf32> to vector<16x16xf32>
    %18 = arith.maximumf %16, %17 : vector<16x16xf32>
    %19 = vector.extract_strided_slice %15 {offsets = [0, 32], sizes = [16, 16], strides = [1, 1]} : vector<16x128xf32> to vector<16x16xf32>
    %20 = vector.extract_strided_slice %15 {offsets = [0, 48], sizes = [16, 16], strides = [1, 1]} : vector<16x128xf32> to vector<16x16xf32>
    %21 = arith.maximumf %19, %20 : vector<16x16xf32>
    %22 = arith.maximumf %18, %21 : vector<16x16xf32>
    %23 = tpu.concatenate %22, %5 in 1 : vector<16x16xf32>, vector<16x8xf32> -> vector<16x24xf32>
    %c24 = arith.constant 24 : index
    %c0_5 = arith.constant 0 : index
    %24 = vector.load %arg1[%c24, %c0_5] : memref<160x128xf32, #tpu.memory_space<vmem>>, vector<24x128xf32>
    %cst_6 = arith.constant dense<0.000000e+00> : vector<16x128xf32>
    %25 = tpu.matmul %23, %24, %cst_6 {dimension_numbers = #tpu.dot_dimension_numbers<[1], [0], [0], [1], [0, 0, 1, 1], [], []>} : vector<16x24xf32>, vector<24x128xf32>, vector<16x128xf32> -> vector<16x128xf32>
    %26 = vector.extract_strided_slice %25 {offsets = [0, 0], sizes = [16, 48], strides = [1, 1]} : vector<16x128xf32> to vector<16x48xf32>
    %27 = vector.extract_strided_slice %25 {offsets = [0, 48], sizes = [16, 48], strides = [1, 1]} : vector<16x128xf32> to vector<16x48xf32>
    %c48 = arith.constant 48 : index
    %c0_7 = arith.constant 0 : index
    %28 = vector.load %arg1[%c48, %c0_7] : memref<160x128xf32, #tpu.memory_space<vmem>>, vector<40x128xf32>
    %c88 = arith.constant 88 : index
    %c0_8 = arith.constant 0 : index
    %29 = vector.load %arg1[%c88, %c0_8] : memref<160x128xf32, #tpu.memory_space<vmem>>, vector<24x128xf32>
    %c112 = arith.constant 112 : index
    %c0_9 = arith.constant 0 : index
    %30 = vector.load %arg1[%c112, %c0_9] : memref<160x128xf32, #tpu.memory_space<vmem>>, vector<8x128xf32>
    %cst_10 = arith.constant 0.000000e+00 : f32
    %31 = vector.broadcast %cst_10 : f32 to vector<2x16xf32>
    %cst_11 = arith.constant 0.000000e+00 : f32
    %32 = vector.broadcast %cst_11 : f32 to vector<2x16xf32>
    %33 = tpu.concatenate %31, %10, %32 in 1 : vector<2x16xf32>, vector<2x8xf32>, vector<2x16xf32> -> vector<2x40xf32>
    %cst_12 = arith.constant dense<0.000000e+00> : vector<2x128xf32>
    %34 = tpu.matmul %33, %28, %cst_12 {dimension_numbers = #tpu.dot_dimension_numbers<[1], [0], [0], [1], [0, 0, 1, 1], [], []>} : vector<2x40xf32>, vector<40x128xf32>, vector<2x128xf32> -> vector<2x128xf32>
    %35 = vector.extract_strided_slice %26 {offsets = [0, 0], sizes = [2, 48], strides = [1, 1]} : vector<16x48xf32> to vector<2x48xf32>
    %36 = vector.extract_strided_slice %34 {offsets = [0, 0], sizes = [2, 48], strides = [1, 1]} : vector<2x128xf32> to vector<2x48xf32>
    %37 = vector.extract_strided_slice %35 {offsets = [0, 0], sizes = [2, 32], strides = [1, 1]} : vector<2x48xf32> to vector<2x32xf32>
    %38 = vector.extract_strided_slice %36 {offsets = [0, 0], sizes = [2, 32], strides = [1, 1]} : vector<2x48xf32> to vector<2x32xf32>
    %39 = arith.addf %37, %38 : vector<2x32xf32>
    %40 = arith.negf %39 : vector<2x32xf32>
    %41 = math.exp %40 : vector<2x32xf32>
    %cst_13 = arith.constant 1.000000e+00 : f32
    %42 = vector.broadcast %cst_13 : f32 to vector<2x32xf32>
    %43 = arith.addf %42, %41 : vector<2x32xf32>
    %44 = arith.divf %42, %43 : vector<2x32xf32>
    %45 = vector.extract_strided_slice %44 {offsets = [0, 0], sizes = [2, 16], strides = [1, 1]} : vector<2x32xf32> to vector<2x16xf32>
    %46 = vector.extract_strided_slice %44 {offsets = [0, 16], sizes = [2, 16], strides = [1, 1]} : vector<2x32xf32> to vector<2x16xf32>
    %47 = vector.extract_strided_slice %35 {offsets = [0, 32], sizes = [2, 16], strides = [1, 1]} : vector<2x48xf32> to vector<2x16xf32>
    %48 = vector.extract_strided_slice %36 {offsets = [0, 32], sizes = [2, 16], strides = [1, 1]} : vector<2x48xf32> to vector<2x16xf32>
    %49 = arith.mulf %45, %48 : vector<2x16xf32>
    %50 = arith.addf %47, %49 : vector<2x16xf32>
    %51 = math.tanh %50 : vector<2x16xf32>
    %cst_14 = arith.constant 1.000000e+00 : f32
    %52 = vector.broadcast %cst_14 : f32 to vector<2x16xf32>
    %53 = arith.subf %52, %46 : vector<2x16xf32>
    %54 = arith.mulf %53, %51 : vector<2x16xf32>
    %55 = arith.mulf %46, %31 : vector<2x16xf32>
    %56 = arith.addf %54, %55 : vector<2x16xf32>
    %57 = tpu.concatenate %56, %10 in 1 : vector<2x16xf32>, vector<2x8xf32> -> vector<2x24xf32>
    %cst_15 = arith.constant dense<0.000000e+00> : vector<2x128xf32>
    %58 = tpu.matmul %57, %29, %cst_15 {dimension_numbers = #tpu.dot_dimension_numbers<[1], [0], [0], [1], [0, 0, 1, 1], [], []>} : vector<2x24xf32>, vector<24x128xf32>, vector<2x128xf32> -> vector<2x128xf32>
    %cst_16 = arith.constant 0.000000e+00 : f32
    %59 = vector.broadcast %cst_16 : f32 to vector<2x128xf32>
    %60 = arith.maximumf %58, %59 : vector<2x128xf32>
    %61 = vector.extract_strided_slice %60 {offsets = [0, 0], sizes = [2, 8], strides = [1, 1]} : vector<2x128xf32> to vector<2x8xf32>
    %62 = vector.extract_strided_slice %60 {offsets = [0, 8], sizes = [2, 8], strides = [1, 1]} : vector<2x128xf32> to vector<2x8xf32>
    %63 = arith.maximumf %61, %62 : vector<2x8xf32>
    %64 = vector.extract_strided_slice %60 {offsets = [0, 16], sizes = [2, 8], strides = [1, 1]} : vector<2x128xf32> to vector<2x8xf32>
    %65 = vector.extract_strided_slice %60 {offsets = [0, 24], sizes = [2, 8], strides = [1, 1]} : vector<2x128xf32> to vector<2x8xf32>
    %66 = arith.maximumf %64, %65 : vector<2x8xf32>
    %67 = arith.maximumf %63, %66 : vector<2x8xf32>
    %68 = vector.extract_strided_slice %27 {offsets = [0, 0], sizes = [2, 48], strides = [1, 1]} : vector<16x48xf32> to vector<2x48xf32>
    %cst_17 = arith.constant dense<0.000000e+00> : vector<2x128xf32>
    %69 = tpu.matmul %67, %30, %cst_17 {dimension_numbers = #tpu.dot_dimension_numbers<[1], [0], [0], [1], [0, 0, 1, 1], [], []>} : vector<2x8xf32>, vector<8x128xf32>, vector<2x128xf32> -> vector<2x128xf32>
    %70 = vector.extract_strided_slice %69 {offsets = [0, 0], sizes = [2, 48], strides = [1, 1]} : vector<2x128xf32> to vector<2x48xf32>
    %71 = arith.addf %68, %70 : vector<2x48xf32>
    %72 = vector.extract_strided_slice %34 {offsets = [0, 48], sizes = [2, 48], strides = [1, 1]} : vector<2x128xf32> to vector<2x48xf32>
    %73 = vector.extract_strided_slice %71 {offsets = [0, 0], sizes = [2, 32], strides = [1, 1]} : vector<2x48xf32> to vector<2x32xf32>
    %74 = vector.extract_strided_slice %72 {offsets = [0, 0], sizes = [2, 32], strides = [1, 1]} : vector<2x48xf32> to vector<2x32xf32>
    %75 = arith.addf %73, %74 : vector<2x32xf32>
    %76 = arith.negf %75 : vector<2x32xf32>
    %77 = math.exp %76 : vector<2x32xf32>
    %cst_18 = arith.constant 1.000000e+00 : f32
    %78 = vector.broadcast %cst_18 : f32 to vector<2x32xf32>
    %79 = arith.addf %78, %77 : vector<2x32xf32>
    %80 = arith.divf %78, %79 : vector<2x32xf32>
    %81 = vector.extract_strided_slice %80 {offsets = [0, 0], sizes = [2, 16], strides = [1, 1]} : vector<2x32xf32> to vector<2x16xf32>
    %82 = vector.extract_strided_slice %80 {offsets = [0, 16], sizes = [2, 16], strides = [1, 1]} : vector<2x32xf32> to vector<2x16xf32>
    %83 = vector.extract_strided_slice %71 {offsets = [0, 32], sizes = [2, 16], strides = [1, 1]} : vector<2x48xf32> to vector<2x16xf32>
    %84 = vector.extract_strided_slice %72 {offsets = [0, 32], sizes = [2, 16], strides = [1, 1]} : vector<2x48xf32> to vector<2x16xf32>
    %85 = arith.mulf %81, %84 : vector<2x16xf32>
    %86 = arith.addf %83, %85 : vector<2x16xf32>
    %87 = math.tanh %86 : vector<2x16xf32>
    %cst_19 = arith.constant 1.000000e+00 : f32
    %88 = vector.broadcast %cst_19 : f32 to vector<2x16xf32>
    %89 = arith.subf %88, %82 : vector<2x16xf32>
    %90 = arith.mulf %89, %87 : vector<2x16xf32>
    %91 = arith.mulf %82, %32 : vector<2x16xf32>
    %92 = arith.addf %90, %91 : vector<2x16xf32>
    %93 = tpu.concatenate %56, %10, %92 in 1 : vector<2x16xf32>, vector<2x8xf32>, vector<2x16xf32> -> vector<2x40xf32>
    %cst_20 = arith.constant dense<0.000000e+00> : vector<2x128xf32>
    %94 = tpu.matmul %93, %28, %cst_20 {dimension_numbers = #tpu.dot_dimension_numbers<[1], [0], [0], [1], [0, 0, 1, 1], [], []>} : vector<2x40xf32>, vector<40x128xf32>, vector<2x128xf32> -> vector<2x128xf32>
    %95 = vector.extract_strided_slice %26 {offsets = [2, 0], sizes = [2, 48], strides = [1, 1]} : vector<16x48xf32> to vector<2x48xf32>
    %96 = vector.extract_strided_slice %94 {offsets = [0, 0], sizes = [2, 48], strides = [1, 1]} : vector<2x128xf32> to vector<2x48xf32>
    %97 = vector.extract_strided_slice %95 {offsets = [0, 0], sizes = [2, 32], strides = [1, 1]} : vector<2x48xf32> to vector<2x32xf32>
    %98 = vector.extract_strided_slice %96 {offsets = [0, 0], sizes = [2, 32], strides = [1, 1]} : vector<2x48xf32> to vector<2x32xf32>
    %99 = arith.addf %97, %98 : vector<2x32xf32>
    %100 = arith.negf %99 : vector<2x32xf32>
    %101 = math.exp %100 : vector<2x32xf32>
    %cst_21 = arith.constant 1.000000e+00 : f32
    %102 = vector.broadcast %cst_21 : f32 to vector<2x32xf32>
    %103 = arith.addf %102, %101 : vector<2x32xf32>
    %104 = arith.divf %102, %103 : vector<2x32xf32>
    %105 = vector.extract_strided_slice %104 {offsets = [0, 0], sizes = [2, 16], strides = [1, 1]} : vector<2x32xf32> to vector<2x16xf32>
    %106 = vector.extract_strided_slice %104 {offsets = [0, 16], sizes = [2, 16], strides = [1, 1]} : vector<2x32xf32> to vector<2x16xf32>
    %107 = vector.extract_strided_slice %95 {offsets = [0, 32], sizes = [2, 16], strides = [1, 1]} : vector<2x48xf32> to vector<2x16xf32>
    %108 = vector.extract_strided_slice %96 {offsets = [0, 32], sizes = [2, 16], strides = [1, 1]} : vector<2x48xf32> to vector<2x16xf32>
    %109 = arith.mulf %105, %108 : vector<2x16xf32>
    %110 = arith.addf %107, %109 : vector<2x16xf32>
    %111 = math.tanh %110 : vector<2x16xf32>
    %cst_22 = arith.constant 1.000000e+00 : f32
    %112 = vector.broadcast %cst_22 : f32 to vector<2x16xf32>
    %113 = arith.subf %112, %106 : vector<2x16xf32>
    %114 = arith.mulf %113, %111 : vector<2x16xf32>
    %115 = arith.mulf %106, %56 : vector<2x16xf32>
    %116 = arith.addf %114, %115 : vector<2x16xf32>
    %117 = tpu.concatenate %116, %10 in 1 : vector<2x16xf32>, vector<2x8xf32> -> vector<2x24xf32>
    %cst_23 = arith.constant dense<0.000000e+00> : vector<2x128xf32>
    %118 = tpu.matmul %117, %29, %cst_23 {dimension_numbers = #tpu.dot_dimension_numbers<[1], [0], [0], [1], [0, 0, 1, 1], [], []>} : vector<2x24xf32>, vector<24x128xf32>, vector<2x128xf32> -> vector<2x128xf32>
    %cst_24 = arith.constant 0.000000e+00 : f32
    %119 = vector.broadcast %cst_24 : f32 to vector<2x128xf32>
    %120 = arith.maximumf %118, %119 : vector<2x128xf32>
    %121 = vector.extract_strided_slice %120 {offsets = [0, 0], sizes = [2, 8], strides = [1, 1]} : vector<2x128xf32> to vector<2x8xf32>
    %122 = vector.extract_strided_slice %120 {offsets = [0, 8], sizes = [2, 8], strides = [1, 1]} : vector<2x128xf32> to vector<2x8xf32>
    %123 = arith.maximumf %121, %122 : vector<2x8xf32>
    %124 = vector.extract_strided_slice %120 {offsets = [0, 16], sizes = [2, 8], strides = [1, 1]} : vector<2x128xf32> to vector<2x8xf32>
    %125 = vector.extract_strided_slice %120 {offsets = [0, 24], sizes = [2, 8], strides = [1, 1]} : vector<2x128xf32> to vector<2x8xf32>
    %126 = arith.maximumf %124, %125 : vector<2x8xf32>
    %127 = arith.maximumf %123, %126 : vector<2x8xf32>
    %128 = vector.extract_strided_slice %27 {offsets = [2, 0], sizes = [2, 48], strides = [1, 1]} : vector<16x48xf32> to vector<2x48xf32>
    %cst_25 = arith.constant dense<0.000000e+00> : vector<2x128xf32>
    %129 = tpu.matmul %127, %30, %cst_25 {dimension_numbers = #tpu.dot_dimension_numbers<[1], [0], [0], [1], [0, 0, 1, 1], [], []>} : vector<2x8xf32>, vector<8x128xf32>, vector<2x128xf32> -> vector<2x128xf32>
    %130 = vector.extract_strided_slice %129 {offsets = [0, 0], sizes = [2, 48], strides = [1, 1]} : vector<2x128xf32> to vector<2x48xf32>
    %131 = arith.addf %128, %130 : vector<2x48xf32>
    %132 = vector.extract_strided_slice %94 {offsets = [0, 48], sizes = [2, 48], strides = [1, 1]} : vector<2x128xf32> to vector<2x48xf32>
    %133 = vector.extract_strided_slice %131 {offsets = [0, 0], sizes = [2, 32], strides = [1, 1]} : vector<2x48xf32> to vector<2x32xf32>
    %134 = vector.extract_strided_slice %132 {offsets = [0, 0], sizes = [2, 32], strides = [1, 1]} : vector<2x48xf32> to vector<2x32xf32>
    %135 = arith.addf %133, %134 : vector<2x32xf32>
    %136 = arith.negf %135 : vector<2x32xf32>
    %137 = math.exp %136 : vector<2x32xf32>
    %cst_26 = arith.constant 1.000000e+00 : f32
    %138 = vector.broadcast %cst_26 : f32 to vector<2x32xf32>
    %139 = arith.addf %138, %137 : vector<2x32xf32>
    %140 = arith.divf %138, %139 : vector<2x32xf32>
    %141 = vector.extract_strided_slice %140 {offsets = [0, 0], sizes = [2, 16], strides = [1, 1]} : vector<2x32xf32> to vector<2x16xf32>
    %142 = vector.extract_strided_slice %140 {offsets = [0, 16], sizes = [2, 16], strides = [1, 1]} : vector<2x32xf32> to vector<2x16xf32>
    %143 = vector.extract_strided_slice %131 {offsets = [0, 32], sizes = [2, 16], strides = [1, 1]} : vector<2x48xf32> to vector<2x16xf32>
    %144 = vector.extract_strided_slice %132 {offsets = [0, 32], sizes = [2, 16], strides = [1, 1]} : vector<2x48xf32> to vector<2x16xf32>
    %145 = arith.mulf %141, %144 : vector<2x16xf32>
    %146 = arith.addf %143, %145 : vector<2x16xf32>
    %147 = math.tanh %146 : vector<2x16xf32>
    %cst_27 = arith.constant 1.000000e+00 : f32
    %148 = vector.broadcast %cst_27 : f32 to vector<2x16xf32>
    %149 = arith.subf %148, %142 : vector<2x16xf32>
    %150 = arith.mulf %149, %147 : vector<2x16xf32>
    %151 = arith.mulf %142, %92 : vector<2x16xf32>
    %152 = arith.addf %150, %151 : vector<2x16xf32>
    %153 = tpu.concatenate %116, %10, %152 in 1 : vector<2x16xf32>, vector<2x8xf32>, vector<2x16xf32> -> vector<2x40xf32>
    %cst_28 = arith.constant dense<0.000000e+00> : vector<2x128xf32>
    %154 = tpu.matmul %153, %28, %cst_28 {dimension_numbers = #tpu.dot_dimension_numbers<[1], [0], [0], [1], [0, 0, 1, 1], [], []>} : vector<2x40xf32>, vector<40x128xf32>, vector<2x128xf32> -> vector<2x128xf32>
    %155 = vector.extract_strided_slice %26 {offsets = [4, 0], sizes = [2, 48], strides = [1, 1]} : vector<16x48xf32> to vector<2x48xf32>
    %156 = vector.extract_strided_slice %154 {offsets = [0, 0], sizes = [2, 48], strides = [1, 1]} : vector<2x128xf32> to vector<2x48xf32>
    %157 = vector.extract_strided_slice %155 {offsets = [0, 0], sizes = [2, 32], strides = [1, 1]} : vector<2x48xf32> to vector<2x32xf32>
    %158 = vector.extract_strided_slice %156 {offsets = [0, 0], sizes = [2, 32], strides = [1, 1]} : vector<2x48xf32> to vector<2x32xf32>
    %159 = arith.addf %157, %158 : vector<2x32xf32>
    %160 = arith.negf %159 : vector<2x32xf32>
    %161 = math.exp %160 : vector<2x32xf32>
    %cst_29 = arith.constant 1.000000e+00 : f32
    %162 = vector.broadcast %cst_29 : f32 to vector<2x32xf32>
    %163 = arith.addf %162, %161 : vector<2x32xf32>
    %164 = arith.divf %162, %163 : vector<2x32xf32>
    %165 = vector.extract_strided_slice %164 {offsets = [0, 0], sizes = [2, 16], strides = [1, 1]} : vector<2x32xf32> to vector<2x16xf32>
    %166 = vector.extract_strided_slice %164 {offsets = [0, 16], sizes = [2, 16], strides = [1, 1]} : vector<2x32xf32> to vector<2x16xf32>
    %167 = vector.extract_strided_slice %155 {offsets = [0, 32], sizes = [2, 16], strides = [1, 1]} : vector<2x48xf32> to vector<2x16xf32>
    %168 = vector.extract_strided_slice %156 {offsets = [0, 32], sizes = [2, 16], strides = [1, 1]} : vector<2x48xf32> to vector<2x16xf32>
    %169 = arith.mulf %165, %168 : vector<2x16xf32>
    %170 = arith.addf %167, %169 : vector<2x16xf32>
    %171 = math.tanh %170 : vector<2x16xf32>
    %cst_30 = arith.constant 1.000000e+00 : f32
    %172 = vector.broadcast %cst_30 : f32 to vector<2x16xf32>
    %173 = arith.subf %172, %166 : vector<2x16xf32>
    %174 = arith.mulf %173, %171 : vector<2x16xf32>
    %175 = arith.mulf %166, %116 : vector<2x16xf32>
    %176 = arith.addf %174, %175 : vector<2x16xf32>
    %177 = tpu.concatenate %176, %10 in 1 : vector<2x16xf32>, vector<2x8xf32> -> vector<2x24xf32>
    %cst_31 = arith.constant dense<0.000000e+00> : vector<2x128xf32>
    %178 = tpu.matmul %177, %29, %cst_31 {dimension_numbers = #tpu.dot_dimension_numbers<[1], [0], [0], [1], [0, 0, 1, 1], [], []>} : vector<2x24xf32>, vector<24x128xf32>, vector<2x128xf32> -> vector<2x128xf32>
    %cst_32 = arith.constant 0.000000e+00 : f32
    %179 = vector.broadcast %cst_32 : f32 to vector<2x128xf32>
    %180 = arith.maximumf %178, %179 : vector<2x128xf32>
    %181 = vector.extract_strided_slice %180 {offsets = [0, 0], sizes = [2, 8], strides = [1, 1]} : vector<2x128xf32> to vector<2x8xf32>
    %182 = vector.extract_strided_slice %180 {offsets = [0, 8], sizes = [2, 8], strides = [1, 1]} : vector<2x128xf32> to vector<2x8xf32>
    %183 = arith.maximumf %181, %182 : vector<2x8xf32>
    %184 = vector.extract_strided_slice %180 {offsets = [0, 16], sizes = [2, 8], strides = [1, 1]} : vector<2x128xf32> to vector<2x8xf32>
    %185 = vector.extract_strided_slice %180 {offsets = [0, 24], sizes = [2, 8], strides = [1, 1]} : vector<2x128xf32> to vector<2x8xf32>
    %186 = arith.maximumf %184, %185 : vector<2x8xf32>
    %187 = arith.maximumf %183, %186 : vector<2x8xf32>
    %188 = vector.extract_strided_slice %27 {offsets = [4, 0], sizes = [2, 48], strides = [1, 1]} : vector<16x48xf32> to vector<2x48xf32>
    %cst_33 = arith.constant dense<0.000000e+00> : vector<2x128xf32>
    %189 = tpu.matmul %187, %30, %cst_33 {dimension_numbers = #tpu.dot_dimension_numbers<[1], [0], [0], [1], [0, 0, 1, 1], [], []>} : vector<2x8xf32>, vector<8x128xf32>, vector<2x128xf32> -> vector<2x128xf32>
    %190 = vector.extract_strided_slice %189 {offsets = [0, 0], sizes = [2, 48], strides = [1, 1]} : vector<2x128xf32> to vector<2x48xf32>
    %191 = arith.addf %188, %190 : vector<2x48xf32>
    %192 = vector.extract_strided_slice %154 {offsets = [0, 48], sizes = [2, 48], strides = [1, 1]} : vector<2x128xf32> to vector<2x48xf32>
    %193 = vector.extract_strided_slice %191 {offsets = [0, 0], sizes = [2, 32], strides = [1, 1]} : vector<2x48xf32> to vector<2x32xf32>
    %194 = vector.extract_strided_slice %192 {offsets = [0, 0], sizes = [2, 32], strides = [1, 1]} : vector<2x48xf32> to vector<2x32xf32>
    %195 = arith.addf %193, %194 : vector<2x32xf32>
    %196 = arith.negf %195 : vector<2x32xf32>
    %197 = math.exp %196 : vector<2x32xf32>
    %cst_34 = arith.constant 1.000000e+00 : f32
    %198 = vector.broadcast %cst_34 : f32 to vector<2x32xf32>
    %199 = arith.addf %198, %197 : vector<2x32xf32>
    %200 = arith.divf %198, %199 : vector<2x32xf32>
    %201 = vector.extract_strided_slice %200 {offsets = [0, 0], sizes = [2, 16], strides = [1, 1]} : vector<2x32xf32> to vector<2x16xf32>
    %202 = vector.extract_strided_slice %200 {offsets = [0, 16], sizes = [2, 16], strides = [1, 1]} : vector<2x32xf32> to vector<2x16xf32>
    %203 = vector.extract_strided_slice %191 {offsets = [0, 32], sizes = [2, 16], strides = [1, 1]} : vector<2x48xf32> to vector<2x16xf32>
    %204 = vector.extract_strided_slice %192 {offsets = [0, 32], sizes = [2, 16], strides = [1, 1]} : vector<2x48xf32> to vector<2x16xf32>
    %205 = arith.mulf %201, %204 : vector<2x16xf32>
    %206 = arith.addf %203, %205 : vector<2x16xf32>
    %207 = math.tanh %206 : vector<2x16xf32>
    %cst_35 = arith.constant 1.000000e+00 : f32
    %208 = vector.broadcast %cst_35 : f32 to vector<2x16xf32>
    %209 = arith.subf %208, %202 : vector<2x16xf32>
    %210 = arith.mulf %209, %207 : vector<2x16xf32>
    %211 = arith.mulf %202, %152 : vector<2x16xf32>
    %212 = arith.addf %210, %211 : vector<2x16xf32>
    %213 = tpu.concatenate %176, %10, %212 in 1 : vector<2x16xf32>, vector<2x8xf32>, vector<2x16xf32> -> vector<2x40xf32>
    %cst_36 = arith.constant dense<0.000000e+00> : vector<2x128xf32>
    %214 = tpu.matmul %213, %28, %cst_36 {dimension_numbers = #tpu.dot_dimension_numbers<[1], [0], [0], [1], [0, 0, 1, 1], [], []>} : vector<2x40xf32>, vector<40x128xf32>, vector<2x128xf32> -> vector<2x128xf32>
    %215 = vector.extract_strided_slice %26 {offsets = [6, 0], sizes = [2, 48], strides = [1, 1]} : vector<16x48xf32> to vector<2x48xf32>
    %216 = vector.extract_strided_slice %214 {offsets = [0, 0], sizes = [2, 48], strides = [1, 1]} : vector<2x128xf32> to vector<2x48xf32>
    %217 = vector.extract_strided_slice %215 {offsets = [0, 0], sizes = [2, 32], strides = [1, 1]} : vector<2x48xf32> to vector<2x32xf32>
    %218 = vector.extract_strided_slice %216 {offsets = [0, 0], sizes = [2, 32], strides = [1, 1]} : vector<2x48xf32> to vector<2x32xf32>
    %219 = arith.addf %217, %218 : vector<2x32xf32>
    %220 = arith.negf %219 : vector<2x32xf32>
    %221 = math.exp %220 : vector<2x32xf32>
    %cst_37 = arith.constant 1.000000e+00 : f32
    %222 = vector.broadcast %cst_37 : f32 to vector<2x32xf32>
    %223 = arith.addf %222, %221 : vector<2x32xf32>
    %224 = arith.divf %222, %223 : vector<2x32xf32>
    %225 = vector.extract_strided_slice %224 {offsets = [0, 0], sizes = [2, 16], strides = [1, 1]} : vector<2x32xf32> to vector<2x16xf32>
    %226 = vector.extract_strided_slice %224 {offsets = [0, 16], sizes = [2, 16], strides = [1, 1]} : vector<2x32xf32> to vector<2x16xf32>
    %227 = vector.extract_strided_slice %215 {offsets = [0, 32], sizes = [2, 16], strides = [1, 1]} : vector<2x48xf32> to vector<2x16xf32>
    %228 = vector.extract_strided_slice %216 {offsets = [0, 32], sizes = [2, 16], strides = [1, 1]} : vector<2x48xf32> to vector<2x16xf32>
    %229 = arith.mulf %225, %228 : vector<2x16xf32>
    %230 = arith.addf %227, %229 : vector<2x16xf32>
    %231 = math.tanh %230 : vector<2x16xf32>
    %cst_38 = arith.constant 1.000000e+00 : f32
    %232 = vector.broadcast %cst_38 : f32 to vector<2x16xf32>
    %233 = arith.subf %232, %226 : vector<2x16xf32>
    %234 = arith.mulf %233, %231 : vector<2x16xf32>
    %235 = arith.mulf %226, %176 : vector<2x16xf32>
    %236 = arith.addf %234, %235 : vector<2x16xf32>
    %237 = tpu.concatenate %236, %10 in 1 : vector<2x16xf32>, vector<2x8xf32> -> vector<2x24xf32>
    %cst_39 = arith.constant dense<0.000000e+00> : vector<2x128xf32>
    %238 = tpu.matmul %237, %29, %cst_39 {dimension_numbers = #tpu.dot_dimension_numbers<[1], [0], [0], [1], [0, 0, 1, 1], [], []>} : vector<2x24xf32>, vector<24x128xf32>, vector<2x128xf32> -> vector<2x128xf32>
    %cst_40 = arith.constant 0.000000e+00 : f32
    %239 = vector.broadcast %cst_40 : f32 to vector<2x128xf32>
    %240 = arith.maximumf %238, %239 : vector<2x128xf32>
    %241 = vector.extract_strided_slice %240 {offsets = [0, 0], sizes = [2, 8], strides = [1, 1]} : vector<2x128xf32> to vector<2x8xf32>
    %242 = vector.extract_strided_slice %240 {offsets = [0, 8], sizes = [2, 8], strides = [1, 1]} : vector<2x128xf32> to vector<2x8xf32>
    %243 = arith.maximumf %241, %242 : vector<2x8xf32>
    %244 = vector.extract_strided_slice %240 {offsets = [0, 16], sizes = [2, 8], strides = [1, 1]} : vector<2x128xf32> to vector<2x8xf32>
    %245 = vector.extract_strided_slice %240 {offsets = [0, 24], sizes = [2, 8], strides = [1, 1]} : vector<2x128xf32> to vector<2x8xf32>
    %246 = arith.maximumf %244, %245 : vector<2x8xf32>
    %247 = arith.maximumf %243, %246 : vector<2x8xf32>
    %248 = vector.extract_strided_slice %27 {offsets = [6, 0], sizes = [2, 48], strides = [1, 1]} : vector<16x48xf32> to vector<2x48xf32>
    %cst_41 = arith.constant dense<0.000000e+00> : vector<2x128xf32>
    %249 = tpu.matmul %247, %30, %cst_41 {dimension_numbers = #tpu.dot_dimension_numbers<[1], [0], [0], [1], [0, 0, 1, 1], [], []>} : vector<2x8xf32>, vector<8x128xf32>, vector<2x128xf32> -> vector<2x128xf32>
    %250 = vector.extract_strided_slice %249 {offsets = [0, 0], sizes = [2, 48], strides = [1, 1]} : vector<2x128xf32> to vector<2x48xf32>
    %251 = arith.addf %248, %250 : vector<2x48xf32>
    %252 = vector.extract_strided_slice %214 {offsets = [0, 48], sizes = [2, 48], strides = [1, 1]} : vector<2x128xf32> to vector<2x48xf32>
    %253 = vector.extract_strided_slice %251 {offsets = [0, 0], sizes = [2, 32], strides = [1, 1]} : vector<2x48xf32> to vector<2x32xf32>
    %254 = vector.extract_strided_slice %252 {offsets = [0, 0], sizes = [2, 32], strides = [1, 1]} : vector<2x48xf32> to vector<2x32xf32>
    %255 = arith.addf %253, %254 : vector<2x32xf32>
    %256 = arith.negf %255 : vector<2x32xf32>
    %257 = math.exp %256 : vector<2x32xf32>
    %cst_42 = arith.constant 1.000000e+00 : f32
    %258 = vector.broadcast %cst_42 : f32 to vector<2x32xf32>
    %259 = arith.addf %258, %257 : vector<2x32xf32>
    %260 = arith.divf %258, %259 : vector<2x32xf32>
    %261 = vector.extract_strided_slice %260 {offsets = [0, 0], sizes = [2, 16], strides = [1, 1]} : vector<2x32xf32> to vector<2x16xf32>
    %262 = vector.extract_strided_slice %260 {offsets = [0, 16], sizes = [2, 16], strides = [1, 1]} : vector<2x32xf32> to vector<2x16xf32>
    %263 = vector.extract_strided_slice %251 {offsets = [0, 32], sizes = [2, 16], strides = [1, 1]} : vector<2x48xf32> to vector<2x16xf32>
    %264 = vector.extract_strided_slice %252 {offsets = [0, 32], sizes = [2, 16], strides = [1, 1]} : vector<2x48xf32> to vector<2x16xf32>
    %265 = arith.mulf %261, %264 : vector<2x16xf32>
    %266 = arith.addf %263, %265 : vector<2x16xf32>
    %267 = math.tanh %266 : vector<2x16xf32>
    %cst_43 = arith.constant 1.000000e+00 : f32
    %268 = vector.broadcast %cst_43 : f32 to vector<2x16xf32>
    %269 = arith.subf %268, %262 : vector<2x16xf32>
    %270 = arith.mulf %269, %267 : vector<2x16xf32>
    %271 = arith.mulf %262, %212 : vector<2x16xf32>
    %272 = arith.addf %270, %271 : vector<2x16xf32>
    %273 = tpu.concatenate %236, %10, %272 in 1 : vector<2x16xf32>, vector<2x8xf32>, vector<2x16xf32> -> vector<2x40xf32>
    %cst_44 = arith.constant dense<0.000000e+00> : vector<2x128xf32>
    %274 = tpu.matmul %273, %28, %cst_44 {dimension_numbers = #tpu.dot_dimension_numbers<[1], [0], [0], [1], [0, 0, 1, 1], [], []>} : vector<2x40xf32>, vector<40x128xf32>, vector<2x128xf32> -> vector<2x128xf32>
    %275 = vector.extract_strided_slice %26 {offsets = [8, 0], sizes = [2, 48], strides = [1, 1]} : vector<16x48xf32> to vector<2x48xf32>
    %276 = vector.extract_strided_slice %274 {offsets = [0, 0], sizes = [2, 48], strides = [1, 1]} : vector<2x128xf32> to vector<2x48xf32>
    %277 = vector.extract_strided_slice %275 {offsets = [0, 0], sizes = [2, 32], strides = [1, 1]} : vector<2x48xf32> to vector<2x32xf32>
    %278 = vector.extract_strided_slice %276 {offsets = [0, 0], sizes = [2, 32], strides = [1, 1]} : vector<2x48xf32> to vector<2x32xf32>
    %279 = arith.addf %277, %278 : vector<2x32xf32>
    %280 = arith.negf %279 : vector<2x32xf32>
    %281 = math.exp %280 : vector<2x32xf32>
    %cst_45 = arith.constant 1.000000e+00 : f32
    %282 = vector.broadcast %cst_45 : f32 to vector<2x32xf32>
    %283 = arith.addf %282, %281 : vector<2x32xf32>
    %284 = arith.divf %282, %283 : vector<2x32xf32>
    %285 = vector.extract_strided_slice %284 {offsets = [0, 0], sizes = [2, 16], strides = [1, 1]} : vector<2x32xf32> to vector<2x16xf32>
    %286 = vector.extract_strided_slice %284 {offsets = [0, 16], sizes = [2, 16], strides = [1, 1]} : vector<2x32xf32> to vector<2x16xf32>
    %287 = vector.extract_strided_slice %275 {offsets = [0, 32], sizes = [2, 16], strides = [1, 1]} : vector<2x48xf32> to vector<2x16xf32>
    %288 = vector.extract_strided_slice %276 {offsets = [0, 32], sizes = [2, 16], strides = [1, 1]} : vector<2x48xf32> to vector<2x16xf32>
    %289 = arith.mulf %285, %288 : vector<2x16xf32>
    %290 = arith.addf %287, %289 : vector<2x16xf32>
    %291 = math.tanh %290 : vector<2x16xf32>
    %cst_46 = arith.constant 1.000000e+00 : f32
    %292 = vector.broadcast %cst_46 : f32 to vector<2x16xf32>
    %293 = arith.subf %292, %286 : vector<2x16xf32>
    %294 = arith.mulf %293, %291 : vector<2x16xf32>
    %295 = arith.mulf %286, %236 : vector<2x16xf32>
    %296 = arith.addf %294, %295 : vector<2x16xf32>
    %297 = tpu.concatenate %296, %10 in 1 : vector<2x16xf32>, vector<2x8xf32> -> vector<2x24xf32>
    %cst_47 = arith.constant dense<0.000000e+00> : vector<2x128xf32>
    %298 = tpu.matmul %297, %29, %cst_47 {dimension_numbers = #tpu.dot_dimension_numbers<[1], [0], [0], [1], [0, 0, 1, 1], [], []>} : vector<2x24xf32>, vector<24x128xf32>, vector<2x128xf32> -> vector<2x128xf32>
    %cst_48 = arith.constant 0.000000e+00 : f32
    %299 = vector.broadcast %cst_48 : f32 to vector<2x128xf32>
    %300 = arith.maximumf %298, %299 : vector<2x128xf32>
    %301 = vector.extract_strided_slice %300 {offsets = [0, 0], sizes = [2, 8], strides = [1, 1]} : vector<2x128xf32> to vector<2x8xf32>
    %302 = vector.extract_strided_slice %300 {offsets = [0, 8], sizes = [2, 8], strides = [1, 1]} : vector<2x128xf32> to vector<2x8xf32>
    %303 = arith.maximumf %301, %302 : vector<2x8xf32>
    %304 = vector.extract_strided_slice %300 {offsets = [0, 16], sizes = [2, 8], strides = [1, 1]} : vector<2x128xf32> to vector<2x8xf32>
    %305 = vector.extract_strided_slice %300 {offsets = [0, 24], sizes = [2, 8], strides = [1, 1]} : vector<2x128xf32> to vector<2x8xf32>
    %306 = arith.maximumf %304, %305 : vector<2x8xf32>
    %307 = arith.maximumf %303, %306 : vector<2x8xf32>
    %308 = vector.extract_strided_slice %27 {offsets = [8, 0], sizes = [2, 48], strides = [1, 1]} : vector<16x48xf32> to vector<2x48xf32>
    %cst_49 = arith.constant dense<0.000000e+00> : vector<2x128xf32>
    %309 = tpu.matmul %307, %30, %cst_49 {dimension_numbers = #tpu.dot_dimension_numbers<[1], [0], [0], [1], [0, 0, 1, 1], [], []>} : vector<2x8xf32>, vector<8x128xf32>, vector<2x128xf32> -> vector<2x128xf32>
    %310 = vector.extract_strided_slice %309 {offsets = [0, 0], sizes = [2, 48], strides = [1, 1]} : vector<2x128xf32> to vector<2x48xf32>
    %311 = arith.addf %308, %310 : vector<2x48xf32>
    %312 = vector.extract_strided_slice %274 {offsets = [0, 48], sizes = [2, 48], strides = [1, 1]} : vector<2x128xf32> to vector<2x48xf32>
    %313 = vector.extract_strided_slice %311 {offsets = [0, 0], sizes = [2, 32], strides = [1, 1]} : vector<2x48xf32> to vector<2x32xf32>
    %314 = vector.extract_strided_slice %312 {offsets = [0, 0], sizes = [2, 32], strides = [1, 1]} : vector<2x48xf32> to vector<2x32xf32>
    %315 = arith.addf %313, %314 : vector<2x32xf32>
    %316 = arith.negf %315 : vector<2x32xf32>
    %317 = math.exp %316 : vector<2x32xf32>
    %cst_50 = arith.constant 1.000000e+00 : f32
    %318 = vector.broadcast %cst_50 : f32 to vector<2x32xf32>
    %319 = arith.addf %318, %317 : vector<2x32xf32>
    %320 = arith.divf %318, %319 : vector<2x32xf32>
    %321 = vector.extract_strided_slice %320 {offsets = [0, 0], sizes = [2, 16], strides = [1, 1]} : vector<2x32xf32> to vector<2x16xf32>
    %322 = vector.extract_strided_slice %320 {offsets = [0, 16], sizes = [2, 16], strides = [1, 1]} : vector<2x32xf32> to vector<2x16xf32>
    %323 = vector.extract_strided_slice %311 {offsets = [0, 32], sizes = [2, 16], strides = [1, 1]} : vector<2x48xf32> to vector<2x16xf32>
    %324 = vector.extract_strided_slice %312 {offsets = [0, 32], sizes = [2, 16], strides = [1, 1]} : vector<2x48xf32> to vector<2x16xf32>
    %325 = arith.mulf %321, %324 : vector<2x16xf32>
    %326 = arith.addf %323, %325 : vector<2x16xf32>
    %327 = math.tanh %326 : vector<2x16xf32>
    %cst_51 = arith.constant 1.000000e+00 : f32
    %328 = vector.broadcast %cst_51 : f32 to vector<2x16xf32>
    %329 = arith.subf %328, %322 : vector<2x16xf32>
    %330 = arith.mulf %329, %327 : vector<2x16xf32>
    %331 = arith.mulf %322, %272 : vector<2x16xf32>
    %332 = arith.addf %330, %331 : vector<2x16xf32>
    %333 = tpu.concatenate %296, %10, %332 in 1 : vector<2x16xf32>, vector<2x8xf32>, vector<2x16xf32> -> vector<2x40xf32>
    %cst_52 = arith.constant dense<0.000000e+00> : vector<2x128xf32>
    %334 = tpu.matmul %333, %28, %cst_52 {dimension_numbers = #tpu.dot_dimension_numbers<[1], [0], [0], [1], [0, 0, 1, 1], [], []>} : vector<2x40xf32>, vector<40x128xf32>, vector<2x128xf32> -> vector<2x128xf32>
    %335 = vector.extract_strided_slice %26 {offsets = [10, 0], sizes = [2, 48], strides = [1, 1]} : vector<16x48xf32> to vector<2x48xf32>
    %336 = vector.extract_strided_slice %334 {offsets = [0, 0], sizes = [2, 48], strides = [1, 1]} : vector<2x128xf32> to vector<2x48xf32>
    %337 = vector.extract_strided_slice %335 {offsets = [0, 0], sizes = [2, 32], strides = [1, 1]} : vector<2x48xf32> to vector<2x32xf32>
    %338 = vector.extract_strided_slice %336 {offsets = [0, 0], sizes = [2, 32], strides = [1, 1]} : vector<2x48xf32> to vector<2x32xf32>
    %339 = arith.addf %337, %338 : vector<2x32xf32>
    %340 = arith.negf %339 : vector<2x32xf32>
    %341 = math.exp %340 : vector<2x32xf32>
    %cst_53 = arith.constant 1.000000e+00 : f32
    %342 = vector.broadcast %cst_53 : f32 to vector<2x32xf32>
    %343 = arith.addf %342, %341 : vector<2x32xf32>
    %344 = arith.divf %342, %343 : vector<2x32xf32>
    %345 = vector.extract_strided_slice %344 {offsets = [0, 0], sizes = [2, 16], strides = [1, 1]} : vector<2x32xf32> to vector<2x16xf32>
    %346 = vector.extract_strided_slice %344 {offsets = [0, 16], sizes = [2, 16], strides = [1, 1]} : vector<2x32xf32> to vector<2x16xf32>
    %347 = vector.extract_strided_slice %335 {offsets = [0, 32], sizes = [2, 16], strides = [1, 1]} : vector<2x48xf32> to vector<2x16xf32>
    %348 = vector.extract_strided_slice %336 {offsets = [0, 32], sizes = [2, 16], strides = [1, 1]} : vector<2x48xf32> to vector<2x16xf32>
    %349 = arith.mulf %345, %348 : vector<2x16xf32>
    %350 = arith.addf %347, %349 : vector<2x16xf32>
    %351 = math.tanh %350 : vector<2x16xf32>
    %cst_54 = arith.constant 1.000000e+00 : f32
    %352 = vector.broadcast %cst_54 : f32 to vector<2x16xf32>
    %353 = arith.subf %352, %346 : vector<2x16xf32>
    %354 = arith.mulf %353, %351 : vector<2x16xf32>
    %355 = arith.mulf %346, %296 : vector<2x16xf32>
    %356 = arith.addf %354, %355 : vector<2x16xf32>
    %357 = tpu.concatenate %356, %10 in 1 : vector<2x16xf32>, vector<2x8xf32> -> vector<2x24xf32>
    %cst_55 = arith.constant dense<0.000000e+00> : vector<2x128xf32>
    %358 = tpu.matmul %357, %29, %cst_55 {dimension_numbers = #tpu.dot_dimension_numbers<[1], [0], [0], [1], [0, 0, 1, 1], [], []>} : vector<2x24xf32>, vector<24x128xf32>, vector<2x128xf32> -> vector<2x128xf32>
    %cst_56 = arith.constant 0.000000e+00 : f32
    %359 = vector.broadcast %cst_56 : f32 to vector<2x128xf32>
    %360 = arith.maximumf %358, %359 : vector<2x128xf32>
    %361 = vector.extract_strided_slice %360 {offsets = [0, 0], sizes = [2, 8], strides = [1, 1]} : vector<2x128xf32> to vector<2x8xf32>
    %362 = vector.extract_strided_slice %360 {offsets = [0, 8], sizes = [2, 8], strides = [1, 1]} : vector<2x128xf32> to vector<2x8xf32>
    %363 = arith.maximumf %361, %362 : vector<2x8xf32>
    %364 = vector.extract_strided_slice %360 {offsets = [0, 16], sizes = [2, 8], strides = [1, 1]} : vector<2x128xf32> to vector<2x8xf32>
    %365 = vector.extract_strided_slice %360 {offsets = [0, 24], sizes = [2, 8], strides = [1, 1]} : vector<2x128xf32> to vector<2x8xf32>
    %366 = arith.maximumf %364, %365 : vector<2x8xf32>
    %367 = arith.maximumf %363, %366 : vector<2x8xf32>
    %368 = vector.extract_strided_slice %27 {offsets = [10, 0], sizes = [2, 48], strides = [1, 1]} : vector<16x48xf32> to vector<2x48xf32>
    %cst_57 = arith.constant dense<0.000000e+00> : vector<2x128xf32>
    %369 = tpu.matmul %367, %30, %cst_57 {dimension_numbers = #tpu.dot_dimension_numbers<[1], [0], [0], [1], [0, 0, 1, 1], [], []>} : vector<2x8xf32>, vector<8x128xf32>, vector<2x128xf32> -> vector<2x128xf32>
    %370 = vector.extract_strided_slice %369 {offsets = [0, 0], sizes = [2, 48], strides = [1, 1]} : vector<2x128xf32> to vector<2x48xf32>
    %371 = arith.addf %368, %370 : vector<2x48xf32>
    %372 = vector.extract_strided_slice %334 {offsets = [0, 48], sizes = [2, 48], strides = [1, 1]} : vector<2x128xf32> to vector<2x48xf32>
    %373 = vector.extract_strided_slice %371 {offsets = [0, 0], sizes = [2, 32], strides = [1, 1]} : vector<2x48xf32> to vector<2x32xf32>
    %374 = vector.extract_strided_slice %372 {offsets = [0, 0], sizes = [2, 32], strides = [1, 1]} : vector<2x48xf32> to vector<2x32xf32>
    %375 = arith.addf %373, %374 : vector<2x32xf32>
    %376 = arith.negf %375 : vector<2x32xf32>
    %377 = math.exp %376 : vector<2x32xf32>
    %cst_58 = arith.constant 1.000000e+00 : f32
    %378 = vector.broadcast %cst_58 : f32 to vector<2x32xf32>
    %379 = arith.addf %378, %377 : vector<2x32xf32>
    %380 = arith.divf %378, %379 : vector<2x32xf32>
    %381 = vector.extract_strided_slice %380 {offsets = [0, 0], sizes = [2, 16], strides = [1, 1]} : vector<2x32xf32> to vector<2x16xf32>
    %382 = vector.extract_strided_slice %380 {offsets = [0, 16], sizes = [2, 16], strides = [1, 1]} : vector<2x32xf32> to vector<2x16xf32>
    %383 = vector.extract_strided_slice %371 {offsets = [0, 32], sizes = [2, 16], strides = [1, 1]} : vector<2x48xf32> to vector<2x16xf32>
    %384 = vector.extract_strided_slice %372 {offsets = [0, 32], sizes = [2, 16], strides = [1, 1]} : vector<2x48xf32> to vector<2x16xf32>
    %385 = arith.mulf %381, %384 : vector<2x16xf32>
    %386 = arith.addf %383, %385 : vector<2x16xf32>
    %387 = math.tanh %386 : vector<2x16xf32>
    %cst_59 = arith.constant 1.000000e+00 : f32
    %388 = vector.broadcast %cst_59 : f32 to vector<2x16xf32>
    %389 = arith.subf %388, %382 : vector<2x16xf32>
    %390 = arith.mulf %389, %387 : vector<2x16xf32>
    %391 = arith.mulf %382, %332 : vector<2x16xf32>
    %392 = arith.addf %390, %391 : vector<2x16xf32>
    %393 = tpu.concatenate %356, %10, %392 in 1 : vector<2x16xf32>, vector<2x8xf32>, vector<2x16xf32> -> vector<2x40xf32>
    %cst_60 = arith.constant dense<0.000000e+00> : vector<2x128xf32>
    %394 = tpu.matmul %393, %28, %cst_60 {dimension_numbers = #tpu.dot_dimension_numbers<[1], [0], [0], [1], [0, 0, 1, 1], [], []>} : vector<2x40xf32>, vector<40x128xf32>, vector<2x128xf32> -> vector<2x128xf32>
    %395 = vector.extract_strided_slice %26 {offsets = [12, 0], sizes = [2, 48], strides = [1, 1]} : vector<16x48xf32> to vector<2x48xf32>
    %396 = vector.extract_strided_slice %394 {offsets = [0, 0], sizes = [2, 48], strides = [1, 1]} : vector<2x128xf32> to vector<2x48xf32>
    %397 = vector.extract_strided_slice %395 {offsets = [0, 0], sizes = [2, 32], strides = [1, 1]} : vector<2x48xf32> to vector<2x32xf32>
    %398 = vector.extract_strided_slice %396 {offsets = [0, 0], sizes = [2, 32], strides = [1, 1]} : vector<2x48xf32> to vector<2x32xf32>
    %399 = arith.addf %397, %398 : vector<2x32xf32>
    %400 = arith.negf %399 : vector<2x32xf32>
    %401 = math.exp %400 : vector<2x32xf32>
    %cst_61 = arith.constant 1.000000e+00 : f32
    %402 = vector.broadcast %cst_61 : f32 to vector<2x32xf32>
    %403 = arith.addf %402, %401 : vector<2x32xf32>
    %404 = arith.divf %402, %403 : vector<2x32xf32>
    %405 = vector.extract_strided_slice %404 {offsets = [0, 0], sizes = [2, 16], strides = [1, 1]} : vector<2x32xf32> to vector<2x16xf32>
    %406 = vector.extract_strided_slice %404 {offsets = [0, 16], sizes = [2, 16], strides = [1, 1]} : vector<2x32xf32> to vector<2x16xf32>
    %407 = vector.extract_strided_slice %395 {offsets = [0, 32], sizes = [2, 16], strides = [1, 1]} : vector<2x48xf32> to vector<2x16xf32>
    %408 = vector.extract_strided_slice %396 {offsets = [0, 32], sizes = [2, 16], strides = [1, 1]} : vector<2x48xf32> to vector<2x16xf32>
    %409 = arith.mulf %405, %408 : vector<2x16xf32>
    %410 = arith.addf %407, %409 : vector<2x16xf32>
    %411 = math.tanh %410 : vector<2x16xf32>
    %cst_62 = arith.constant 1.000000e+00 : f32
    %412 = vector.broadcast %cst_62 : f32 to vector<2x16xf32>
    %413 = arith.subf %412, %406 : vector<2x16xf32>
    %414 = arith.mulf %413, %411 : vector<2x16xf32>
    %415 = arith.mulf %406, %356 : vector<2x16xf32>
    %416 = arith.addf %414, %415 : vector<2x16xf32>
    %417 = tpu.concatenate %416, %10 in 1 : vector<2x16xf32>, vector<2x8xf32> -> vector<2x24xf32>
    %cst_63 = arith.constant dense<0.000000e+00> : vector<2x128xf32>
    %418 = tpu.matmul %417, %29, %cst_63 {dimension_numbers = #tpu.dot_dimension_numbers<[1], [0], [0], [1], [0, 0, 1, 1], [], []>} : vector<2x24xf32>, vector<24x128xf32>, vector<2x128xf32> -> vector<2x128xf32>
    %cst_64 = arith.constant 0.000000e+00 : f32
    %419 = vector.broadcast %cst_64 : f32 to vector<2x128xf32>
    %420 = arith.maximumf %418, %419 : vector<2x128xf32>
    %421 = vector.extract_strided_slice %420 {offsets = [0, 0], sizes = [2, 8], strides = [1, 1]} : vector<2x128xf32> to vector<2x8xf32>
    %422 = vector.extract_strided_slice %420 {offsets = [0, 8], sizes = [2, 8], strides = [1, 1]} : vector<2x128xf32> to vector<2x8xf32>
    %423 = arith.maximumf %421, %422 : vector<2x8xf32>
    %424 = vector.extract_strided_slice %420 {offsets = [0, 16], sizes = [2, 8], strides = [1, 1]} : vector<2x128xf32> to vector<2x8xf32>
    %425 = vector.extract_strided_slice %420 {offsets = [0, 24], sizes = [2, 8], strides = [1, 1]} : vector<2x128xf32> to vector<2x8xf32>
    %426 = arith.maximumf %424, %425 : vector<2x8xf32>
    %427 = arith.maximumf %423, %426 : vector<2x8xf32>
    %428 = vector.extract_strided_slice %27 {offsets = [12, 0], sizes = [2, 48], strides = [1, 1]} : vector<16x48xf32> to vector<2x48xf32>
    %cst_65 = arith.constant dense<0.000000e+00> : vector<2x128xf32>
    %429 = tpu.matmul %427, %30, %cst_65 {dimension_numbers = #tpu.dot_dimension_numbers<[1], [0], [0], [1], [0, 0, 1, 1], [], []>} : vector<2x8xf32>, vector<8x128xf32>, vector<2x128xf32> -> vector<2x128xf32>
    %430 = vector.extract_strided_slice %429 {offsets = [0, 0], sizes = [2, 48], strides = [1, 1]} : vector<2x128xf32> to vector<2x48xf32>
    %431 = arith.addf %428, %430 : vector<2x48xf32>
    %432 = vector.extract_strided_slice %394 {offsets = [0, 48], sizes = [2, 48], strides = [1, 1]} : vector<2x128xf32> to vector<2x48xf32>
    %433 = vector.extract_strided_slice %431 {offsets = [0, 0], sizes = [2, 32], strides = [1, 1]} : vector<2x48xf32> to vector<2x32xf32>
    %434 = vector.extract_strided_slice %432 {offsets = [0, 0], sizes = [2, 32], strides = [1, 1]} : vector<2x48xf32> to vector<2x32xf32>
    %435 = arith.addf %433, %434 : vector<2x32xf32>
    %436 = arith.negf %435 : vector<2x32xf32>
    %437 = math.exp %436 : vector<2x32xf32>
    %cst_66 = arith.constant 1.000000e+00 : f32
    %438 = vector.broadcast %cst_66 : f32 to vector<2x32xf32>
    %439 = arith.addf %438, %437 : vector<2x32xf32>
    %440 = arith.divf %438, %439 : vector<2x32xf32>
    %441 = vector.extract_strided_slice %440 {offsets = [0, 0], sizes = [2, 16], strides = [1, 1]} : vector<2x32xf32> to vector<2x16xf32>
    %442 = vector.extract_strided_slice %440 {offsets = [0, 16], sizes = [2, 16], strides = [1, 1]} : vector<2x32xf32> to vector<2x16xf32>
    %443 = vector.extract_strided_slice %431 {offsets = [0, 32], sizes = [2, 16], strides = [1, 1]} : vector<2x48xf32> to vector<2x16xf32>
    %444 = vector.extract_strided_slice %432 {offsets = [0, 32], sizes = [2, 16], strides = [1, 1]} : vector<2x48xf32> to vector<2x16xf32>
    %445 = arith.mulf %441, %444 : vector<2x16xf32>
    %446 = arith.addf %443, %445 : vector<2x16xf32>
    %447 = math.tanh %446 : vector<2x16xf32>
    %cst_67 = arith.constant 1.000000e+00 : f32
    %448 = vector.broadcast %cst_67 : f32 to vector<2x16xf32>
    %449 = arith.subf %448, %442 : vector<2x16xf32>
    %450 = arith.mulf %449, %447 : vector<2x16xf32>
    %451 = arith.mulf %442, %392 : vector<2x16xf32>
    %452 = arith.addf %450, %451 : vector<2x16xf32>
    %453 = tpu.concatenate %416, %10, %452 in 1 : vector<2x16xf32>, vector<2x8xf32>, vector<2x16xf32> -> vector<2x40xf32>
    %cst_68 = arith.constant dense<0.000000e+00> : vector<2x128xf32>
    %454 = tpu.matmul %453, %28, %cst_68 {dimension_numbers = #tpu.dot_dimension_numbers<[1], [0], [0], [1], [0, 0, 1, 1], [], []>} : vector<2x40xf32>, vector<40x128xf32>, vector<2x128xf32> -> vector<2x128xf32>
    %455 = vector.extract_strided_slice %26 {offsets = [14, 0], sizes = [2, 48], strides = [1, 1]} : vector<16x48xf32> to vector<2x48xf32>
    %456 = vector.extract_strided_slice %454 {offsets = [0, 0], sizes = [2, 48], strides = [1, 1]} : vector<2x128xf32> to vector<2x48xf32>
    %457 = vector.extract_strided_slice %455 {offsets = [0, 0], sizes = [2, 32], strides = [1, 1]} : vector<2x48xf32> to vector<2x32xf32>
    %458 = vector.extract_strided_slice %456 {offsets = [0, 0], sizes = [2, 32], strides = [1, 1]} : vector<2x48xf32> to vector<2x32xf32>
    %459 = arith.addf %457, %458 : vector<2x32xf32>
    %460 = arith.negf %459 : vector<2x32xf32>
    %461 = math.exp %460 : vector<2x32xf32>
    %cst_69 = arith.constant 1.000000e+00 : f32
    %462 = vector.broadcast %cst_69 : f32 to vector<2x32xf32>
    %463 = arith.addf %462, %461 : vector<2x32xf32>
    %464 = arith.divf %462, %463 : vector<2x32xf32>
    %465 = vector.extract_strided_slice %464 {offsets = [0, 0], sizes = [2, 16], strides = [1, 1]} : vector<2x32xf32> to vector<2x16xf32>
    %466 = vector.extract_strided_slice %464 {offsets = [0, 16], sizes = [2, 16], strides = [1, 1]} : vector<2x32xf32> to vector<2x16xf32>
    %467 = vector.extract_strided_slice %455 {offsets = [0, 32], sizes = [2, 16], strides = [1, 1]} : vector<2x48xf32> to vector<2x16xf32>
    %468 = vector.extract_strided_slice %456 {offsets = [0, 32], sizes = [2, 16], strides = [1, 1]} : vector<2x48xf32> to vector<2x16xf32>
    %469 = arith.mulf %465, %468 : vector<2x16xf32>
    %470 = arith.addf %467, %469 : vector<2x16xf32>
    %471 = math.tanh %470 : vector<2x16xf32>
    %cst_70 = arith.constant 1.000000e+00 : f32
    %472 = vector.broadcast %cst_70 : f32 to vector<2x16xf32>
    %473 = arith.subf %472, %466 : vector<2x16xf32>
    %474 = arith.mulf %473, %471 : vector<2x16xf32>
    %475 = arith.mulf %466, %416 : vector<2x16xf32>
    %476 = arith.addf %474, %475 : vector<2x16xf32>
    %477 = tpu.concatenate %476, %10 in 1 : vector<2x16xf32>, vector<2x8xf32> -> vector<2x24xf32>
    %cst_71 = arith.constant dense<0.000000e+00> : vector<2x128xf32>
    %478 = tpu.matmul %477, %29, %cst_71 {dimension_numbers = #tpu.dot_dimension_numbers<[1], [0], [0], [1], [0, 0, 1, 1], [], []>} : vector<2x24xf32>, vector<24x128xf32>, vector<2x128xf32> -> vector<2x128xf32>
    %cst_72 = arith.constant 0.000000e+00 : f32
    %479 = vector.broadcast %cst_72 : f32 to vector<2x128xf32>
    %480 = arith.maximumf %478, %479 : vector<2x128xf32>
    %481 = vector.extract_strided_slice %480 {offsets = [0, 0], sizes = [2, 8], strides = [1, 1]} : vector<2x128xf32> to vector<2x8xf32>
    %482 = vector.extract_strided_slice %480 {offsets = [0, 8], sizes = [2, 8], strides = [1, 1]} : vector<2x128xf32> to vector<2x8xf32>
    %483 = arith.maximumf %481, %482 : vector<2x8xf32>
    %484 = vector.extract_strided_slice %480 {offsets = [0, 16], sizes = [2, 8], strides = [1, 1]} : vector<2x128xf32> to vector<2x8xf32>
    %485 = vector.extract_strided_slice %480 {offsets = [0, 24], sizes = [2, 8], strides = [1, 1]} : vector<2x128xf32> to vector<2x8xf32>
    %486 = arith.maximumf %484, %485 : vector<2x8xf32>
    %487 = arith.maximumf %483, %486 : vector<2x8xf32>
    %488 = vector.extract_strided_slice %27 {offsets = [14, 0], sizes = [2, 48], strides = [1, 1]} : vector<16x48xf32> to vector<2x48xf32>
    %cst_73 = arith.constant dense<0.000000e+00> : vector<2x128xf32>
    %489 = tpu.matmul %487, %30, %cst_73 {dimension_numbers = #tpu.dot_dimension_numbers<[1], [0], [0], [1], [0, 0, 1, 1], [], []>} : vector<2x8xf32>, vector<8x128xf32>, vector<2x128xf32> -> vector<2x128xf32>
    %490 = vector.extract_strided_slice %489 {offsets = [0, 0], sizes = [2, 48], strides = [1, 1]} : vector<2x128xf32> to vector<2x48xf32>
    %491 = arith.addf %488, %490 : vector<2x48xf32>
    %492 = vector.extract_strided_slice %454 {offsets = [0, 48], sizes = [2, 48], strides = [1, 1]} : vector<2x128xf32> to vector<2x48xf32>
    %493 = vector.extract_strided_slice %491 {offsets = [0, 0], sizes = [2, 32], strides = [1, 1]} : vector<2x48xf32> to vector<2x32xf32>
    %494 = vector.extract_strided_slice %492 {offsets = [0, 0], sizes = [2, 32], strides = [1, 1]} : vector<2x48xf32> to vector<2x32xf32>
    %495 = arith.addf %493, %494 : vector<2x32xf32>
    %496 = arith.negf %495 : vector<2x32xf32>
    %497 = math.exp %496 : vector<2x32xf32>
    %cst_74 = arith.constant 1.000000e+00 : f32
    %498 = vector.broadcast %cst_74 : f32 to vector<2x32xf32>
    %499 = arith.addf %498, %497 : vector<2x32xf32>
    %500 = arith.divf %498, %499 : vector<2x32xf32>
    %501 = vector.extract_strided_slice %500 {offsets = [0, 0], sizes = [2, 16], strides = [1, 1]} : vector<2x32xf32> to vector<2x16xf32>
    %502 = vector.extract_strided_slice %500 {offsets = [0, 16], sizes = [2, 16], strides = [1, 1]} : vector<2x32xf32> to vector<2x16xf32>
    %503 = vector.extract_strided_slice %491 {offsets = [0, 32], sizes = [2, 16], strides = [1, 1]} : vector<2x48xf32> to vector<2x16xf32>
    %504 = vector.extract_strided_slice %492 {offsets = [0, 32], sizes = [2, 16], strides = [1, 1]} : vector<2x48xf32> to vector<2x16xf32>
    %505 = arith.mulf %501, %504 : vector<2x16xf32>
    %506 = arith.addf %503, %505 : vector<2x16xf32>
    %507 = math.tanh %506 : vector<2x16xf32>
    %cst_75 = arith.constant 1.000000e+00 : f32
    %508 = vector.broadcast %cst_75 : f32 to vector<2x16xf32>
    %509 = arith.subf %508, %502 : vector<2x16xf32>
    %510 = arith.mulf %509, %507 : vector<2x16xf32>
    %511 = arith.mulf %502, %452 : vector<2x16xf32>
    %512 = arith.addf %510, %511 : vector<2x16xf32>
    %513 = tpu.concatenate %476, %10, %512 in 1 : vector<2x16xf32>, vector<2x8xf32>, vector<2x16xf32> -> vector<2x40xf32>
    %514 = tpu.concatenate %93, %153, %213, %273, %333, %393, %453, %513 in 0 : vector<2x40xf32>, vector<2x40xf32>, vector<2x40xf32>, vector<2x40xf32>, vector<2x40xf32>, vector<2x40xf32>, vector<2x40xf32>, vector<2x40xf32> -> vector<16x40xf32>
    %c120 = arith.constant 120 : index
    %c0_76 = arith.constant 0 : index
    %515 = vector.load %arg1[%c120, %c0_76] : memref<160x128xf32, #tpu.memory_space<vmem>>, vector<40x128xf32>
    %cst_77 = arith.constant dense<0.000000e+00> : vector<16x128xf32>
    %516 = tpu.matmul %514, %515, %cst_77 {dimension_numbers = #tpu.dot_dimension_numbers<[1], [0], [0], [1], [0, 0, 1, 1], [], []>} : vector<16x40xf32>, vector<40x128xf32>, vector<16x128xf32> -> vector<16x128xf32>
    %517 = arith.negf %516 : vector<16x128xf32>
    %518 = math.exp %517 : vector<16x128xf32>
    %cst_78 = arith.constant 1.000000e+00 : f32
    %519 = vector.broadcast %cst_78 : f32 to vector<16x128xf32>
    %520 = arith.addf %519, %518 : vector<16x128xf32>
    %521 = arith.divf %519, %520 : vector<16x128xf32>
    %c0_79 = arith.constant 0 : index
    %c0_80 = arith.constant 0 : index
    %522 = vector.load %arg2[%c0_79, %c0_80] : memref<16x128xf32, #tpu.memory_space<vmem>>, vector<16x128xf32>
    tpu.vector_store %arg2[%c0_79, %c0_80], %521 {strides = array<i32>} : memref<16x128xf32, #tpu.memory_space<vmem>>, vector<16x128xf32>,
    return
  }
}

</mosaic_0001>

<llo_original>
// kernel: hedln_cr_forward.1
$region0: #{hedln_cr_forward.1}
  #allocation0 [shape = 'u32[]', space=smem, size = 0x4, offset = 0x4, fixed_abs, tag = 'smem constant byte address 0x4 - core index']
  #allocation1 [shape = 'u32[144,128]{1,0:T(1,128)}', space=vmem, size = 0x12000, scoped, tag = 'internal scratch']
  %s0 = inlined_call_operand.hbm [shape: f32[16,16], index: 0, kind: input, shape index: {}]
  %s1 = inlined_call_operand.hbm [shape: f32[160,128], index: 1, kind: input, shape index: {}]
  %s2 = inlined_call_operand.vmem [shape: f32[16,128], index: 2, kind: output, shape index: {}]
  %s3 = sld [smem:[#allocation0]]
  $region26: #{hedln_cr_forward.1} parent=0
    _
  %s5 = ssub.s32 1, %s3
  %s6 = scalar_select 0, %s5, %s3
  $region1: #{hedln_cr_forward.1} parent=0
    #allocation2 [shape = 'u8[8192]{0}', space=vmem, size = 0x2000, scoped, tag = 'input window, operand 0, single buffered']
    #allocation3 [shape = 's32[1]{0}', space=sflag, size = 0x4, scoped, tag = 'scoped memory for hedln_cr_forward.1']
    #allocation4 [shape = 'u8[81920]{0}', space=vmem, size = 0x14000, scoped, tag = 'input window, operand 1, single buffered']
    #allocation5 [shape = 's32[1]{0}', space=sflag, size = 0x4, scoped, tag = 'scoped memory for hedln_cr_forward.1']
    %7 = vsyncpa [#allocation3], 0
    %8 = vsyncpa [#allocation5], 0
    // Predicated region
    $region2: #{hedln_cr_forward.1} parent=1 // pred_check
      _
    $region3: #{hedln_cr_forward.1} parent=1 // pred_check_branch
      %10 = sbr.rel (0) target = $region5
    $region4: #{hedln_cr_forward.1} parent=1 // pred_region
      %s12 = ssub.s32 256, 256
      %13 = vsyncadd [#allocation3], %s12
      %s14 = sshll.u32 [#allocation2], 4
      %s15 = int_to_ptr.vmem [resolvable:$true] %s14
      %20 = dma.hbm_to_vmem [thread:$0]  %s0, 256, %s15, [#allocation3], 128, 128, 8
    $region5: #{hedln_cr_forward.1} parent=1 // pred_fallthru
      _
    // Predicated region
    $region6: #{hedln_cr_forward.1} parent=1 // pred_check
      _
    $region7: #{hedln_cr_forward.1} parent=1 // pred_check_branch
      %22 = sbr.rel (0) target = $region9
    $region8: #{hedln_cr_forward.1} parent=1 // pred_region
      %s24 = ssub.s32 2560, 2560
      %25 = vsyncadd [#allocation5], %s24
      %s26 = sshll.u32 [#allocation4], 4
      %s27 = int_to_ptr.vmem [resolvable:$true] %s26
      %32 = dma.hbm_to_vmem [thread:$0]  %s1, 2560, %s27, [#allocation5], 128, 128, 8
    $region9: #{hedln_cr_forward.1} parent=1 // pred_fallthru
      _
    // Predicated region
    $region10: #{hedln_cr_forward.1} parent=1 // pred_check
      _
    $region11: #{hedln_cr_forward.1} parent=1 // pred_check_branch
      %34 = sbr.rel (0) target = $region13
    $region12: #{hedln_cr_forward.1} parent=1 // pred_region
      %35 = dma.done [#allocation3], 256
    $region13: #{hedln_cr_forward.1} parent=1 // pred_fallthru
      _
    // Predicated region
    $region14: #{hedln_cr_forward.1} parent=1 // pred_check
      _
    $region15: #{hedln_cr_forward.1} parent=1 // pred_check_branch
      %37 = sbr.rel (0) target = $region17
    $region16: #{hedln_cr_forward.1} parent=1 // pred_region
      %38 = dma.done [#allocation5], 2560
    $region17: #{hedln_cr_forward.1} parent=1 // pred_fallthru
      _
    %v39 = vld [vmem:[#allocation2] sm:$0xff]
    %v40 = vld [vmem:[#allocation2 + $0x8] sm:$0xff]
    %v41 = vlaneseq
    %v42 = vand.u32 %v41, 127
    %vm43 = vcmp.eq.s32.totalorder %v42, 0
    %v44 = vsel %vm43, 1, 0
    %v45 = vcvt.s32.f32 %v44
    %47 = vrot.lane.b32.xlu0 %v45, 16
    %v48 = vpop.permute.xlu0 %47
    %vm50 = vcmask 130048
    %v51 = vsel %vm50, %v39, %v48
    %v52 = vsel %vm50, %v40, %v48
    %v53 = vld [vmem:[#allocation4] sm:$0xff]
    %v54 = vld [vmem:[#allocation4 + $0x8] sm:$0xff]
    %v55 = vld [vmem:[#allocation4 + $0x10] sm:$0xff]
    %vm56 = vcmask 195584
    %v58 = vsel %vm56, %v51, 0
    %v61 = vsel %vm56, %v52, 0
    %63 = vmatprep.subr.mxu0 0.0
    %64 = vmatpush1.msra.mxu0 %v53
    %65 = vmatprep.subr.mxu0 0.0
    %66 = vmatpush1.msra.mxu0 %v54
    %67 = vmatprep.subr.mxu0 0.0
    %68 = vmatpush1.msra.mxu0 %v55
    %69 = vmatprep.subr.mxu0 0.0
    %70 = vmatpush1.msra.mxu0 0.0
    %71 = vmatprep.subr.mxu0 0.0
    %72 = vmatpush1.msra.mxu0 0.0
    %73 = vmatprep.subr.mxu0 0.0
    %74 = vmatpush1.msra.mxu0 0.0
    %75 = vmatprep.subr.mxu0 0.0
    %76 = vmatpush1.msra.mxu0 0.0
    %77 = vmatprep.subr.mxu0 0.0
    %78 = vmatpush1.msra.mxu0 0.0
    %79 = vmatprep.subr.mxu0 0.0
    %80 = vmatpush1.msra.mxu0 0.0
    %81 = vmatprep.subr.mxu0 0.0
    %82 = vmatpush1.msra.mxu0 0.0
    %83 = vmatprep.subr.mxu0 0.0
    %84 = vmatpush1.msra.mxu0 0.0
    %85 = vmatprep.subr.mxu0 0.0
    %86 = vmatpush1.msra.mxu0 0.0
    %87 = vmatprep.subr.mxu0 0.0
    %88 = vmatpush1.msra.mxu0 0.0
    %89 = vmatprep.subr.mxu0 0.0
    %90 = vmatpush1.msra.mxu0 0.0
    %91 = vmatprep.subr.mxu0 0.0
    %92 = vmatpush1.msra.mxu0 0.0
    %93 = vmatprep.subr.mxu0 0.0
    %94 = vmatpush1.msra.mxu0 0.0
    %95 = vmatprep.subr.mxu0 0.0
    %96 = vmatpush1.msra.mxu0 0.0
    %97 = vmatprep.subr.mxu0 0.0
    %98 = vmatpush1.msra.mxu0 0.0
    %99 = vmatprep.subr.mxu0 0.0
    %100 = vmatpush1.msra.mxu0 0.0
    %101 = vmatprep.subr.mxu0 0.0
    %102 = vmatpush1.msra.mxu0 0.0
    %103 = vmatprep.subr.mxu0 0.0
    %104 = vmatpush1.msra.mxu0 0.0
    %105 = vmatprep.subr.mxu0 0.0
    %106 = vmatpush1.msra.mxu0 0.0
    %107 = vmatprep.subr.mxu0 0.0
    %108 = vmatpush1.msra.mxu0 0.0
    %109 = vmatprep.subr.mxu0 0.0
    %110 = vmatpush1.msra.mxu0 0.0
    %111 = vmatprep.subr.mxu0 0.0
    %112 = vmatpush1.msra.mxu0 0.0
    %113 = vmatprep.subr.mxu0 0.0
    %114 = vmatpush1.msra.mxu0 0.0
    %115 = vmatprep.subr.mxu0 0.0
    %116 = vmatpush1.msra.mxu0 0.0
    %117 = vmatprep.subr.mxu0 0.0
    %118 = vmatpush1.msra.mxu0 0.0
    %119 = vmatprep.subr.mxu0 0.0
    %120 = vmatpush1.msra.mxu0 0.0
    %121 = vmatprep.subr.mxu0 0.0
    %122 = vmatpush1.msra.mxu0 0.0
    %123 = vmatprep.subr.mxu0 0.0
    %124 = vmatpush1.msra.mxu0 0.0
    %125 = vmatprep.subr.mxu0 0.0
    %126 = vmatpush1.msra.mxu0 0.0
    %127 = vmatprep.mubr.f32.mxu0 0.0
    %128 = vmatmul.mubr.f32.gmra.mrb[0].mxu0 %v58
    %v129 = vpop.f32.mrb[0].mxu0
    %v130 = vadd.f32 0.0, %v129
    %v131 = vpop.f32.mrb[0].mxu0
    %132 = vmatprep.mubr.f32.mxu0 0.0
    %133 = vmatmul.mubr.f32.gmra.mrb[0].mxu0 %v61
    %v134 = vpop.f32.mrb[0].mxu0
    %v135 = vadd.f32 0.0, %v134
    %v136 = vpop.f32.mrb[0].mxu0
    %137 = vdwg.mxu0
    %v138 = vmax.f32 %v130, 0.0
    %v139 = vmax.f32 %v135, 0.0
    %142 = vrot.lane.b32.xlu0 %v138, 112
    %v143 = vpop.permute.xlu0 %142
    %144 = vrot.lane.b32.xlu0 %v139, 112
    %v145 = vpop.permute.xlu0 %144
    %v148 = vmax.f32 %v138, %v143
    %v149 = vmax.f32 %v139, %v145
    %152 = vrot.lane.b32.xlu0 %v148, 96
    %v153 = vpop.permute.xlu0 %152
    %154 = vrot.lane.b32.xlu0 %v149, 96
    %v155 = vpop.permute.xlu0 %154
    %v158 = vmax.f32 %v148, %v153
    %v159 = vmax.f32 %v149, %v155
    %v160 = vsel %vm50, %v158, %v48
    %v161 = vsel %vm50, %v159, %v48
    %v162 = vld [vmem:[#allocation4 + $0x18] sm:$0xff]
    %v163 = vld [vmem:[#allocation4 + $0x20] sm:$0xff]
    %v164 = vld [vmem:[#allocation4 + $0x28] sm:$0xff]
    %v166 = vsel %vm56, %v160, 0
    %v169 = vsel %vm56, %v161, 0
    %171 = vmatprep.subr.mxu0 0.0
    %172 = vmatpush1.msra.mxu0 %v162
    %173 = vmatprep.subr.mxu0 0.0
    %174 = vmatpush1.msra.mxu0 %v163
    %175 = vmatprep.subr.mxu0 0.0
    %176 = vmatpush1.msra.mxu0 %v164
    %177 = vmatprep.subr.mxu0 0.0
    %178 = vmatpush1.msra.mxu0 0.0
    %179 = vmatprep.subr.mxu0 0.0
    %180 = vmatpush1.msra.mxu0 0.0
    %181 = vmatprep.subr.mxu0 0.0
    %182 = vmatpush1.msra.mxu0 0.0
    %183 = vmatprep.subr.mxu0 0.0
    %184 = vmatpush1.msra.mxu0 0.0
    %185 = vmatprep.subr.mxu0 0.0
    %186 = vmatpush1.msra.mxu0 0.0
    %187 = vmatprep.subr.mxu0 0.0
    %188 = vmatpush1.msra.mxu0 0.0
    %189 = vmatprep.subr.mxu0 0.0
    %190 = vmatpush1.msra.mxu0 0.0
    %191 = vmatprep.subr.mxu0 0.0
    %192 = vmatpush1.msra.mxu0 0.0
    %193 = vmatprep.subr.mxu0 0.0
    %194 = vmatpush1.msra.mxu0 0.0
    %195 = vmatprep.subr.mxu0 0.0
    %196 = vmatpush1.msra.mxu0 0.0
    %197 = vmatprep.subr.mxu0 0.0
    %198 = vmatpush1.msra.mxu0 0.0
    %199 = vmatprep.subr.mxu0 0.0
    %200 = vmatpush1.msra.mxu0 0.0
    %201 = vmatprep.subr.mxu0 0.0
    %202 = vmatpush1.msra.mxu0 0.0
    %203 = vmatprep.subr.mxu0 0.0
    %204 = vmatpush1.msra.mxu0 0.0
    %205 = vmatprep.subr.mxu0 0.0
    %206 = vmatpush1.msra.mxu0 0.0
    %207 = vmatprep.subr.mxu0 0.0
    %208 = vmatpush1.msra.mxu0 0.0
    %209 = vmatprep.subr.mxu0 0.0
    %210 = vmatpush1.msra.mxu0 0.0
    %211 = vmatprep.subr.mxu0 0.0
    %212 = vmatpush1.msra.mxu0 0.0
    %213 = vmatprep.subr.mxu0 0.0
    %214 = vmatpush1.msra.mxu0 0.0
    %215 = vmatprep.subr.mxu0 0.0
    %216 = vmatpush1.msra.mxu0 0.0
    %217 = vmatprep.subr.mxu0 0.0
    %218 = vmatpush1.msra.mxu0 0.0
    %219 = vmatprep.subr.mxu0 0.0
    %220 = vmatpush1.msra.mxu0 0.0
    %221 = vmatprep.subr.mxu0 0.0
    %222 = vmatpush1.msra.mxu0 0.0
    %223 = vmatprep.subr.mxu0 0.0
    %224 = vmatpush1.msra.mxu0 0.0
    %225 = vmatprep.subr.mxu0 0.0
    %226 = vmatpush1.msra.mxu0 0.0
    %227 = vmatprep.subr.mxu0 0.0
    %228 = vmatpush1.msra.mxu0 0.0
    %229 = vmatprep.subr.mxu0 0.0
    %230 = vmatpush1.msra.mxu0 0.0
    %231 = vmatprep.subr.mxu0 0.0
    %232 = vmatpush1.msra.mxu0 0.0
    %233 = vmatprep.subr.mxu0 0.0
    %234 = vmatpush1.msra.mxu0 0.0
    %235 = vmatprep.mubr.f32.mxu0 0.0
    %236 = vmatmul.mubr.f32.gmra.mrb[0].mxu0 %v166
    %v237 = vpop.f32.mrb[0].mxu0
    %v238 = vadd.f32 0.0, %v237
    %v239 = vpop.f32.mrb[0].mxu0
    %240 = vmatprep.mubr.f32.mxu0 0.0
    %241 = vmatmul.mubr.f32.gmra.mrb[0].mxu0 %v169
    %v242 = vpop.f32.mrb[0].mxu0
    %v243 = vadd.f32 0.0, %v242
    %v244 = vpop.f32.mrb[0].mxu0
    %245 = vdwg.mxu0
    %v246 = vld [vmem:[#allocation4 + $0x30] sm:$0xff]
    %v247 = vld [vmem:[#allocation4 + $0x38] sm:$0xff]
    %v248 = vld [vmem:[#allocation4 + $0x40] sm:$0xff]
    %v249 = vld [vmem:[#allocation4 + $0x48] sm:$0xff]
    %v250 = vld [vmem:[#allocation4 + $0x50] sm:$0xff]
    %v251 = vld [vmem:[#allocation4 + $0x58] sm:$0xff]
    %v252 = vld [vmem:[#allocation4 + $0x60] sm:$0xff]
    %v253 = vld [vmem:[#allocation4 + $0x68] sm:$0xff]
    %v254 = vld [vmem:[#allocation4 + $0x70] sm:$0xff]
    %v255 = vsel %vm50, 0.0, %v48
    %v256 = vsel %vm56, %v255, 0.0
    %vm257 = vcmask 326656
    %v259 = vsel %vm257, %v256, 0
    %261 = vmatprep.subr.mxu0 0.0
    %262 = vmatpush1.msra.mxu0 %v246
    %263 = vmatprep.subr.mxu0 0.0
    %264 = vmatpush1.msra.mxu0 %v247
    %265 = vmatprep.subr.mxu0 0.0
    %266 = vmatpush1.msra.mxu0 %v248
    %267 = vmatprep.subr.mxu0 0.0
    %268 = vmatpush1.msra.mxu0 %v249
    %269 = vmatprep.subr.mxu0 0.0
    %270 = vmatpush1.msra.mxu0 %v250
    %271 = vmatprep.subr.mxu0 0.0
    %272 = vmatpush1.msra.mxu0 0.0
    %273 = vmatprep.subr.mxu0 0.0
    %274 = vmatpush1.msra.mxu0 0.0
    %275 = vmatprep.subr.mxu0 0.0
    %276 = vmatpush1.msra.mxu0 0.0
    %277 = vmatprep.subr.mxu0 0.0
    %278 = vmatpush1.msra.mxu0 0.0
    %279 = vmatprep.subr.mxu0 0.0
    %280 = vmatpush1.msra.mxu0 0.0
    %281 = vmatprep.subr.mxu0 0.0
    %282 = vmatpush1.msra.mxu0 0.0
    %283 = vmatprep.subr.mxu0 0.0
    %284 = vmatpush1.msra.mxu0 0.0
    %285 = vmatprep.subr.mxu0 0.0
    %286 = vmatpush1.msra.mxu0 0.0
    %287 = vmatprep.subr.mxu0 0.0
    %288 = vmatpush1.msra.mxu0 0.0
    %289 = vmatprep.subr.mxu0 0.0
    %290 = vmatpush1.msra.mxu0 0.0
    %291 = vmatprep.subr.mxu0 0.0
    %292 = vmatpush1.msra.mxu0 0.0
    %293 = vmatprep.subr.mxu0 0.0
    %294 = vmatpush1.msra.mxu0 0.0
    %295 = vmatprep.subr.mxu0 0.0
    %296 = vmatpush1.msra.mxu0 0.0
    %297 = vmatprep.subr.mxu0 0.0
    %298 = vmatpush1.msra.mxu0 0.0
    %299 = vmatprep.subr.mxu0 0.0
    %300 = vmatpush1.msra.mxu0 0.0
    %301 = vmatprep.subr.mxu0 0.0
    %302 = vmatpush1.msra.mxu0 0.0
    %303 = vmatprep.subr.mxu0 0.0
    %304 = vmatpush1.msra.mxu0 0.0
    %305 = vmatprep.subr.mxu0 0.0
    %306 = vmatpush1.msra.mxu0 0.0
    %307 = vmatprep.subr.mxu0 0.0
    %308 = vmatpush1.msra.mxu0 0.0
    %309 = vmatprep.subr.mxu0 0.0
    %310 = vmatpush1.msra.mxu0 0.0
    %311 = vmatprep.subr.mxu0 0.0
    %312 = vmatpush1.msra.mxu0 0.0
    %313 = vmatprep.subr.mxu0 0.0
    %314 = vmatpush1.msra.mxu0 0.0
    %315 = vmatprep.subr.mxu0 0.0
    %316 = vmatpush1.msra.mxu0 0.0
    %317 = vmatprep.subr.mxu0 0.0
    %318 = vmatpush1.msra.mxu0 0.0
    %319 = vmatprep.subr.mxu0 0.0
    %320 = vmatpush1.msra.mxu0 0.0
    %321 = vmatprep.subr.mxu0 0.0
    %322 = vmatpush1.msra.mxu0 0.0
    %323 = vmatprep.subr.mxu0 0.0
    %324 = vmatpush1.msra.mxu0 0.0
    %325 = vmatprep.mubr.f32.mxu0 0.0
    %326 = vmatmul.mubr.f32.gmra.mrb[0].mxu0 %v259
    %v327 = vpop.f32.mrb[0].mxu0
    %v328 = vadd.f32 0.0, %v327
    %v329 = vpop.f32.mrb[0].mxu0
    %330 = vdwg.mxu0
    %v331 = vadd.f32 %v238, %v328
    %v332 = vxor.u32 %v331, 2147483648
    %v333 = vmul.f32 %v332, 1.442695
    %v334 = vpow.pop %v333
    %v335 = vadd.f32 %v334, 1.0
    %v336 = vrcp.pop %v335
    %v337 = vmul.f32 1.0, %v336
    %339 = vrot.lane.b32.xlu0 %v328, 96
    %v340 = vpop.permute.xlu0 %339
    %v342 = vmul.f32 %v337, %v340
    %344 = vrot.lane.b32.xlu0 %v342, 32
    %v345 = vpop.permute.xlu0 %344
    %v347 = vadd.f32 %v238, %v345
    %v348 = vtanh.pop %v347
    %v349 = vsub.f32 1.0, %v337
    %351 = vrot.lane.b32.xlu0 %v348, 112
    %v352 = vpop.permute.xlu0 %351
    %v354 = vmul.f32 %v349, %v352
    %v355 = vmul.f32 %v337, 0.0
    %v356 = vadd.f32 %v354, %v355
    %358 = vrot.lane.b32.xlu0 %v356, 112
    %v359 = vpop.permute.xlu0 %358
    %v361 = vsel %vm50, %v359, %v48
    %v363 = vsel %vm56, %v361, 0
    %365 = vmatprep.subr.mxu0 0.0
    %366 = vmatpush1.msra.mxu0 %v251
    %367 = vmatprep.subr.mxu0 0.0
    %368 = vmatpush1.msra.mxu0 %v252
    %369 = vmatprep.subr.mxu0 0.0
    %370 = vmatpush1.msra.mxu0 %v253
    %371 = vmatprep.subr.mxu0 0.0
    %372 = vmatpush1.msra.mxu0 0.0
    %373 = vmatprep.subr.mxu0 0.0
    %374 = vmatpush1.msra.mxu0 0.0
    %375 = vmatprep.subr.mxu0 0.0
    %376 = vmatpush1.msra.mxu0 0.0
    %377 = vmatprep.subr.mxu0 0.0
    %378 = vmatpush1.msra.mxu0 0.0
    %379 = vmatprep.subr.mxu0 0.0
    %380 = vmatpush1.msra.mxu0 0.0
    %381 = vmatprep.subr.mxu0 0.0
    %382 = vmatpush1.msra.mxu0 0.0
    %383 = vmatprep.subr.mxu0 0.0
    %384 = vmatpush1.msra.mxu0 0.0
    %385 = vmatprep.subr.mxu0 0.0
    %386 = vmatpush1.msra.mxu0 0.0
    %387 = vmatprep.subr.mxu0 0.0
    %388 = vmatpush1.msra.mxu0 0.0
    %389 = vmatprep.subr.mxu0 0.0
    %390 = vmatpush1.msra.mxu0 0.0
    %391 = vmatprep.subr.mxu0 0.0
    %392 = vmatpush1.msra.mxu0 0.0
    %393 = vmatprep.subr.mxu0 0.0
    %394 = vmatpush1.msra.mxu0 0.0
    %395 = vmatprep.subr.mxu0 0.0
    %396 = vmatpush1.msra.mxu0 0.0
    %397 = vmatprep.subr.mxu0 0.0
    %398 = vmatpush1.msra.mxu0 0.0
    %399 = vmatprep.subr.mxu0 0.0
    %400 = vmatpush1.msra.mxu0 0.0
    %401 = vmatprep.subr.mxu0 0.0
    %402 = vmatpush1.msra.mxu0 0.0
    %403 = vmatprep.subr.mxu0 0.0
    %404 = vmatpush1.msra.mxu0 0.0
    %405 = vmatprep.subr.mxu0 0.0
    %406 = vmatpush1.msra.mxu0 0.0
    %407 = vmatprep.subr.mxu0 0.0
    %408 = vmatpush1.msra.mxu0 0.0
    %409 = vmatprep.subr.mxu0 0.0
    %410 = vmatpush1.msra.mxu0 0.0
    %411 = vmatprep.subr.mxu0 0.0
    %412 = vmatpush1.msra.mxu0 0.0
    %413 = vmatprep.subr.mxu0 0.0
    %414 = vmatpush1.msra.mxu0 0.0
    %415 = vmatprep.subr.mxu0 0.0
    %416 = vmatpush1.msra.mxu0 0.0
    %417 = vmatprep.subr.mxu0 0.0
    %418 = vmatpush1.msra.mxu0 0.0
    %419 = vmatprep.subr.mxu0 0.0
    %420 = vmatpush1.msra.mxu0 0.0
    %421 = vmatprep.subr.mxu0 0.0
    %422 = vmatpush1.msra.mxu0 0.0
    %423 = vmatprep.subr.mxu0 0.0
    %424 = vmatpush1.msra.mxu0 0.0
    %425 = vmatprep.subr.mxu0 0.0
    %426 = vmatpush1.msra.mxu0 0.0
    %427 = vmatprep.subr.mxu0 0.0
    %428 = vmatpush1.msra.mxu0 0.0
    %429 = vmatprep.mubr.f32.mxu0 0.0
    %430 = vmatmul.mubr.f32.gmra.mrb[0].mxu0 %v363
    %v431 = vpop.f32.mrb[0].mxu0
    %v432 = vadd.f32 0.0, %v431
    %v433 = vpop.f32.mrb[0].mxu0
    %434 = vdwg.mxu0
    %v435 = vmax.f32 %v432, 0.0
    %437 = vrot.lane.b32.xlu0 %v435, 120
    %v438 = vpop.permute.xlu0 %437
    %v440 = vmax.f32 %v435, %v438
    %442 = vrot.lane.b32.xlu0 %v440, 112
    %v443 = vpop.permute.xlu0 %442
    %v445 = vmax.f32 %v440, %v443
    %vm446 = vcmask 64512
    %v448 = vsel %vm446, %v445, 0
    %450 = vmatprep.subr.mxu0 0.0
    %451 = vmatpush1.msra.mxu0 %v254
    %452 = vmatprep.subr.mxu0 0.0
    %453 = vmatpush1.msra.mxu0 0.0
    %454 = vmatprep.subr.mxu0 0.0
    %455 = vmatpush1.msra.mxu0 0.0
    %456 = vmatprep.subr.mxu0 0.0
    %457 = vmatpush1.msra.mxu0 0.0
    %458 = vmatprep.subr.mxu0 0.0
    %459 = vmatpush1.msra.mxu0 0.0
    %460 = vmatprep.subr.mxu0 0.0
    %461 = vmatpush1.msra.mxu0 0.0
    %462 = vmatprep.subr.mxu0 0.0
    %463 = vmatpush1.msra.mxu0 0.0
    %464 = vmatprep.subr.mxu0 0.0
    %465 = vmatpush1.msra.mxu0 0.0
    %466 = vmatprep.subr.mxu0 0.0
    %467 = vmatpush1.msra.mxu0 0.0
    %468 = vmatprep.subr.mxu0 0.0
    %469 = vmatpush1.msra.mxu0 0.0
    %470 = vmatprep.subr.mxu0 0.0
    %471 = vmatpush1.msra.mxu0 0.0
    %472 = vmatprep.subr.mxu0 0.0
    %473 = vmatpush1.msra.mxu0 0.0
    %474 = vmatprep.subr.mxu0 0.0
    %475 = vmatpush1.msra.mxu0 0.0
    %476 = vmatprep.subr.mxu0 0.0
    %477 = vmatpush1.msra.mxu0 0.0
    %478 = vmatprep.subr.mxu0 0.0
    %479 = vmatpush1.msra.mxu0 0.0
    %480 = vmatprep.subr.mxu0 0.0
    %481 = vmatpush1.msra.mxu0 0.0
    %482 = vmatprep.subr.mxu0 0.0
    %483 = vmatpush1.msra.mxu0 0.0
    %484 = vmatprep.subr.mxu0 0.0
    %485 = vmatpush1.msra.mxu0 0.0
    %486 = vmatprep.subr.mxu0 0.0
    %487 = vmatpush1.msra.mxu0 0.0
    %488 = vmatprep.subr.mxu0 0.0
    %489 = vmatpush1.msra.mxu0 0.0
    %490 = vmatprep.subr.mxu0 0.0
    %491 = vmatpush1.msra.mxu0 0.0
    %492 = vmatprep.subr.mxu0 0.0
    %493 = vmatpush1.msra.mxu0 0.0
    %494 = vmatprep.subr.mxu0 0.0
    %495 = vmatpush1.msra.mxu0 0.0
    %496 = vmatprep.subr.mxu0 0.0
    %497 = vmatpush1.msra.mxu0 0.0
    %498 = vmatprep.subr.mxu0 0.0
    %499 = vmatpush1.msra.mxu0 0.0
    %500 = vmatprep.subr.mxu0 0.0
    %501 = vmatpush1.msra.mxu0 0.0
    %502 = vmatprep.subr.mxu0 0.0
    %503 = vmatpush1.msra.mxu0 0.0
    %504 = vmatprep.subr.mxu0 0.0
    %505 = vmatpush1.msra.mxu0 0.0
    %506 = vmatprep.subr.mxu0 0.0
    %507 = vmatpush1.msra.mxu0 0.0
    %508 = vmatprep.subr.mxu0 0.0
    %509 = vmatpush1.msra.mxu0 0.0
    %510 = vmatprep.subr.mxu0 0.0
    %511 = vmatpush1.msra.mxu0 0.0
    %512 = vmatprep.subr.mxu0 0.0
    %513 = vmatpush1.msra.mxu0 0.0
    %514 = vmatprep.mubr.f32.mxu0 0.0
    %515 = vmatmul.mubr.f32.gmra.mrb[0].mxu0 %v448
    %v516 = vpop.f32.mrb[0].mxu0
    %v517 = vadd.f32 0.0, %v516
    %v518 = vpop.f32.mrb[0].mxu0
    %519 = vdwg.mxu0
    %521 = vrot.lane.b32.xlu0 %v517, 48
    %v522 = vpop.permute.xlu0 %521
    %v524 = vadd.f32 %v238, %v522
    %v525 = vadd.f32 %v524, %v328
    %v526 = vxor.u32 %v525, 2147483648
    %v527 = vmul.f32 %v526, 1.442695
    %v528 = vpow.pop %v527
    %v529 = vadd.f32 %v528, 1.0
    %v530 = vrcp.pop %v529
    %v531 = vmul.f32 1.0, %v530
    %v532 = vmul.f32 %v531, %v340
    %534 = vrot.lane.b32.xlu0 %v532, 32
    %v535 = vpop.permute.xlu0 %534
    %v537 = vadd.f32 %v524, %v535
    %v538 = vtanh.pop %v537
    %v539 = vsub.f32 1.0, %v531
    %541 = vrot.lane.b32.xlu0 %v538, 112
    %v542 = vpop.permute.xlu0 %541
    %v544 = vmul.f32 %v539, %v542
    %v545 = vmul.f32 %v531, 0.0
    %v546 = vadd.f32 %v544, %v545
    %548 = vrot.lane.b32.xlu0 %v546, 88
    %v549 = vpop.permute.xlu0 %548
    %v551 = vsel %vm56, %v361, %v549
    %v553 = vsel %vm257, %v551, 0
    %555 = vmatprep.subr.mxu0 0.0
    %556 = vmatpush1.msra.mxu0 %v246
    %557 = vmatprep.subr.mxu0 0.0
    %558 = vmatpush1.msra.mxu0 %v247
    %559 = vmatprep.subr.mxu0 0.0
    %560 = vmatpush1.msra.mxu0 %v248
    %561 = vmatprep.subr.mxu0 0.0
    %562 = vmatpush1.msra.mxu0 %v249
    %563 = vmatprep.subr.mxu0 0.0
    %564 = vmatpush1.msra.mxu0 %v250
    %565 = vmatprep.subr.mxu0 0.0
    %566 = vmatpush1.msra.mxu0 0.0
    %567 = vmatprep.subr.mxu0 0.0
    %568 = vmatpush1.msra.mxu0 0.0
    %569 = vmatprep.subr.mxu0 0.0
    %570 = vmatpush1.msra.mxu0 0.0
    %571 = vmatprep.subr.mxu0 0.0
    %572 = vmatpush1.msra.mxu0 0.0
    %573 = vmatprep.subr.mxu0 0.0
    %574 = vmatpush1.msra.mxu0 0.0
    %575 = vmatprep.subr.mxu0 0.0
    %576 = vmatpush1.msra.mxu0 0.0
    %577 = vmatprep.subr.mxu0 0.0
    %578 = vmatpush1.msra.mxu0 0.0
    %579 = vmatprep.subr.mxu0 0.0
    %580 = vmatpush1.msra.mxu0 0.0
    %581 = vmatprep.subr.mxu0 0.0
    %582 = vmatpush1.msra.mxu0 0.0
    %583 = vmatprep.subr.mxu0 0.0
    %584 = vmatpush1.msra.mxu0 0.0
    %585 = vmatprep.subr.mxu0 0.0
    %586 = vmatpush1.msra.mxu0 0.0
    %587 = vmatprep.subr.mxu0 0.0
    %588 = vmatpush1.msra.mxu0 0.0
    %589 = vmatprep.subr.mxu0 0.0
    %590 = vmatpush1.msra.mxu0 0.0
    %591 = vmatprep.subr.mxu0 0.0
    %592 = vmatpush1.msra.mxu0 0.0
    %593 = vmatprep.subr.mxu0 0.0
    %594 = vmatpush1.msra.mxu0 0.0
    %595 = vmatprep.subr.mxu0 0.0
    %596 = vmatpush1.msra.mxu0 0.0
    %597 = vmatprep.subr.mxu0 0.0
    %598 = vmatpush1.msra.mxu0 0.0
    %599 = vmatprep.subr.mxu0 0.0
    %600 = vmatpush1.msra.mxu0 0.0
    %601 = vmatprep.subr.mxu0 0.0
    %602 = vmatpush1.msra.mxu0 0.0
    %603 = vmatprep.subr.mxu0 0.0
    %604 = vmatpush1.msra.mxu0 0.0
    %605 = vmatprep.subr.mxu0 0.0
    %606 = vmatpush1.msra.mxu0 0.0
    %607 = vmatprep.subr.mxu0 0.0
    %608 = vmatpush1.msra.mxu0 0.0
    %609 = vmatprep.subr.mxu0 0.0
    %610 = vmatpush1.msra.mxu0 0.0
    %611 = vmatprep.subr.mxu0 0.0
    %612 = vmatpush1.msra.mxu0 0.0
    %613 = vmatprep.subr.mxu0 0.0
    %614 = vmatpush1.msra.mxu0 0.0
    %615 = vmatprep.subr.mxu0 0.0
    %616 = vmatpush1.msra.mxu0 0.0
    %617 = vmatprep.subr.mxu0 0.0
    %618 = vmatpush1.msra.mxu0 0.0
    %619 = vmatprep.mubr.f32.mxu0 0.0
    %620 = vmatmul.mubr.f32.gmra.mrb[0].mxu0 %v553
    %v621 = vpop.f32.mrb[0].mxu0
    %v622 = vadd.f32 0.0, %v621
    %v623 = vpop.f32.mrb[0].mxu0
    %624 = vdwg.mxu0
    %v626 = vrot.slane %v622, 6
    %v628 = vadd.f32 %v238, %v626
    %v629 = vxor.u32 %v628, 2147483648
    %v630 = vmul.f32 %v629, 1.442695
    %v631 = vpow.pop %v630
    %v632 = vadd.f32 %v631, 1.0
    %v633 = vrcp.pop %v632
    %v634 = vmul.f32 1.0, %v633
    %635 = vrot.lane.b32.xlu0 %v626, 96
    %v636 = vpop.permute.xlu0 %635
    %v638 = vmul.f32 %v634, %v636
    %640 = vrot.lane.b32.xlu0 %v638, 32
    %v641 = vpop.permute.xlu0 %640
    %v643 = vadd.f32 %v238, %v641
    %v644 = vtanh.pop %v643
    %v645 = vsub.f32 1.0, %v634
    %647 = vrot.lane.b32.xlu0 %v644, 112
    %v648 = vpop.permute.xlu0 %647
    %v650 = vmul.f32 %v645, %v648
    %v651 = vrot.slane %v356, 6
    %v653 = vmul.f32 %v634, %v651
    %v654 = vadd.f32 %v650, %v653
    %656 = vrot.lane.b32.xlu0 %v654, 112
    %v657 = vpop.permute.xlu0 %656
    %v659 = vsel %vm50, %v657, %v48
    %v661 = vrot.slane %v659, 2
    %v662 = vsel %vm56, %v661, 0
    %664 = vmatprep.subr.mxu0 0.0
    %665 = vmatpush1.msra.mxu0 %v251
    %666 = vmatprep.subr.mxu0 0.0
    %667 = vmatpush1.msra.mxu0 %v252
    %668 = vmatprep.subr.mxu0 0.0
    %669 = vmatpush1.msra.mxu0 %v253
    %670 = vmatprep.subr.mxu0 0.0
    %671 = vmatpush1.msra.mxu0 0.0
    %672 = vmatprep.subr.mxu0 0.0
    %673 = vmatpush1.msra.mxu0 0.0
    %674 = vmatprep.subr.mxu0 0.0
    %675 = vmatpush1.msra.mxu0 0.0
    %676 = vmatprep.subr.mxu0 0.0
    %677 = vmatpush1.msra.mxu0 0.0
    %678 = vmatprep.subr.mxu0 0.0
    %679 = vmatpush1.msra.mxu0 0.0
    %680 = vmatprep.subr.mxu0 0.0
    %681 = vmatpush1.msra.mxu0 0.0
    %682 = vmatprep.subr.mxu0 0.0
    %683 = vmatpush1.msra.mxu0 0.0
    %684 = vmatprep.subr.mxu0 0.0
    %685 = vmatpush1.msra.mxu0 0.0
    %686 = vmatprep.subr.mxu0 0.0
    %687 = vmatpush1.msra.mxu0 0.0
    %688 = vmatprep.subr.mxu0 0.0
    %689 = vmatpush1.msra.mxu0 0.0
    %690 = vmatprep.subr.mxu0 0.0
    %691 = vmatpush1.msra.mxu0 0.0
    %692 = vmatprep.subr.mxu0 0.0
    %693 = vmatpush1.msra.mxu0 0.0
    %694 = vmatprep.subr.mxu0 0.0
    %695 = vmatpush1.msra.mxu0 0.0
    %696 = vmatprep.subr.mxu0 0.0
    %697 = vmatpush1.msra.mxu0 0.0
    %698 = vmatprep.subr.mxu0 0.0
    %699 = vmatpush1.msra.mxu0 0.0
    %700 = vmatprep.subr.mxu0 0.0
    %701 = vmatpush1.msra.mxu0 0.0
    %702 = vmatprep.subr.mxu0 0.0
    %703 = vmatpush1.msra.mxu0 0.0
    %704 = vmatprep.subr.mxu0 0.0
    %705 = vmatpush1.msra.mxu0 0.0
    %706 = vmatprep.subr.mxu0 0.0
    %707 = vmatpush1.msra.mxu0 0.0
    %708 = vmatprep.subr.mxu0 0.0
    %709 = vmatpush1.msra.mxu0 0.0
    %710 = vmatprep.subr.mxu0 0.0
    %711 = vmatpush1.msra.mxu0 0.0
    %712 = vmatprep.subr.mxu0 0.0
    %713 = vmatpush1.msra.mxu0 0.0
    %714 = vmatprep.subr.mxu0 0.0
    %715 = vmatpush1.msra.mxu0 0.0
    %716 = vmatprep.subr.mxu0 0.0
    %717 = vmatpush1.msra.mxu0 0.0
    %718 = vmatprep.subr.mxu0 0.0
    %719 = vmatpush1.msra.mxu0 0.0
    %720 = vmatprep.subr.mxu0 0.0
    %721 = vmatpush1.msra.mxu0 0.0
    %722 = vmatprep.subr.mxu0 0.0
    %723 = vmatpush1.msra.mxu0 0.0
    %724 = vmatprep.subr.mxu0 0.0
    %725 = vmatpush1.msra.mxu0 0.0
    %726 = vmatprep.subr.mxu0 0.0
    %727 = vmatpush1.msra.mxu0 0.0
    %728 = vmatprep.mubr.f32.mxu0 0.0
    %729 = vmatmul.mubr.f32.gmra.mrb[0].mxu0 %v662
    %v730 = vpop.f32.mrb[0].mxu0
    %v731 = vadd.f32 0.0, %v730
    %v732 = vpop.f32.mrb[0].mxu0
    %733 = vdwg.mxu0
    %v734 = vmax.f32 %v731, 0.0
    %736 = vrot.lane.b32.xlu0 %v734, 120
    %v737 = vpop.permute.xlu0 %736
    %v739 = vmax.f32 %v734, %v737
    %741 = vrot.lane.b32.xlu0 %v739, 112
    %v742 = vpop.permute.xlu0 %741
    %v744 = vmax.f32 %v739, %v742
    %v746 = vsel %vm446, %v744, 0
    %748 = vmatprep.subr.mxu0 0.0
    %749 = vmatpush1.msra.mxu0 %v254
    %750 = vmatprep.subr.mxu0 0.0
    %751 = vmatpush1.msra.mxu0 0.0
    %752 = vmatprep.subr.mxu0 0.0
    %753 = vmatpush1.msra.mxu0 0.0
    %754 = vmatprep.subr.mxu0 0.0
    %755 = vmatpush1.msra.mxu0 0.0
    %756 = vmatprep.subr.mxu0 0.0
    %757 = vmatpush1.msra.mxu0 0.0
    %758 = vmatprep.subr.mxu0 0.0
    %759 = vmatpush1.msra.mxu0 0.0
    %760 = vmatprep.subr.mxu0 0.0
    %761 = vmatpush1.msra.mxu0 0.0
    %762 = vmatprep.subr.mxu0 0.0
    %763 = vmatpush1.msra.mxu0 0.0
    %764 = vmatprep.subr.mxu0 0.0
    %765 = vmatpush1.msra.mxu0 0.0
    %766 = vmatprep.subr.mxu0 0.0
    %767 = vmatpush1.msra.mxu0 0.0
    %768 = vmatprep.subr.mxu0 0.0
    %769 = vmatpush1.msra.mxu0 0.0
    %770 = vmatprep.subr.mxu0 0.0
    %771 = vmatpush1.msra.mxu0 0.0
    %772 = vmatprep.subr.mxu0 0.0
    %773 = vmatpush1.msra.mxu0 0.0
    %774 = vmatprep.subr.mxu0 0.0
    %775 = vmatpush1.msra.mxu0 0.0
    %776 = vmatprep.subr.mxu0 0.0
    %777 = vmatpush1.msra.mxu0 0.0
    %778 = vmatprep.subr.mxu0 0.0
    %779 = vmatpush1.msra.mxu0 0.0
    %780 = vmatprep.subr.mxu0 0.0
    %781 = vmatpush1.msra.mxu0 0.0
    %782 = vmatprep.subr.mxu0 0.0
    %783 = vmatpush1.msra.mxu0 0.0
    %784 = vmatprep.subr.mxu0 0.0
    %785 = vmatpush1.msra.mxu0 0.0
    %786 = vmatprep.subr.mxu0 0.0
    %787 = vmatpush1.msra.mxu0 0.0
    %788 = vmatprep.subr.mxu0 0.0
    %789 = vmatpush1.msra.mxu0 0.0
    %790 = vmatprep.subr.mxu0 0.0
    %791 = vmatpush1.msra.mxu0 0.0
    %792 = vmatprep.subr.mxu0 0.0
    %793 = vmatpush1.msra.mxu0 0.0
    %794 = vmatprep.subr.mxu0 0.0
    %795 = vmatpush1.msra.mxu0 0.0
    %796 = vmatprep.subr.mxu0 0.0
    %797 = vmatpush1.msra.mxu0 0.0
    %798 = vmatprep.subr.mxu0 0.0
    %799 = vmatpush1.msra.mxu0 0.0
    %800 = vmatprep.subr.mxu0 0.0
    %801 = vmatpush1.msra.mxu0 0.0
    %802 = vmatprep.subr.mxu0 0.0
    %803 = vmatpush1.msra.mxu0 0.0
    %804 = vmatprep.subr.mxu0 0.0
    %805 = vmatpush1.msra.mxu0 0.0
    %806 = vmatprep.subr.mxu0 0.0
    %807 = vmatpush1.msra.mxu0 0.0
    %808 = vmatprep.subr.mxu0 0.0
    %809 = vmatpush1.msra.mxu0 0.0
    %810 = vmatprep.subr.mxu0 0.0
    %811 = vmatpush1.msra.mxu0 0.0
    %812 = vmatprep.mubr.f32.mxu0 0.0
    %813 = vmatmul.mubr.f32.gmra.mrb[0].mxu0 %v746
    %v814 = vpop.f32.mrb[0].mxu0
    %v815 = vadd.f32 0.0, %v814
    %v816 = vpop.f32.mrb[0].mxu0
    %817 = vdwg.mxu0
    %v819 = vrot.slane %v815, 6
    %820 = vrot.lane.b32.xlu0 %v819, 48
    %v821 = vpop.permute.xlu0 %820
    %v823 = vadd.f32 %v238, %v821
    %v824 = vadd.f32 %v823, %v626
    %v825 = vxor.u32 %v824, 2147483648
    %v826 = vmul.f32 %v825, 1.442695
    %v827 = vpow.pop %v826
    %v828 = vadd.f32 %v827, 1.0
    %v829 = vrcp.pop %v828
    %v830 = vmul.f32 1.0, %v829
    %v831 = vmul.f32 %v830, %v636
    %833 = vrot.lane.b32.xlu0 %v831, 32
    %v834 = vpop.permute.xlu0 %833
    %v836 = vadd.f32 %v823, %v834
    %v837 = vtanh.pop %v836
    %v838 = vsub.f32 1.0, %v830
    %840 = vrot.lane.b32.xlu0 %v837, 112
    %v841 = vpop.permute.xlu0 %840
    %v843 = vmul.f32 %v838, %v841
    %v844 = vrot.slane %v546, 6
    %v846 = vmul.f32 %v830, %v844
    %v847 = vadd.f32 %v843, %v846
    %849 = vrot.lane.b32.xlu0 %v847, 88
    %v850 = vpop.permute.xlu0 %849
    %v852 = vsel %vm56, %v659, %v850
    %v854 = vrot.slane %v852, 2
    %v855 = vsel %vm257, %v854, 0
    %857 = vmatprep.subr.mxu0 0.0
    %858 = vmatpush1.msra.mxu0 %v246
    %859 = vmatprep.subr.mxu0 0.0
    %860 = vmatpush1.msra.mxu0 %v247
    %861 = vmatprep.subr.mxu0 0.0
    %862 = vmatpush1.msra.mxu0 %v248
    %863 = vmatprep.subr.mxu0 0.0
    %864 = vmatpush1.msra.mxu0 %v249
    %865 = vmatprep.subr.mxu0 0.0
    %866 = vmatpush1.msra.mxu0 %v250
    %867 = vmatprep.subr.mxu0 0.0
    %868 = vmatpush1.msra.mxu0 0.0
    %869 = vmatprep.subr.mxu0 0.0
    %870 = vmatpush1.msra.mxu0 0.0
    %871 = vmatprep.subr.mxu0 0.0
    %872 = vmatpush1.msra.mxu0 0.0
    %873 = vmatprep.subr.mxu0 0.0
    %874 = vmatpush1.msra.mxu0 0.0
    %875 = vmatprep.subr.mxu0 0.0
    %876 = vmatpush1.msra.mxu0 0.0
    %877 = vmatprep.subr.mxu0 0.0
    %878 = vmatpush1.msra.mxu0 0.0
    %879 = vmatprep.subr.mxu0 0.0
    %880 = vmatpush1.msra.mxu0 0.0
    %881 = vmatprep.subr.mxu0 0.0
    %882 = vmatpush1.msra.mxu0 0.0
    %883 = vmatprep.subr.mxu0 0.0
    %884 = vmatpush1.msra.mxu0 0.0
    %885 = vmatprep.subr.mxu0 0.0
    %886 = vmatpush1.msra.mxu0 0.0
    %887 = vmatprep.subr.mxu0 0.0
    %888 = vmatpush1.msra.mxu0 0.0
    %889 = vmatprep.subr.mxu0 0.0
    %890 = vmatpush1.msra.mxu0 0.0
    %891 = vmatprep.subr.mxu0 0.0
    %892 = vmatpush1.msra.mxu0 0.0
    %893 = vmatprep.subr.mxu0 0.0
    %894 = vmatpush1.msra.mxu0 0.0
    %895 = vmatprep.subr.mxu0 0.0
    %896 = vmatpush1.msra.mxu0 0.0
    %897 = vmatprep.subr.mxu0 0.0
    %898 = vmatpush1.msra.mxu0 0.0
    %899 = vmatprep.subr.mxu0 0.0
    %900 = vmatpush1.msra.mxu0 0.0
    %901 = vmatprep.subr.mxu0 0.0
    %902 = vmatpush1.msra.mxu0 0.0
    %903 = vmatprep.subr.mxu0 0.0
    %904 = vmatpush1.msra.mxu0 0.0
    %905 = vmatprep.subr.mxu0 0.0
    %906 = vmatpush1.msra.mxu0 0.0
    %907 = vmatprep.subr.mxu0 0.0
    %908 = vmatpush1.msra.mxu0 0.0
    %909 = vmatprep.subr.mxu0 0.0
    %910 = vmatpush1.msra.mxu0 0.0
    %911 = vmatprep.subr.mxu0 0.0
    %912 = vmatpush1.msra.mxu0 0.0
    %913 = vmatprep.subr.mxu0 0.0
    %914 = vmatpush1.msra.mxu0 0.0
    %915 = vmatprep.subr.mxu0 0.0
    %916 = vmatpush1.msra.mxu0 0.0
    %917 = vmatprep.subr.mxu0 0.0
    %918 = vmatpush1.msra.mxu0 0.0
    %919 = vmatprep.subr.mxu0 0.0
    %920 = vmatpush1.msra.mxu0 0.0
    %921 = vmatprep.mubr.f32.mxu0 0.0
    %922 = vmatmul.mubr.f32.gmra.mrb[0].mxu0 %v855
    %v923 = vpop.f32.mrb[0].mxu0
    %v924 = vadd.f32 0.0, %v923
    %v925 = vpop.f32.mrb[0].mxu0
    %926 = vdwg.mxu0
    %v928 = vrot.slane %v924, 4
    %v930 = vadd.f32 %v238, %v928
    %v931 = vxor.u32 %v930, 2147483648
    %v932 = vmul.f32 %v931, 1.442695
    %v933 = vpow.pop %v932
    %v934 = vadd.f32 %v933, 1.0
    %v935 = vrcp.pop %v934
    %v936 = vmul.f32 1.0, %v935
    %937 = vrot.lane.b32.xlu0 %v928, 96
    %v938 = vpop.permute.xlu0 %937
    %v940 = vmul.f32 %v936, %v938
    %942 = vrot.lane.b32.xlu0 %v940, 32
    %v943 = vpop.permute.xlu0 %942
    %v945 = vadd.f32 %v238, %v943
    %v946 = vtanh.pop %v945
    %v947 = vsub.f32 1.0, %v936
    %949 = vrot.lane.b32.xlu0 %v946, 112
    %v950 = vpop.permute.xlu0 %949
    %v952 = vmul.f32 %v947, %v950
    %v953 = vrot.slane %v654, 6
    %v955 = vmul.f32 %v936, %v953
    %v956 = vadd.f32 %v952, %v955
    %958 = vrot.lane.b32.xlu0 %v956, 112
    %v959 = vpop.permute.xlu0 %958
    %v961 = vsel %vm50, %v959, %v48
    %v963 = vrot.slane %v961, 4
    %v964 = vsel %vm56, %v963, 0
    %966 = vmatprep.subr.mxu0 0.0
    %967 = vmatpush1.msra.mxu0 %v251
    %968 = vmatprep.subr.mxu0 0.0
    %969 = vmatpush1.msra.mxu0 %v252
    %970 = vmatprep.subr.mxu0 0.0
    %971 = vmatpush1.msra.mxu0 %v253
    %972 = vmatprep.subr.mxu0 0.0
    %973 = vmatpush1.msra.mxu0 0.0
    %974 = vmatprep.subr.mxu0 0.0
    %975 = vmatpush1.msra.mxu0 0.0
    %976 = vmatprep.subr.mxu0 0.0
    %977 = vmatpush1.msra.mxu0 0.0
    %978 = vmatprep.subr.mxu0 0.0
    %979 = vmatpush1.msra.mxu0 0.0
    %980 = vmatprep.subr.mxu0 0.0
    %981 = vmatpush1.msra.mxu0 0.0
    %982 = vmatprep.subr.mxu0 0.0
    %983 = vmatpush1.msra.mxu0 0.0
    %984 = vmatprep.subr.mxu0 0.0
    %985 = vmatpush1.msra.mxu0 0.0
    %986 = vmatprep.subr.mxu0 0.0
    %987 = vmatpush1.msra.mxu0 0.0
    %988 = vmatprep.subr.mxu0 0.0
    %989 = vmatpush1.msra.mxu0 0.0
    %990 = vmatprep.subr.mxu0 0.0
    %991 = vmatpush1.msra.mxu0 0.0
    %992 = vmatprep.subr.mxu0 0.0
    %993 = vmatpush1.msra.mxu0 0.0
    %994 = vmatprep.subr.mxu0 0.0
    %995 = vmatpush1.msra.mxu0 0.0
    %996 = vmatprep.subr.mxu0 0.0
    %997 = vmatpush1.msra.mxu0 0.0
    %998 = vmatprep.subr.mxu0 0.0
    %999 = vmatpush1.msra.mxu0 0.0
    %1000 = vmatprep.subr.mxu0 0.0
    %1001 = vmatpush1.msra.mxu0 0.0
    %1002 = vmatprep.subr.mxu0 0.0
    %1003 = vmatpush1.msra.mxu0 0.0
    %1004 = vmatprep.subr.mxu0 0.0
    %1005 = vmatpush1.msra.mxu0 0.0
    %1006 = vmatprep.subr.mxu0 0.0
    %1007 = vmatpush1.msra.mxu0 0.0
    %1008 = vmatprep.subr.mxu0 0.0
    %1009 = vmatpush1.msra.mxu0 0.0
    %1010 = vmatprep.subr.mxu0 0.0
    %1011 = vmatpush1.msra.mxu0 0.0
    %1012 = vmatprep.subr.mxu0 0.0
    %1013 = vmatpush1.msra.mxu0 0.0
    %1014 = vmatprep.subr.mxu0 0.0
    %1015 = vmatpush1.msra.mxu0 0.0
    %1016 = vmatprep.subr.mxu0 0.0
    %1017 = vmatpush1.msra.mxu0 0.0
    %1018 = vmatprep.subr.mxu0 0.0
    %1019 = vmatpush1.msra.mxu0 0.0
    %1020 = vmatprep.subr.mxu0 0.0
    %1021 = vmatpush1.msra.mxu0 0.0
    %1022 = vmatprep.subr.mxu0 0.0
    %1023 = vmatpush1.msra.mxu0 0.0
    %1024 = vmatprep.subr.mxu0 0.0
    %1025 = vmatpush1.msra.mxu0 0.0
    %1026 = vmatprep.subr.mxu0 0.0
    %1027 = vmatpush1.msra.mxu0 0.0
    %1028 = vmatprep.subr.mxu0 0.0
    %1029 = vmatpush1.msra.mxu0 0.0
    %1030 = vmatprep.mubr.f32.mxu0 0.0
    %1031 = vmatmul.mubr.f32.gmra.mrb[0].mxu0 %v964
    %v1032 = vpop.f32.mrb[0].mxu0
    %v1033 = vadd.f32 0.0, %v1032
    %v1034 = vpop.f32.mrb[0].mxu0
    %1035 = vdwg.mxu0
    %v1036 = vmax.f32 %v1033, 0.0
    %1038 = vrot.lane.b32.xlu0 %v1036, 120
    %v1039 = vpop.permute.xlu0 %1038
    %v1041 = vmax.f32 %v1036, %v1039
    %1043 = vrot.lane.b32.xlu0 %v1041, 112
    %v1044 = vpop.permute.xlu0 %1043
    %v1046 = vmax.f32 %v1041, %v1044
    %v1048 = vsel %vm446, %v1046, 0
    %1050 = vmatprep.subr.mxu0 0.0
    %1051 = vmatpush1.msra.mxu0 %v254
    %1052 = vmatprep.subr.mxu0 0.0
    %1053 = vmatpush1.msra.mxu0 0.0
    %1054 = vmatprep.subr.mxu0 0.0
    %1055 = vmatpush1.msra.mxu0 0.0
    %1056 = vmatprep.subr.mxu0 0.0
    %1057 = vmatpush1.msra.mxu0 0.0
    %1058 = vmatprep.subr.mxu0 0.0
    %1059 = vmatpush1.msra.mxu0 0.0
    %1060 = vmatprep.subr.mxu0 0.0
    %1061 = vmatpush1.msra.mxu0 0.0
    %1062 = vmatprep.subr.mxu0 0.0
    %1063 = vmatpush1.msra.mxu0 0.0
    %1064 = vmatprep.subr.mxu0 0.0
    %1065 = vmatpush1.msra.mxu0 0.0
    %1066 = vmatprep.subr.mxu0 0.0
    %1067 = vmatpush1.msra.mxu0 0.0
    %1068 = vmatprep.subr.mxu0 0.0
    %1069 = vmatpush1.msra.mxu0 0.0
    %1070 = vmatprep.subr.mxu0 0.0
    %1071 = vmatpush1.msra.mxu0 0.0
    %1072 = vmatprep.subr.mxu0 0.0
    %1073 = vmatpush1.msra.mxu0 0.0
    %1074 = vmatprep.subr.mxu0 0.0
    %1075 = vmatpush1.msra.mxu0 0.0
    %1076 = vmatprep.subr.mxu0 0.0
    %1077 = vmatpush1.msra.mxu0 0.0
    %1078 = vmatprep.subr.mxu0 0.0
    %1079 = vmatpush1.msra.mxu0 0.0
    %1080 = vmatprep.subr.mxu0 0.0
    %1081 = vmatpush1.msra.mxu0 0.0
    %1082 = vmatprep.subr.mxu0 0.0
    %1083 = vmatpush1.msra.mxu0 0.0
    %1084 = vmatprep.subr.mxu0 0.0
    %1085 = vmatpush1.msra.mxu0 0.0
    %1086 = vmatprep.subr.mxu0 0.0
    %1087 = vmatpush1.msra.mxu0 0.0
    %1088 = vmatprep.subr.mxu0 0.0
    %1089 = vmatpush1.msra.mxu0 0.0
    %1090 = vmatprep.subr.mxu0 0.0
    %1091 = vmatpush1.msra.mxu0 0.0
    %1092 = vmatprep.subr.mxu0 0.0
    %1093 = vmatpush1.msra.mxu0 0.0
    %1094 = vmatprep.subr.mxu0 0.0
    %1095 = vmatpush1.msra.mxu0 0.0
    %1096 = vmatprep.subr.mxu0 0.0
    %1097 = vmatpush1.msra.mxu0 0.0
    %1098 = vmatprep.subr.mxu0 0.0
    %1099 = vmatpush1.msra.mxu0 0.0
    %1100 = vmatprep.subr.mxu0 0.0
    %1101 = vmatpush1.msra.mxu0 0.0
    %1102 = vmatprep.subr.mxu0 0.0
    %1103 = vmatpush1.msra.mxu0 0.0
    %1104 = vmatprep.subr.mxu0 0.0
    %1105 = vmatpush1.msra.mxu0 0.0
    %1106 = vmatprep.subr.mxu0 0.0
    %1107 = vmatpush1.msra.mxu0 0.0
    %1108 = vmatprep.subr.mxu0 0.0
    %1109 = vmatpush1.msra.mxu0 0.0
    %1110 = vmatprep.subr.mxu0 0.0
    %1111 = vmatpush1.msra.mxu0 0.0
    %1112 = vmatprep.subr.mxu0 0.0
    %1113 = vmatpush1.msra.mxu0 0.0
    %1114 = vmatprep.mubr.f32.mxu0 0.0
    %1115 = vmatmul.mubr.f32.gmra.mrb[0].mxu0 %v1048
    %v1116 = vpop.f32.mrb[0].mxu0
    %v1117 = vadd.f32 0.0, %v1116
    %v1118 = vpop.f32.mrb[0].mxu0
    %1119 = vdwg.mxu0
    %v1121 = vrot.slane %v1117, 4
    %1122 = vrot.lane.b32.xlu0 %v1121, 48
    %v1123 = vpop.permute.xlu0 %1122
    %v1125 = vadd.f32 %v238, %v1123
    %v1126 = vadd.f32 %v1125, %v928
    %v1127 = vxor.u32 %v1126, 2147483648
    %v1128 = vmul.f32 %v1127, 1.442695
    %v1129 = vpow.pop %v1128
    %v1130 = vadd.f32 %v1129, 1.0
    %v1131 = vrcp.pop %v1130
    %v1132 = vmul.f32 1.0, %v1131
    %v1133 = vmul.f32 %v1132, %v938
    %1135 = vrot.lane.b32.xlu0 %v1133, 32
    %v1136 = vpop.permute.xlu0 %1135
    %v1138 = vadd.f32 %v1125, %v1136
    %v1139 = vtanh.pop %v1138
    %v1140 = vsub.f32 1.0, %v1132
    %1142 = vrot.lane.b32.xlu0 %v1139, 112
    %v1143 = vpop.permute.xlu0 %1142
    %v1145 = vmul.f32 %v1140, %v1143
    %v1146 = vrot.slane %v847, 6
    %v1148 = vmul.f32 %v1132, %v1146
    %v1149 = vadd.f32 %v1145, %v1148
    %1151 = vrot.lane.b32.xlu0 %v1149, 88
    %v1152 = vpop.permute.xlu0 %1151
    %v1154 = vsel %vm56, %v961, %v1152
    %v1156 = vrot.slane %v1154, 4
    %v1157 = vsel %vm257, %v1156, 0
    %1159 = vmatprep.subr.mxu0 0.0
    %1160 = vmatpush1.msra.mxu0 %v246
    %1161 = vmatprep.subr.mxu0 0.0
    %1162 = vmatpush1.msra.mxu0 %v247
    %1163 = vmatprep.subr.mxu0 0.0
    %1164 = vmatpush1.msra.mxu0 %v248
    %1165 = vmatprep.subr.mxu0 0.0
    %1166 = vmatpush1.msra.mxu0 %v249
    %1167 = vmatprep.subr.mxu0 0.0
    %1168 = vmatpush1.msra.mxu0 %v250
    %1169 = vmatprep.subr.mxu0 0.0
    %1170 = vmatpush1.msra.mxu0 0.0
    %1171 = vmatprep.subr.mxu0 0.0
    %1172 = vmatpush1.msra.mxu0 0.0
    %1173 = vmatprep.subr.mxu0 0.0
    %1174 = vmatpush1.msra.mxu0 0.0
    %1175 = vmatprep.subr.mxu0 0.0
    %1176 = vmatpush1.msra.mxu0 0.0
    %1177 = vmatprep.subr.mxu0 0.0
    %1178 = vmatpush1.msra.mxu0 0.0
    %1179 = vmatprep.subr.mxu0 0.0
    %1180 = vmatpush1.msra.mxu0 0.0
    %1181 = vmatprep.subr.mxu0 0.0
    %1182 = vmatpush1.msra.mxu0 0.0
    %1183 = vmatprep.subr.mxu0 0.0
    %1184 = vmatpush1.msra.mxu0 0.0
    %1185 = vmatprep.subr.mxu0 0.0
    %1186 = vmatpush1.msra.mxu0 0.0
    %1187 = vmatprep.subr.mxu0 0.0
    %1188 = vmatpush1.msra.mxu0 0.0
    %1189 = vmatprep.subr.mxu0 0.0
    %1190 = vmatpush1.msra.mxu0 0.0
    %1191 = vmatprep.subr.mxu0 0.0
    %1192 = vmatpush1.msra.mxu0 0.0
    %1193 = vmatprep.subr.mxu0 0.0
    %1194 = vmatpush1.msra.mxu0 0.0
    %1195 = vmatprep.subr.mxu0 0.0
    %1196 = vmatpush1.msra.mxu0 0.0
    %1197 = vmatprep.subr.mxu0 0.0
    %1198 = vmatpush1.msra.mxu0 0.0
    %1199 = vmatprep.subr.mxu0 0.0
    %1200 = vmatpush1.msra.mxu0 0.0
    %1201 = vmatprep.subr.mxu0 0.0
    %1202 = vmatpush1.msra.mxu0 0.0
    %1203 = vmatprep.subr.mxu0 0.0
    %1204 = vmatpush1.msra.mxu0 0.0
    %1205 = vmatprep.subr.mxu0 0.0
    %1206 = vmatpush1.msra.mxu0 0.0
    %1207 = vmatprep.subr.mxu0 0.0
    %1208 = vmatpush1.msra.mxu0 0.0
    %1209 = vmatprep.subr.mxu0 0.0
    %1210 = vmatpush1.msra.mxu0 0.0
    %1211 = vmatprep.subr.mxu0 0.0
    %1212 = vmatpush1.msra.mxu0 0.0
    %1213 = vmatprep.subr.mxu0 0.0
    %1214 = vmatpush1.msra.mxu0 0.0
    %1215 = vmatprep.subr.mxu0 0.0
    %1216 = vmatpush1.msra.mxu0 0.0
    %1217 = vmatprep.subr.mxu0 0.0
    %1218 = vmatpush1.msra.mxu0 0.0
    %1219 = vmatprep.subr.mxu0 0.0
    %1220 = vmatpush1.msra.mxu0 0.0
    %1221 = vmatprep.subr.mxu0 0.0
    %1222 = vmatpush1.msra.mxu0 0.0
    %1223 = vmatprep.mubr.f32.mxu0 0.0
    %1224 = vmatmul.mubr.f32.gmra.mrb[0].mxu0 %v1157
    %v1225 = vpop.f32.mrb[0].mxu0
    %v1226 = vadd.f32 0.0, %v1225
    %v1227 = vpop.f32.mrb[0].mxu0
    %1228 = vdwg.mxu0
    %v1230 = vrot.slane %v1226, 2
    %v1232 = vadd.f32 %v238, %v1230
    %v1233 = vxor.u32 %v1232, 2147483648
    %v1234 = vmul.f32 %v1233, 1.442695
    %v1235 = vpow.pop %v1234
    %v1236 = vadd.f32 %v1235, 1.0
    %v1237 = vrcp.pop %v1236
    %v1238 = vmul.f32 1.0, %v1237
    %1239 = vrot.lane.b32.xlu0 %v1230, 96
    %v1240 = vpop.permute.xlu0 %1239
    %v1242 = vmul.f32 %v1238, %v1240
    %1244 = vrot.lane.b32.xlu0 %v1242, 32
    %v1245 = vpop.permute.xlu0 %1244
    %v1247 = vadd.f32 %v238, %v1245
    %v1248 = vtanh.pop %v1247
    %v1249 = vsub.f32 1.0, %v1238
    %1251 = vrot.lane.b32.xlu0 %v1248, 112
    %v1252 = vpop.permute.xlu0 %1251
    %v1254 = vmul.f32 %v1249, %v1252
    %v1255 = vrot.slane %v956, 6
    %v1257 = vmul.f32 %v1238, %v1255
    %v1258 = vadd.f32 %v1254, %v1257
    %1260 = vrot.lane.b32.xlu0 %v1258, 112
    %v1261 = vpop.permute.xlu0 %1260
    %v1263 = vsel %vm50, %v1261, %v48
    %v1265 = vrot.slane %v1263, 6
    %v1266 = vsel %vm56, %v1265, 0
    %1268 = vmatprep.subr.mxu0 0.0
    %1269 = vmatpush1.msra.mxu0 %v251
    %1270 = vmatprep.subr.mxu0 0.0
    %1271 = vmatpush1.msra.mxu0 %v252
    %1272 = vmatprep.subr.mxu0 0.0
    %1273 = vmatpush1.msra.mxu0 %v253
    %1274 = vmatprep.subr.mxu0 0.0
    %1275 = vmatpush1.msra.mxu0 0.0
    %1276 = vmatprep.subr.mxu0 0.0
    %1277 = vmatpush1.msra.mxu0 0.0
    %1278 = vmatprep.subr.mxu0 0.0
    %1279 = vmatpush1.msra.mxu0 0.0
    %1280 = vmatprep.subr.mxu0 0.0
    %1281 = vmatpush1.msra.mxu0 0.0
    %1282 = vmatprep.subr.mxu0 0.0
    %1283 = vmatpush1.msra.mxu0 0.0
    %1284 = vmatprep.subr.mxu0 0.0
    %1285 = vmatpush1.msra.mxu0 0.0
    %1286 = vmatprep.subr.mxu0 0.0
    %1287 = vmatpush1.msra.mxu0 0.0
    %1288 = vmatprep.subr.mxu0 0.0
    %1289 = vmatpush1.msra.mxu0 0.0
    %1290 = vmatprep.subr.mxu0 0.0
    %1291 = vmatpush1.msra.mxu0 0.0
    %1292 = vmatprep.subr.mxu0 0.0
    %1293 = vmatpush1.msra.mxu0 0.0
    %1294 = vmatprep.subr.mxu0 0.0
    %1295 = vmatpush1.msra.mxu0 0.0
    %1296 = vmatprep.subr.mxu0 0.0
    %1297 = vmatpush1.msra.mxu0 0.0
    %1298 = vmatprep.subr.mxu0 0.0
    %1299 = vmatpush1.msra.mxu0 0.0
    %1300 = vmatprep.subr.mxu0 0.0
    %1301 = vmatpush1.msra.mxu0 0.0
    %1302 = vmatprep.subr.mxu0 0.0
    %1303 = vmatpush1.msra.mxu0 0.0
    %1304 = vmatprep.subr.mxu0 0.0
    %1305 = vmatpush1.msra.mxu0 0.0
    %1306 = vmatprep.subr.mxu0 0.0
    %1307 = vmatpush1.msra.mxu0 0.0
    %1308 = vmatprep.subr.mxu0 0.0
    %1309 = vmatpush1.msra.mxu0 0.0
    %1310 = vmatprep.subr.mxu0 0.0
    %1311 = vmatpush1.msra.mxu0 0.0
    %1312 = vmatprep.subr.mxu0 0.0
    %1313 = vmatpush1.msra.mxu0 0.0
    %1314 = vmatprep.subr.mxu0 0.0
    %1315 = vmatpush1.msra.mxu0 0.0
    %1316 = vmatprep.subr.mxu0 0.0
    %1317 = vmatpush1.msra.mxu0 0.0
    %1318 = vmatprep.subr.mxu0 0.0
    %1319 = vmatpush1.msra.mxu0 0.0
    %1320 = vmatprep.subr.mxu0 0.0
    %1321 = vmatpush1.msra.mxu0 0.0
    %1322 = vmatprep.subr.mxu0 0.0
    %1323 = vmatpush1.msra.mxu0 0.0
    %1324 = vmatprep.subr.mxu0 0.0
    %1325 = vmatpush1.msra.mxu0 0.0
    %1326 = vmatprep.subr.mxu0 0.0
    %1327 = vmatpush1.msra.mxu0 0.0
    %1328 = vmatprep.subr.mxu0 0.0
    %1329 = vmatpush1.msra.mxu0 0.0
    %1330 = vmatprep.subr.mxu0 0.0
    %1331 = vmatpush1.msra.mxu0 0.0
    %1332 = vmatprep.mubr.f32.mxu0 0.0
    %1333 = vmatmul.mubr.f32.gmra.mrb[0].mxu0 %v1266
    %v1334 = vpop.f32.mrb[0].mxu0
    %v1335 = vadd.f32 0.0, %v1334
    %v1336 = vpop.f32.mrb[0].mxu0
    %1337 = vdwg.mxu0
    %v1338 = vmax.f32 %v1335, 0.0
    %1340 = vrot.lane.b32.xlu0 %v1338, 120
    %v1341 = vpop.permute.xlu0 %1340
    %v1343 = vmax.f32 %v1338, %v1341
    %1345 = vrot.lane.b32.xlu0 %v1343, 112
    %v1346 = vpop.permute.xlu0 %1345
    %v1348 = vmax.f32 %v1343, %v1346
    %v1350 = vsel %vm446, %v1348, 0
    %1352 = vmatprep.subr.mxu0 0.0
    %1353 = vmatpush1.msra.mxu0 %v254
    %1354 = vmatprep.subr.mxu0 0.0
    %1355 = vmatpush1.msra.mxu0 0.0
    %1356 = vmatprep.subr.mxu0 0.0
    %1357 = vmatpush1.msra.mxu0 0.0
    %1358 = vmatprep.subr.mxu0 0.0
    %1359 = vmatpush1.msra.mxu0 0.0
    %1360 = vmatprep.subr.mxu0 0.0
    %1361 = vmatpush1.msra.mxu0 0.0
    %1362 = vmatprep.subr.mxu0 0.0
    %1363 = vmatpush1.msra.mxu0 0.0
    %1364 = vmatprep.subr.mxu0 0.0
    %1365 = vmatpush1.msra.mxu0 0.0
    %1366 = vmatprep.subr.mxu0 0.0
    %1367 = vmatpush1.msra.mxu0 0.0
    %1368 = vmatprep.subr.mxu0 0.0
    %1369 = vmatpush1.msra.mxu0 0.0
    %1370 = vmatprep.subr.mxu0 0.0
    %1371 = vmatpush1.msra.mxu0 0.0
    %1372 = vmatprep.subr.mxu0 0.0
    %1373 = vmatpush1.msra.mxu0 0.0
    %1374 = vmatprep.subr.mxu0 0.0
    %1375 = vmatpush1.msra.mxu0 0.0
    %1376 = vmatprep.subr.mxu0 0.0
    %1377 = vmatpush1.msra.mxu0 0.0
    %1378 = vmatprep.subr.mxu0 0.0
    %1379 = vmatpush1.msra.mxu0 0.0
    %1380 = vmatprep.subr.mxu0 0.0
    %1381 = vmatpush1.msra.mxu0 0.0
    %1382 = vmatprep.subr.mxu0 0.0
    %1383 = vmatpush1.msra.mxu0 0.0
    %1384 = vmatprep.subr.mxu0 0.0
    %1385 = vmatpush1.msra.mxu0 0.0
    %1386 = vmatprep.subr.mxu0 0.0
    %1387 = vmatpush1.msra.mxu0 0.0
    %1388 = vmatprep.subr.mxu0 0.0
    %1389 = vmatpush1.msra.mxu0 0.0
    %1390 = vmatprep.subr.mxu0 0.0
    %1391 = vmatpush1.msra.mxu0 0.0
    %1392 = vmatprep.subr.mxu0 0.0
    %1393 = vmatpush1.msra.mxu0 0.0
    %1394 = vmatprep.subr.mxu0 0.0
    %1395 = vmatpush1.msra.mxu0 0.0
    %1396 = vmatprep.subr.mxu0 0.0
    %1397 = vmatpush1.msra.mxu0 0.0
    %1398 = vmatprep.subr.mxu0 0.0
    %1399 = vmatpush1.msra.mxu0 0.0
    %1400 = vmatprep.subr.mxu0 0.0
    %1401 = vmatpush1.msra.mxu0 0.0
    %1402 = vmatprep.subr.mxu0 0.0
    %1403 = vmatpush1.msra.mxu0 0.0
    %1404 = vmatprep.subr.mxu0 0.0
    %1405 = vmatpush1.msra.mxu0 0.0
    %1406 = vmatprep.subr.mxu0 0.0
    %1407 = vmatpush1.msra.mxu0 0.0
    %1408 = vmatprep.subr.mxu0 0.0
    %1409 = vmatpush1.msra.mxu0 0.0
    %1410 = vmatprep.subr.mxu0 0.0
    %1411 = vmatpush1.msra.mxu0 0.0
    %1412 = vmatprep.subr.mxu0 0.0
    %1413 = vmatpush1.msra.mxu0 0.0
    %1414 = vmatprep.subr.mxu0 0.0
    %1415 = vmatpush1.msra.mxu0 0.0
    %1416 = vmatprep.mubr.f32.mxu0 0.0
    %1417 = vmatmul.mubr.f32.gmra.mrb[0].mxu0 %v1350
    %v1418 = vpop.f32.mrb[0].mxu0
    %v1419 = vadd.f32 0.0, %v1418
    %v1420 = vpop.f32.mrb[0].mxu0
    %1421 = vdwg.mxu0
    %v1423 = vrot.slane %v1419, 2
    %1424 = vrot.lane.b32.xlu0 %v1423, 48
    %v1425 = vpop.permute.xlu0 %1424
    %v1427 = vadd.f32 %v238, %v1425
    %v1428 = vadd.f32 %v1427, %v1230
    %v1429 = vxor.u32 %v1428, 2147483648
    %v1430 = vmul.f32 %v1429, 1.442695
    %v1431 = vpow.pop %v1430
    %v1432 = vadd.f32 %v1431, 1.0
    %v1433 = vrcp.pop %v1432
    %v1434 = vmul.f32 1.0, %v1433
    %v1435 = vmul.f32 %v1434, %v1240
    %1437 = vrot.lane.b32.xlu0 %v1435, 32
    %v1438 = vpop.permute.xlu0 %1437
    %v1440 = vadd.f32 %v1427, %v1438
    %v1441 = vtanh.pop %v1440
    %v1442 = vsub.f32 1.0, %v1434
    %1444 = vrot.lane.b32.xlu0 %v1441, 112
    %v1445 = vpop.permute.xlu0 %1444
    %v1447 = vmul.f32 %v1442, %v1445
    %v1448 = vrot.slane %v1149, 6
    %v1450 = vmul.f32 %v1434, %v1448
    %v1451 = vadd.f32 %v1447, %v1450
    %1453 = vrot.lane.b32.xlu0 %v1451, 88
    %v1454 = vpop.permute.xlu0 %1453
    %v1456 = vsel %vm56, %v1263, %v1454
    %v1458 = vrot.slane %v1456, 6
    %v1459 = vsel %vm257, %v1458, 0
    %1461 = vmatprep.subr.mxu0 0.0
    %1462 = vmatpush1.msra.mxu0 %v246
    %1463 = vmatprep.subr.mxu0 0.0
    %1464 = vmatpush1.msra.mxu0 %v247
    %1465 = vmatprep.subr.mxu0 0.0
    %1466 = vmatpush1.msra.mxu0 %v248
    %1467 = vmatprep.subr.mxu0 0.0
    %1468 = vmatpush1.msra.mxu0 %v249
    %1469 = vmatprep.subr.mxu0 0.0
    %1470 = vmatpush1.msra.mxu0 %v250
    %1471 = vmatprep.subr.mxu0 0.0
    %1472 = vmatpush1.msra.mxu0 0.0
    %1473 = vmatprep.subr.mxu0 0.0
    %1474 = vmatpush1.msra.mxu0 0.0
    %1475 = vmatprep.subr.mxu0 0.0
    %1476 = vmatpush1.msra.mxu0 0.0
    %1477 = vmatprep.subr.mxu0 0.0
    %1478 = vmatpush1.msra.mxu0 0.0
    %1479 = vmatprep.subr.mxu0 0.0
    %1480 = vmatpush1.msra.mxu0 0.0
    %1481 = vmatprep.subr.mxu0 0.0
    %1482 = vmatpush1.msra.mxu0 0.0
    %1483 = vmatprep.subr.mxu0 0.0
    %1484 = vmatpush1.msra.mxu0 0.0
    %1485 = vmatprep.subr.mxu0 0.0
    %1486 = vmatpush1.msra.mxu0 0.0
    %1487 = vmatprep.subr.mxu0 0.0
    %1488 = vmatpush1.msra.mxu0 0.0
    %1489 = vmatprep.subr.mxu0 0.0
    %1490 = vmatpush1.msra.mxu0 0.0
    %1491 = vmatprep.subr.mxu0 0.0
    %1492 = vmatpush1.msra.mxu0 0.0
    %1493 = vmatprep.subr.mxu0 0.0
    %1494 = vmatpush1.msra.mxu0 0.0
    %1495 = vmatprep.subr.mxu0 0.0
    %1496 = vmatpush1.msra.mxu0 0.0
    %1497 = vmatprep.subr.mxu0 0.0
    %1498 = vmatpush1.msra.mxu0 0.0
    %1499 = vmatprep.subr.mxu0 0.0
    %1500 = vmatpush1.msra.mxu0 0.0
    %1501 = vmatprep.subr.mxu0 0.0
    %1502 = vmatpush1.msra.mxu0 0.0
    %1503 = vmatprep.subr.mxu0 0.0
    %1504 = vmatpush1.msra.mxu0 0.0
    %1505 = vmatprep.subr.mxu0 0.0
    %1506 = vmatpush1.msra.mxu0 0.0
    %1507 = vmatprep.subr.mxu0 0.0
    %1508 = vmatpush1.msra.mxu0 0.0
    %1509 = vmatprep.subr.mxu0 0.0
    %1510 = vmatpush1.msra.mxu0 0.0
    %1511 = vmatprep.subr.mxu0 0.0
    %1512 = vmatpush1.msra.mxu0 0.0
    %1513 = vmatprep.subr.mxu0 0.0
    %1514 = vmatpush1.msra.mxu0 0.0
    %1515 = vmatprep.subr.mxu0 0.0
    %1516 = vmatpush1.msra.mxu0 0.0
    %1517 = vmatprep.subr.mxu0 0.0
    %1518 = vmatpush1.msra.mxu0 0.0
    %1519 = vmatprep.subr.mxu0 0.0
    %1520 = vmatpush1.msra.mxu0 0.0
    %1521 = vmatprep.subr.mxu0 0.0
    %1522 = vmatpush1.msra.mxu0 0.0
    %1523 = vmatprep.subr.mxu0 0.0
    %1524 = vmatpush1.msra.mxu0 0.0
    %1525 = vmatprep.mubr.f32.mxu0 0.0
    %1526 = vmatmul.mubr.f32.gmra.mrb[0].mxu0 %v1459
    %v1527 = vpop.f32.mrb[0].mxu0
    %v1528 = vadd.f32 0.0, %v1527
    %v1529 = vpop.f32.mrb[0].mxu0
    %1530 = vdwg.mxu0
    %v1531 = vadd.f32 %v243, %v1528
    %v1532 = vxor.u32 %v1531, 2147483648
    %v1533 = vmul.f32 %v1532, 1.442695
    %v1534 = vpow.pop %v1533
    %v1535 = vadd.f32 %v1534, 1.0
    %v1536 = vrcp.pop %v1535
    %v1537 = vmul.f32 1.0, %v1536
    %1539 = vrot.lane.b32.xlu0 %v1528, 96
    %v1540 = vpop.permute.xlu0 %1539
    %v1542 = vmul.f32 %v1537, %v1540
    %1544 = vrot.lane.b32.xlu0 %v1542, 32
    %v1545 = vpop.permute.xlu0 %1544
    %v1547 = vadd.f32 %v243, %v1545
    %v1548 = vtanh.pop %v1547
    %v1549 = vsub.f32 1.0, %v1537
    %1551 = vrot.lane.b32.xlu0 %v1548, 112
    %v1552 = vpop.permute.xlu0 %1551
    %v1554 = vmul.f32 %v1549, %v1552
    %v1555 = vrot.slane %v1258, 6
    %v1557 = vmul.f32 %v1537, %v1555
    %v1558 = vadd.f32 %v1554, %v1557
    %1560 = vrot.lane.b32.xlu0 %v1558, 112
    %v1561 = vpop.permute.xlu0 %1560
    %v1563 = vsel %vm50, %v1561, %v48
    %v1565 = vsel %vm56, %v1563, 0
    %1567 = vmatprep.subr.mxu0 0.0
    %1568 = vmatpush1.msra.mxu0 %v251
    %1569 = vmatprep.subr.mxu0 0.0
    %1570 = vmatpush1.msra.mxu0 %v252
    %1571 = vmatprep.subr.mxu0 0.0
    %1572 = vmatpush1.msra.mxu0 %v253
    %1573 = vmatprep.subr.mxu0 0.0
    %1574 = vmatpush1.msra.mxu0 0.0
    %1575 = vmatprep.subr.mxu0 0.0
    %1576 = vmatpush1.msra.mxu0 0.0
    %1577 = vmatprep.subr.mxu0 0.0
    %1578 = vmatpush1.msra.mxu0 0.0
    %1579 = vmatprep.subr.mxu0 0.0
    %1580 = vmatpush1.msra.mxu0 0.0
    %1581 = vmatprep.subr.mxu0 0.0
    %1582 = vmatpush1.msra.mxu0 0.0
    %1583 = vmatprep.subr.mxu0 0.0
    %1584 = vmatpush1.msra.mxu0 0.0
    %1585 = vmatprep.subr.mxu0 0.0
    %1586 = vmatpush1.msra.mxu0 0.0
    %1587 = vmatprep.subr.mxu0 0.0
    %1588 = vmatpush1.msra.mxu0 0.0
    %1589 = vmatprep.subr.mxu0 0.0
    %1590 = vmatpush1.msra.mxu0 0.0
    %1591 = vmatprep.subr.mxu0 0.0
    %1592 = vmatpush1.msra.mxu0 0.0
    %1593 = vmatprep.subr.mxu0 0.0
    %1594 = vmatpush1.msra.mxu0 0.0
    %1595 = vmatprep.subr.mxu0 0.0
    %1596 = vmatpush1.msra.mxu0 0.0
    %1597 = vmatprep.subr.mxu0 0.0
    %1598 = vmatpush1.msra.mxu0 0.0
    %1599 = vmatprep.subr.mxu0 0.0
    %1600 = vmatpush1.msra.mxu0 0.0
    %1601 = vmatprep.subr.mxu0 0.0
    %1602 = vmatpush1.msra.mxu0 0.0
    %1603 = vmatprep.subr.mxu0 0.0
    %1604 = vmatpush1.msra.mxu0 0.0
    %1605 = vmatprep.subr.mxu0 0.0
    %1606 = vmatpush1.msra.mxu0 0.0
    %1607 = vmatprep.subr.mxu0 0.0
    %1608 = vmatpush1.msra.mxu0 0.0
    %1609 = vmatprep.subr.mxu0 0.0
    %1610 = vmatpush1.msra.mxu0 0.0
    %1611 = vmatprep.subr.mxu0 0.0
    %1612 = vmatpush1.msra.mxu0 0.0
    %1613 = vmatprep.subr.mxu0 0.0
    %1614 = vmatpush1.msra.mxu0 0.0
    %1615 = vmatprep.subr.mxu0 0.0
    %1616 = vmatpush1.msra.mxu0 0.0
    %1617 = vmatprep.subr.mxu0 0.0
    %1618 = vmatpush1.msra.mxu0 0.0
    %1619 = vmatprep.subr.mxu0 0.0
    %1620 = vmatpush1.msra.mxu0 0.0
    %1621 = vmatprep.subr.mxu0 0.0
    %1622 = vmatpush1.msra.mxu0 0.0
    %1623 = vmatprep.subr.mxu0 0.0
    %1624 = vmatpush1.msra.mxu0 0.0
    %1625 = vmatprep.subr.mxu0 0.0
    %1626 = vmatpush1.msra.mxu0 0.0
    %1627 = vmatprep.subr.mxu0 0.0
    %1628 = vmatpush1.msra.mxu0 0.0
    %1629 = vmatprep.subr.mxu0 0.0
    %1630 = vmatpush1.msra.mxu0 0.0
    %1631 = vmatprep.mubr.f32.mxu0 0.0
    %1632 = vmatmul.mubr.f32.gmra.mrb[0].mxu0 %v1565
    %v1633 = vpop.f32.mrb[0].mxu0
    %v1634 = vadd.f32 0.0, %v1633
    %v1635 = vpop.f32.mrb[0].mxu0
    %1636 = vdwg.mxu0
    %v1637 = vmax.f32 %v1634, 0.0
    %1639 = vrot.lane.b32.xlu0 %v1637, 120
    %v1640 = vpop.permute.xlu0 %1639
    %v1642 = vmax.f32 %v1637, %v1640
    %1644 = vrot.lane.b32.xlu0 %v1642, 112
    %v1645 = vpop.permute.xlu0 %1644
    %v1647 = vmax.f32 %v1642, %v1645
    %v1649 = vsel %vm446, %v1647, 0
    %1651 = vmatprep.subr.mxu0 0.0
    %1652 = vmatpush1.msra.mxu0 %v254
    %1653 = vmatprep.subr.mxu0 0.0
    %1654 = vmatpush1.msra.mxu0 0.0
    %1655 = vmatprep.subr.mxu0 0.0
    %1656 = vmatpush1.msra.mxu0 0.0
    %1657 = vmatprep.subr.mxu0 0.0
    %1658 = vmatpush1.msra.mxu0 0.0
    %1659 = vmatprep.subr.mxu0 0.0
    %1660 = vmatpush1.msra.mxu0 0.0
    %1661 = vmatprep.subr.mxu0 0.0
    %1662 = vmatpush1.msra.mxu0 0.0
    %1663 = vmatprep.subr.mxu0 0.0
    %1664 = vmatpush1.msra.mxu0 0.0
    %1665 = vmatprep.subr.mxu0 0.0
    %1666 = vmatpush1.msra.mxu0 0.0
    %1667 = vmatprep.subr.mxu0 0.0
    %1668 = vmatpush1.msra.mxu0 0.0
    %1669 = vmatprep.subr.mxu0 0.0
    %1670 = vmatpush1.msra.mxu0 0.0
    %1671 = vmatprep.subr.mxu0 0.0
    %1672 = vmatpush1.msra.mxu0 0.0
    %1673 = vmatprep.subr.mxu0 0.0
    %1674 = vmatpush1.msra.mxu0 0.0
    %1675 = vmatprep.subr.mxu0 0.0
    %1676 = vmatpush1.msra.mxu0 0.0
    %1677 = vmatprep.subr.mxu0 0.0
    %1678 = vmatpush1.msra.mxu0 0.0
    %1679 = vmatprep.subr.mxu0 0.0
    %1680 = vmatpush1.msra.mxu0 0.0
    %1681 = vmatprep.subr.mxu0 0.0
    %1682 = vmatpush1.msra.mxu0 0.0
    %1683 = vmatprep.subr.mxu0 0.0
    %1684 = vmatpush1.msra.mxu0 0.0
    %1685 = vmatprep.subr.mxu0 0.0
    %1686 = vmatpush1.msra.mxu0 0.0
    %1687 = vmatprep.subr.mxu0 0.0
    %1688 = vmatpush1.msra.mxu0 0.0
    %1689 = vmatprep.subr.mxu0 0.0
    %1690 = vmatpush1.msra.mxu0 0.0
    %1691 = vmatprep.subr.mxu0 0.0
    %1692 = vmatpush1.msra.mxu0 0.0
    %1693 = vmatprep.subr.mxu0 0.0
    %1694 = vmatpush1.msra.mxu0 0.0
    %1695 = vmatprep.subr.mxu0 0.0
    %1696 = vmatpush1.msra.mxu0 0.0
    %1697 = vmatprep.subr.mxu0 0.0
    %1698 = vmatpush1.msra.mxu0 0.0
    %1699 = vmatprep.subr.mxu0 0.0
    %1700 = vmatpush1.msra.mxu0 0.0
    %1701 = vmatprep.subr.mxu0 0.0
    %1702 = vmatpush1.msra.mxu0 0.0
    %1703 = vmatprep.subr.mxu0 0.0
    %1704 = vmatpush1.msra.mxu0 0.0
    %1705 = vmatprep.subr.mxu0 0.0
    %1706 = vmatpush1.msra.mxu0 0.0
    %1707 = vmatprep.subr.mxu0 0.0
    %1708 = vmatpush1.msra.mxu0 0.0
    %1709 = vmatprep.subr.mxu0 0.0
    %1710 = vmatpush1.msra.mxu0 0.0
    %1711 = vmatprep.subr.mxu0 0.0
    %1712 = vmatpush1.msra.mxu0 0.0
    %1713 = vmatprep.subr.mxu0 0.0
    %1714 = vmatpush1.msra.mxu0 0.0
    %1715 = vmatprep.mubr.f32.mxu0 0.0
    %1716 = vmatmul.mubr.f32.gmra.mrb[0].mxu0 %v1649
    %v1717 = vpop.f32.mrb[0].mxu0
    %v1718 = vadd.f32 0.0, %v1717
    %v1719 = vpop.f32.mrb[0].mxu0
    %1720 = vdwg.mxu0
    %1722 = vrot.lane.b32.xlu0 %v1718, 48
    %v1723 = vpop.permute.xlu0 %1722
    %v1725 = vadd.f32 %v243, %v1723
    %v1726 = vadd.f32 %v1725, %v1528
    %v1727 = vxor.u32 %v1726, 2147483648
    %v1728 = vmul.f32 %v1727, 1.442695
    %v1729 = vpow.pop %v1728
    %v1730 = vadd.f32 %v1729, 1.0
    %v1731 = vrcp.pop %v1730
    %v1732 = vmul.f32 1.0, %v1731
    %v1733 = vmul.f32 %v1732, %v1540
    %1735 = vrot.lane.b32.xlu0 %v1733, 32
    %v1736 = vpop.permute.xlu0 %1735
    %v1738 = vadd.f32 %v1725, %v1736
    %v1739 = vtanh.pop %v1738
    %v1740 = vsub.f32 1.0, %v1732
    %1742 = vrot.lane.b32.xlu0 %v1739, 112
    %v1743 = vpop.permute.xlu0 %1742
    %v1745 = vmul.f32 %v1740, %v1743
    %v1746 = vrot.slane %v1451, 6
    %v1748 = vmul.f32 %v1732, %v1746
    %v1749 = vadd.f32 %v1745, %v1748
    %1751 = vrot.lane.b32.xlu0 %v1749, 88
    %v1752 = vpop.permute.xlu0 %1751
    %v1754 = vsel %vm56, %v1563, %v1752
    %v1756 = vsel %vm257, %v1754, 0
    %1758 = vmatprep.subr.mxu0 0.0
    %1759 = vmatpush1.msra.mxu0 %v246
    %1760 = vmatprep.subr.mxu0 0.0
    %1761 = vmatpush1.msra.mxu0 %v247
    %1762 = vmatprep.subr.mxu0 0.0
    %1763 = vmatpush1.msra.mxu0 %v248
    %1764 = vmatprep.subr.mxu0 0.0
    %1765 = vmatpush1.msra.mxu0 %v249
    %1766 = vmatprep.subr.mxu0 0.0
    %1767 = vmatpush1.msra.mxu0 %v250
    %1768 = vmatprep.subr.mxu0 0.0
    %1769 = vmatpush1.msra.mxu0 0.0
    %1770 = vmatprep.subr.mxu0 0.0
    %1771 = vmatpush1.msra.mxu0 0.0
    %1772 = vmatprep.subr.mxu0 0.0
    %1773 = vmatpush1.msra.mxu0 0.0
    %1774 = vmatprep.subr.mxu0 0.0
    %1775 = vmatpush1.msra.mxu0 0.0
    %1776 = vmatprep.subr.mxu0 0.0
    %1777 = vmatpush1.msra.mxu0 0.0
    %1778 = vmatprep.subr.mxu0 0.0
    %1779 = vmatpush1.msra.mxu0 0.0
    %1780 = vmatprep.subr.mxu0 0.0
    %1781 = vmatpush1.msra.mxu0 0.0
    %1782 = vmatprep.subr.mxu0 0.0
    %1783 = vmatpush1.msra.mxu0 0.0
    %1784 = vmatprep.subr.mxu0 0.0
    %1785 = vmatpush1.msra.mxu0 0.0
    %1786 = vmatprep.subr.mxu0 0.0
    %1787 = vmatpush1.msra.mxu0 0.0
    %1788 = vmatprep.subr.mxu0 0.0
    %1789 = vmatpush1.msra.mxu0 0.0
    %1790 = vmatprep.subr.mxu0 0.0
    %1791 = vmatpush1.msra.mxu0 0.0
    %1792 = vmatprep.subr.mxu0 0.0
    %1793 = vmatpush1.msra.mxu0 0.0
    %1794 = vmatprep.subr.mxu0 0.0
    %1795 = vmatpush1.msra.mxu0 0.0
    %1796 = vmatprep.subr.mxu0 0.0
    %1797 = vmatpush1.msra.mxu0 0.0
    %1798 = vmatprep.subr.mxu0 0.0
    %1799 = vmatpush1.msra.mxu0 0.0
    %1800 = vmatprep.subr.mxu0 0.0
    %1801 = vmatpush1.msra.mxu0 0.0
    %1802 = vmatprep.subr.mxu0 0.0
    %1803 = vmatpush1.msra.mxu0 0.0
    %1804 = vmatprep.subr.mxu0 0.0
    %1805 = vmatpush1.msra.mxu0 0.0
    %1806 = vmatprep.subr.mxu0 0.0
    %1807 = vmatpush1.msra.mxu0 0.0
    %1808 = vmatprep.subr.mxu0 0.0
    %1809 = vmatpush1.msra.mxu0 0.0
    %1810 = vmatprep.subr.mxu0 0.0
    %1811 = vmatpush1.msra.mxu0 0.0
    %1812 = vmatprep.subr.mxu0 0.0
    %1813 = vmatpush1.msra.mxu0 0.0
    %1814 = vmatprep.subr.mxu0 0.0
    %1815 = vmatpush1.msra.mxu0 0.0
    %1816 = vmatprep.subr.mxu0 0.0
    %1817 = vmatpush1.msra.mxu0 0.0
    %1818 = vmatprep.subr.mxu0 0.0
    %1819 = vmatpush1.msra.mxu0 0.0
    %1820 = vmatprep.subr.mxu0 0.0
    %1821 = vmatpush1.msra.mxu0 0.0
    %1822 = vmatprep.mubr.f32.mxu0 0.0
    %1823 = vmatmul.mubr.f32.gmra.mrb[0].mxu0 %v1756
    %v1824 = vpop.f32.mrb[0].mxu0
    %v1825 = vadd.f32 0.0, %v1824
    %v1826 = vpop.f32.mrb[0].mxu0
    %1827 = vdwg.mxu0
    %v1829 = vrot.slane %v1825, 6
    %v1831 = vadd.f32 %v243, %v1829
    %v1832 = vxor.u32 %v1831, 2147483648
    %v1833 = vmul.f32 %v1832, 1.442695
    %v1834 = vpow.pop %v1833
    %v1835 = vadd.f32 %v1834, 1.0
    %v1836 = vrcp.pop %v1835
    %v1837 = vmul.f32 1.0, %v1836
    %1838 = vrot.lane.b32.xlu0 %v1829, 96
    %v1839 = vpop.permute.xlu0 %1838
    %v1841 = vmul.f32 %v1837, %v1839
    %1843 = vrot.lane.b32.xlu0 %v1841, 32
    %v1844 = vpop.permute.xlu0 %1843
    %v1846 = vadd.f32 %v243, %v1844
    %v1847 = vtanh.pop %v1846
    %v1848 = vsub.f32 1.0, %v1837
    %1850 = vrot.lane.b32.xlu0 %v1847, 112
    %v1851 = vpop.permute.xlu0 %1850
    %v1853 = vmul.f32 %v1848, %v1851
    %v1854 = vrot.slane %v1558, 6
    %v1856 = vmul.f32 %v1837, %v1854
    %v1857 = vadd.f32 %v1853, %v1856
    %1859 = vrot.lane.b32.xlu0 %v1857, 112
    %v1860 = vpop.permute.xlu0 %1859
    %v1862 = vsel %vm50, %v1860, %v48
    %v1864 = vrot.slane %v1862, 2
    %v1865 = vsel %vm56, %v1864, 0
    %1867 = vmatprep.subr.mxu0 0.0
    %1868 = vmatpush1.msra.mxu0 %v251
    %1869 = vmatprep.subr.mxu0 0.0
    %1870 = vmatpush1.msra.mxu0 %v252
    %1871 = vmatprep.subr.mxu0 0.0
    %1872 = vmatpush1.msra.mxu0 %v253
    %1873 = vmatprep.subr.mxu0 0.0
    %1874 = vmatpush1.msra.mxu0 0.0
    %1875 = vmatprep.subr.mxu0 0.0
    %1876 = vmatpush1.msra.mxu0 0.0
    %1877 = vmatprep.subr.mxu0 0.0
    %1878 = vmatpush1.msra.mxu0 0.0
    %1879 = vmatprep.subr.mxu0 0.0
    %1880 = vmatpush1.msra.mxu0 0.0
    %1881 = vmatprep.subr.mxu0 0.0
    %1882 = vmatpush1.msra.mxu0 0.0
    %1883 = vmatprep.subr.mxu0 0.0
    %1884 = vmatpush1.msra.mxu0 0.0
    %1885 = vmatprep.subr.mxu0 0.0
    %1886 = vmatpush1.msra.mxu0 0.0
    %1887 = vmatprep.subr.mxu0 0.0
    %1888 = vmatpush1.msra.mxu0 0.0
    %1889 = vmatprep.subr.mxu0 0.0
    %1890 = vmatpush1.msra.mxu0 0.0
    %1891 = vmatprep.subr.mxu0 0.0
    %1892 = vmatpush1.msra.mxu0 0.0
    %1893 = vmatprep.subr.mxu0 0.0
    %1894 = vmatpush1.msra.mxu0 0.0
    %1895 = vmatprep.subr.mxu0 0.0
    %1896 = vmatpush1.msra.mxu0 0.0
    %1897 = vmatprep.subr.mxu0 0.0
    %1898 = vmatpush1.msra.mxu0 0.0
    %1899 = vmatprep.subr.mxu0 0.0
    %1900 = vmatpush1.msra.mxu0 0.0
    %1901 = vmatprep.subr.mxu0 0.0
    %1902 = vmatpush1.msra.mxu0 0.0
    %1903 = vmatprep.subr.mxu0 0.0
    %1904 = vmatpush1.msra.mxu0 0.0
    %1905 = vmatprep.subr.mxu0 0.0
    %1906 = vmatpush1.msra.mxu0 0.0
    %1907 = vmatprep.subr.mxu0 0.0
    %1908 = vmatpush1.msra.mxu0 0.0
    %1909 = vmatprep.subr.mxu0 0.0
    %1910 = vmatpush1.msra.mxu0 0.0
    %1911 = vmatprep.subr.mxu0 0.0
    %1912 = vmatpush1.msra.mxu0 0.0
    %1913 = vmatprep.subr.mxu0 0.0
    %1914 = vmatpush1.msra.mxu0 0.0
    %1915 = vmatprep.subr.mxu0 0.0
    %1916 = vmatpush1.msra.mxu0 0.0
    %1917 = vmatprep.subr.mxu0 0.0
    %1918 = vmatpush1.msra.mxu0 0.0
    %1919 = vmatprep.subr.mxu0 0.0
    %1920 = vmatpush1.msra.mxu0 0.0
    %1921 = vmatprep.subr.mxu0 0.0
    %1922 = vmatpush1.msra.mxu0 0.0
    %1923 = vmatprep.subr.mxu0 0.0
    %1924 = vmatpush1.msra.mxu0 0.0
    %1925 = vmatprep.subr.mxu0 0.0
    %1926 = vmatpush1.msra.mxu0 0.0
    %1927 = vmatprep.subr.mxu0 0.0
    %1928 = vmatpush1.msra.mxu0 0.0
    %1929 = vmatprep.subr.mxu0 0.0
    %1930 = vmatpush1.msra.mxu0 0.0
    %1931 = vmatprep.mubr.f32.mxu0 0.0
    %1932 = vmatmul.mubr.f32.gmra.mrb[0].mxu0 %v1865
    %v1933 = vpop.f32.mrb[0].mxu0
    %v1934 = vadd.f32 0.0, %v1933
    %v1935 = vpop.f32.mrb[0].mxu0
    %1936 = vdwg.mxu0
    %v1937 = vmax.f32 %v1934, 0.0
    %1939 = vrot.lane.b32.xlu0 %v1937, 120
    %v1940 = vpop.permute.xlu0 %1939
    %v1942 = vmax.f32 %v1937, %v1940
    %1944 = vrot.lane.b32.xlu0 %v1942, 112
    %v1945 = vpop.permute.xlu0 %1944
    %v1947 = vmax.f32 %v1942, %v1945
    %v1949 = vsel %vm446, %v1947, 0
    %1951 = vmatprep.subr.mxu0 0.0
    %1952 = vmatpush1.msra.mxu0 %v254
    %1953 = vmatprep.subr.mxu0 0.0
    %1954 = vmatpush1.msra.mxu0 0.0
    %1955 = vmatprep.subr.mxu0 0.0
    %1956 = vmatpush1.msra.mxu0 0.0
    %1957 = vmatprep.subr.mxu0 0.0
    %1958 = vmatpush1.msra.mxu0 0.0
    %1959 = vmatprep.subr.mxu0 0.0
    %1960 = vmatpush1.msra.mxu0 0.0
    %1961 = vmatprep.subr.mxu0 0.0
    %1962 = vmatpush1.msra.mxu0 0.0
    %1963 = vmatprep.subr.mxu0 0.0
    %1964 = vmatpush1.msra.mxu0 0.0
    %1965 = vmatprep.subr.mxu0 0.0
    %1966 = vmatpush1.msra.mxu0 0.0
    %1967 = vmatprep.subr.mxu0 0.0
    %1968 = vmatpush1.msra.mxu0 0.0
    %1969 = vmatprep.subr.mxu0 0.0
    %1970 = vmatpush1.msra.mxu0 0.0
    %1971 = vmatprep.subr.mxu0 0.0
    %1972 = vmatpush1.msra.mxu0 0.0
    %1973 = vmatprep.subr.mxu0 0.0
    %1974 = vmatpush1.msra.mxu0 0.0
    %1975 = vmatprep.subr.mxu0 0.0
    %1976 = vmatpush1.msra.mxu0 0.0
    %1977 = vmatprep.subr.mxu0 0.0
    %1978 = vmatpush1.msra.mxu0 0.0
    %1979 = vmatprep.subr.mxu0 0.0
    %1980 = vmatpush1.msra.mxu0 0.0
    %1981 = vmatprep.subr.mxu0 0.0
    %1982 = vmatpush1.msra.mxu0 0.0
    %1983 = vmatprep.subr.mxu0 0.0
    %1984 = vmatpush1.msra.mxu0 0.0
    %1985 = vmatprep.subr.mxu0 0.0
    %1986 = vmatpush1.msra.mxu0 0.0
    %1987 = vmatprep.subr.mxu0 0.0
    %1988 = vmatpush1.msra.mxu0 0.0
    %1989 = vmatprep.subr.mxu0 0.0
    %1990 = vmatpush1.msra.mxu0 0.0
    %1991 = vmatprep.subr.mxu0 0.0
    %1992 = vmatpush1.msra.mxu0 0.0
    %1993 = vmatprep.subr.mxu0 0.0
    %1994 = vmatpush1.msra.mxu0 0.0
    %1995 = vmatprep.subr.mxu0 0.0
    %1996 = vmatpush1.msra.mxu0 0.0
    %1997 = vmatprep.subr.mxu0 0.0
    %1998 = vmatpush1.msra.mxu0 0.0
    %1999 = vmatprep.subr.mxu0 0.0
    %2000 = vmatpush1.msra.mxu0 0.0
    %2001 = vmatprep.subr.mxu0 0.0
    %2002 = vmatpush1.msra.mxu0 0.0
    %2003 = vmatprep.subr.mxu0 0.0
    %2004 = vmatpush1.msra.mxu0 0.0
    %2005 = vmatprep.subr.mxu0 0.0
    %2006 = vmatpush1.msra.mxu0 0.0
    %2007 = vmatprep.subr.mxu0 0.0
    %2008 = vmatpush1.msra.mxu0 0.0
    %2009 = vmatprep.subr.mxu0 0.0
    %2010 = vmatpush1.msra.mxu0 0.0
    %2011 = vmatprep.subr.mxu0 0.0
    %2012 = vmatpush1.msra.mxu0 0.0
    %2013 = vmatprep.subr.mxu0 0.0
    %2014 = vmatpush1.msra.mxu0 0.0
    %2015 = vmatprep.mubr.f32.mxu0 0.0
    %2016 = vmatmul.mubr.f32.gmra.mrb[0].mxu0 %v1949
    %v2017 = vpop.f32.mrb[0].mxu0
    %v2018 = vadd.f32 0.0, %v2017
    %v2019 = vpop.f32.mrb[0].mxu0
    %2020 = vdwg.mxu0
    %v2022 = vrot.slane %v2018, 6
    %2023 = vrot.lane.b32.xlu0 %v2022, 48
    %v2024 = vpop.permute.xlu0 %2023
    %v2026 = vadd.f32 %v243, %v2024
    %v2027 = vadd.f32 %v2026, %v1829
    %v2028 = vxor.u32 %v2027, 2147483648
    %v2029 = vmul.f32 %v2028, 1.442695
    %v2030 = vpow.pop %v2029
    %v2031 = vadd.f32 %v2030, 1.0
    %v2032 = vrcp.pop %v2031
    %v2033 = vmul.f32 1.0, %v2032
    %v2034 = vmul.f32 %v2033, %v1839
    %2036 = vrot.lane.b32.xlu0 %v2034, 32
    %v2037 = vpop.permute.xlu0 %2036
    %v2039 = vadd.f32 %v2026, %v2037
    %v2040 = vtanh.pop %v2039
    %v2041 = vsub.f32 1.0, %v2033
    %2043 = vrot.lane.b32.xlu0 %v2040, 112
    %v2044 = vpop.permute.xlu0 %2043
    %v2046 = vmul.f32 %v2041, %v2044
    %v2047 = vrot.slane %v1749, 6
    %v2049 = vmul.f32 %v2033, %v2047
    %v2050 = vadd.f32 %v2046, %v2049
    %2052 = vrot.lane.b32.xlu0 %v2050, 88
    %v2053 = vpop.permute.xlu0 %2052
    %v2055 = vsel %vm56, %v1862, %v2053
    %v2057 = vrot.slane %v2055, 2
    %v2058 = vsel %vm257, %v2057, 0
    %2060 = vmatprep.subr.mxu0 0.0
    %2061 = vmatpush1.msra.mxu0 %v246
    %2062 = vmatprep.subr.mxu0 0.0
    %2063 = vmatpush1.msra.mxu0 %v247
    %2064 = vmatprep.subr.mxu0 0.0
    %2065 = vmatpush1.msra.mxu0 %v248
    %2066 = vmatprep.subr.mxu0 0.0
    %2067 = vmatpush1.msra.mxu0 %v249
    %2068 = vmatprep.subr.mxu0 0.0
    %2069 = vmatpush1.msra.mxu0 %v250
    %2070 = vmatprep.subr.mxu0 0.0
    %2071 = vmatpush1.msra.mxu0 0.0
    %2072 = vmatprep.subr.mxu0 0.0
    %2073 = vmatpush1.msra.mxu0 0.0
    %2074 = vmatprep.subr.mxu0 0.0
    %2075 = vmatpush1.msra.mxu0 0.0
    %2076 = vmatprep.subr.mxu0 0.0
    %2077 = vmatpush1.msra.mxu0 0.0
    %2078 = vmatprep.subr.mxu0 0.0
    %2079 = vmatpush1.msra.mxu0 0.0
    %2080 = vmatprep.subr.mxu0 0.0
    %2081 = vmatpush1.msra.mxu0 0.0
    %2082 = vmatprep.subr.mxu0 0.0
    %2083 = vmatpush1.msra.mxu0 0.0
    %2084 = vmatprep.subr.mxu0 0.0
    %2085 = vmatpush1.msra.mxu0 0.0
    %2086 = vmatprep.subr.mxu0 0.0
    %2087 = vmatpush1.msra.mxu0 0.0
    %2088 = vmatprep.subr.mxu0 0.0
    %2089 = vmatpush1.msra.mxu0 0.0
    %2090 = vmatprep.subr.mxu0 0.0
    %2091 = vmatpush1.msra.mxu0 0.0
    %2092 = vmatprep.subr.mxu0 0.0
    %2093 = vmatpush1.msra.mxu0 0.0
    %2094 = vmatprep.subr.mxu0 0.0
    %2095 = vmatpush1.msra.mxu0 0.0
    %2096 = vmatprep.subr.mxu0 0.0
    %2097 = vmatpush1.msra.mxu0 0.0
    %2098 = vmatprep.subr.mxu0 0.0
    %2099 = vmatpush1.msra.mxu0 0.0
    %2100 = vmatprep.subr.mxu0 0.0
    %2101 = vmatpush1.msra.mxu0 0.0
    %2102 = vmatprep.subr.mxu0 0.0
    %2103 = vmatpush1.msra.mxu0 0.0
    %2104 = vmatprep.subr.mxu0 0.0
    %2105 = vmatpush1.msra.mxu0 0.0
    %2106 = vmatprep.subr.mxu0 0.0
    %2107 = vmatpush1.msra.mxu0 0.0
    %2108 = vmatprep.subr.mxu0 0.0
    %2109 = vmatpush1.msra.mxu0 0.0
    %2110 = vmatprep.subr.mxu0 0.0
    %2111 = vmatpush1.msra.mxu0 0.0
    %2112 = vmatprep.subr.mxu0 0.0
    %2113 = vmatpush1.msra.mxu0 0.0
    %2114 = vmatprep.subr.mxu0 0.0
    %2115 = vmatpush1.msra.mxu0 0.0
    %2116 = vmatprep.subr.mxu0 0.0
    %2117 = vmatpush1.msra.mxu0 0.0
    %2118 = vmatprep.subr.mxu0 0.0
    %2119 = vmatpush1.msra.mxu0 0.0
    %2120 = vmatprep.subr.mxu0 0.0
    %2121 = vmatpush1.msra.mxu0 0.0
    %2122 = vmatprep.subr.mxu0 0.0
    %2123 = vmatpush1.msra.mxu0 0.0
    %2124 = vmatprep.mubr.f32.mxu0 0.0
    %2125 = vmatmul.mubr.f32.gmra.mrb[0].mxu0 %v2058
    %v2126 = vpop.f32.mrb[0].mxu0
    %v2127 = vadd.f32 0.0, %v2126
    %v2128 = vpop.f32.mrb[0].mxu0
    %2129 = vdwg.mxu0
    %v2131 = vrot.slane %v2127, 4
    %v2133 = vadd.f32 %v243, %v2131
    %v2134 = vxor.u32 %v2133, 2147483648
    %v2135 = vmul.f32 %v2134, 1.442695
    %v2136 = vpow.pop %v2135
    %v2137 = vadd.f32 %v2136, 1.0
    %v2138 = vrcp.pop %v2137
    %v2139 = vmul.f32 1.0, %v2138
    %2140 = vrot.lane.b32.xlu0 %v2131, 96
    %v2141 = vpop.permute.xlu0 %2140
    %v2143 = vmul.f32 %v2139, %v2141
    %2145 = vrot.lane.b32.xlu0 %v2143, 32
    %v2146 = vpop.permute.xlu0 %2145
    %v2148 = vadd.f32 %v243, %v2146
    %v2149 = vtanh.pop %v2148
    %v2150 = vsub.f32 1.0, %v2139
    %2152 = vrot.lane.b32.xlu0 %v2149, 112
    %v2153 = vpop.permute.xlu0 %2152
    %v2155 = vmul.f32 %v2150, %v2153
    %v2156 = vrot.slane %v1857, 6
    %v2158 = vmul.f32 %v2139, %v2156
    %v2159 = vadd.f32 %v2155, %v2158
    %2161 = vrot.lane.b32.xlu0 %v2159, 112
    %v2162 = vpop.permute.xlu0 %2161
    %v2164 = vsel %vm50, %v2162, %v48
    %v2166 = vrot.slane %v2164, 4
    %v2167 = vsel %vm56, %v2166, 0
    %2169 = vmatprep.subr.mxu0 0.0
    %2170 = vmatpush1.msra.mxu0 %v251
    %2171 = vmatprep.subr.mxu0 0.0
    %2172 = vmatpush1.msra.mxu0 %v252
    %2173 = vmatprep.subr.mxu0 0.0
    %2174 = vmatpush1.msra.mxu0 %v253
    %2175 = vmatprep.subr.mxu0 0.0
    %2176 = vmatpush1.msra.mxu0 0.0
    %2177 = vmatprep.subr.mxu0 0.0
    %2178 = vmatpush1.msra.mxu0 0.0
    %2179 = vmatprep.subr.mxu0 0.0
    %2180 = vmatpush1.msra.mxu0 0.0
    %2181 = vmatprep.subr.mxu0 0.0
    %2182 = vmatpush1.msra.mxu0 0.0
    %2183 = vmatprep.subr.mxu0 0.0
    %2184 = vmatpush1.msra.mxu0 0.0
    %2185 = vmatprep.subr.mxu0 0.0
    %2186 = vmatpush1.msra.mxu0 0.0
    %2187 = vmatprep.subr.mxu0 0.0
    %2188 = vmatpush1.msra.mxu0 0.0
    %2189 = vmatprep.subr.mxu0 0.0
    %2190 = vmatpush1.msra.mxu0 0.0
    %2191 = vmatprep.subr.mxu0 0.0
    %2192 = vmatpush1.msra.mxu0 0.0
    %2193 = vmatprep.subr.mxu0 0.0
    %2194 = vmatpush1.msra.mxu0 0.0
    %2195 = vmatprep.subr.mxu0 0.0
    %2196 = vmatpush1.msra.mxu0 0.0
    %2197 = vmatprep.subr.mxu0 0.0
    %2198 = vmatpush1.msra.mxu0 0.0
    %2199 = vmatprep.subr.mxu0 0.0
    %2200 = vmatpush1.msra.mxu0 0.0
    %2201 = vmatprep.subr.mxu0 0.0
    %2202 = vmatpush1.msra.mxu0 0.0
    %2203 = vmatprep.subr.mxu0 0.0
    %2204 = vmatpush1.msra.mxu0 0.0
    %2205 = vmatprep.subr.mxu0 0.0
    %2206 = vmatpush1.msra.mxu0 0.0
    %2207 = vmatprep.subr.mxu0 0.0
    %2208 = vmatpush1.msra.mxu0 0.0
    %2209 = vmatprep.subr.mxu0 0.0
    %2210 = vmatpush1.msra.mxu0 0.0
    %2211 = vmatprep.subr.mxu0 0.0
    %2212 = vmatpush1.msra.mxu0 0.0
    %2213 = vmatprep.subr.mxu0 0.0
    %2214 = vmatpush1.msra.mxu0 0.0
    %2215 = vmatprep.subr.mxu0 0.0
    %2216 = vmatpush1.msra.mxu0 0.0
    %2217 = vmatprep.subr.mxu0 0.0
    %2218 = vmatpush1.msra.mxu0 0.0
    %2219 = vmatprep.subr.mxu0 0.0
    %2220 = vmatpush1.msra.mxu0 0.0
    %2221 = vmatprep.subr.mxu0 0.0
    %2222 = vmatpush1.msra.mxu0 0.0
    %2223 = vmatprep.subr.mxu0 0.0
    %2224 = vmatpush1.msra.mxu0 0.0
    %2225 = vmatprep.subr.mxu0 0.0
    %2226 = vmatpush1.msra.mxu0 0.0
    %2227 = vmatprep.subr.mxu0 0.0
    %2228 = vmatpush1.msra.mxu0 0.0
    %2229 = vmatprep.subr.mxu0 0.0
    %2230 = vmatpush1.msra.mxu0 0.0
    %2231 = vmatprep.subr.mxu0 0.0
    %2232 = vmatpush1.msra.mxu0 0.0
    %2233 = vmatprep.mubr.f32.mxu0 0.0
    %2234 = vmatmul.mubr.f32.gmra.mrb[0].mxu0 %v2167
    %v2235 = vpop.f32.mrb[0].mxu0
    %v2236 = vadd.f32 0.0, %v2235
    %v2237 = vpop.f32.mrb[0].mxu0
    %2238 = vdwg.mxu0
    %v2239 = vmax.f32 %v2236, 0.0
    %2241 = vrot.lane.b32.xlu0 %v2239, 120
    %v2242 = vpop.permute.xlu0 %2241
    %v2244 = vmax.f32 %v2239, %v2242
    %2246 = vrot.lane.b32.xlu0 %v2244, 112
    %v2247 = vpop.permute.xlu0 %2246
    %v2249 = vmax.f32 %v2244, %v2247
    %v2251 = vsel %vm446, %v2249, 0
    %2253 = vmatprep.subr.mxu0 0.0
    %2254 = vmatpush1.msra.mxu0 %v254
    %2255 = vmatprep.subr.mxu0 0.0
    %2256 = vmatpush1.msra.mxu0 0.0
    %2257 = vmatprep.subr.mxu0 0.0
    %2258 = vmatpush1.msra.mxu0 0.0
    %2259 = vmatprep.subr.mxu0 0.0
    %2260 = vmatpush1.msra.mxu0 0.0
    %2261 = vmatprep.subr.mxu0 0.0
    %2262 = vmatpush1.msra.mxu0 0.0
    %2263 = vmatprep.subr.mxu0 0.0
    %2264 = vmatpush1.msra.mxu0 0.0
    %2265 = vmatprep.subr.mxu0 0.0
    %2266 = vmatpush1.msra.mxu0 0.0
    %2267 = vmatprep.subr.mxu0 0.0
    %2268 = vmatpush1.msra.mxu0 0.0
    %2269 = vmatprep.subr.mxu0 0.0
    %2270 = vmatpush1.msra.mxu0 0.0
    %2271 = vmatprep.subr.mxu0 0.0
    %2272 = vmatpush1.msra.mxu0 0.0
    %2273 = vmatprep.subr.mxu0 0.0
    %2274 = vmatpush1.msra.mxu0 0.0
    %2275 = vmatprep.subr.mxu0 0.0
    %2276 = vmatpush1.msra.mxu0 0.0
    %2277 = vmatprep.subr.mxu0 0.0
    %2278 = vmatpush1.msra.mxu0 0.0
    %2279 = vmatprep.subr.mxu0 0.0
    %2280 = vmatpush1.msra.mxu0 0.0
    %2281 = vmatprep.subr.mxu0 0.0
    %2282 = vmatpush1.msra.mxu0 0.0
    %2283 = vmatprep.subr.mxu0 0.0
    %2284 = vmatpush1.msra.mxu0 0.0
    %2285 = vmatprep.subr.mxu0 0.0
    %2286 = vmatpush1.msra.mxu0 0.0
    %2287 = vmatprep.subr.mxu0 0.0
    %2288 = vmatpush1.msra.mxu0 0.0
    %2289 = vmatprep.subr.mxu0 0.0
    %2290 = vmatpush1.msra.mxu0 0.0
    %2291 = vmatprep.subr.mxu0 0.0
    %2292 = vmatpush1.msra.mxu0 0.0
    %2293 = vmatprep.subr.mxu0 0.0
    %2294 = vmatpush1.msra.mxu0 0.0
    %2295 = vmatprep.subr.mxu0 0.0
    %2296 = vmatpush1.msra.mxu0 0.0
    %2297 = vmatprep.subr.mxu0 0.0
    %2298 = vmatpush1.msra.mxu0 0.0
    %2299 = vmatprep.subr.mxu0 0.0
    %2300 = vmatpush1.msra.mxu0 0.0
    %2301 = vmatprep.subr.mxu0 0.0
    %2302 = vmatpush1.msra.mxu0 0.0
    %2303 = vmatprep.subr.mxu0 0.0
    %2304 = vmatpush1.msra.mxu0 0.0
    %2305 = vmatprep.subr.mxu0 0.0
    %2306 = vmatpush1.msra.mxu0 0.0
    %2307 = vmatprep.subr.mxu0 0.0
    %2308 = vmatpush1.msra.mxu0 0.0
    %2309 = vmatprep.subr.mxu0 0.0
    %2310 = vmatpush1.msra.mxu0 0.0
    %2311 = vmatprep.subr.mxu0 0.0
    %2312 = vmatpush1.msra.mxu0 0.0
    %2313 = vmatprep.subr.mxu0 0.0
    %2314 = vmatpush1.msra.mxu0 0.0
    %2315 = vmatprep.subr.mxu0 0.0
    %2316 = vmatpush1.msra.mxu0 0.0
    %2317 = vmatprep.mubr.f32.mxu0 0.0
    %2318 = vmatmul.mubr.f32.gmra.mrb[0].mxu0 %v2251
    %v2319 = vpop.f32.mrb[0].mxu0
    %v2320 = vadd.f32 0.0, %v2319
    %v2321 = vpop.f32.mrb[0].mxu0
    %2322 = vdwg.mxu0
    %v2324 = vrot.slane %v2320, 4
    %2325 = vrot.lane.b32.xlu0 %v2324, 48
    %v2326 = vpop.permute.xlu0 %2325
    %v2328 = vadd.f32 %v243, %v2326
    %v2329 = vadd.f32 %v2328, %v2131
    %v2330 = vxor.u32 %v2329, 2147483648
    %v2331 = vmul.f32 %v2330, 1.442695
    %v2332 = vpow.pop %v2331
    %v2333 = vadd.f32 %v2332, 1.0
    %v2334 = vrcp.pop %v2333
    %v2335 = vmul.f32 1.0, %v2334
    %v2336 = vmul.f32 %v2335, %v2141
    %2338 = vrot.lane.b32.xlu0 %v2336, 32
    %v2339 = vpop.permute.xlu0 %2338
    %v2341 = vadd.f32 %v2328, %v2339
    %v2342 = vtanh.pop %v2341
    %v2343 = vsub.f32 1.0, %v2335
    %2345 = vrot.lane.b32.xlu0 %v2342, 112
    %v2346 = vpop.permute.xlu0 %2345
    %v2348 = vmul.f32 %v2343, %v2346
    %v2349 = vrot.slane %v2050, 6
    %v2351 = vmul.f32 %v2335, %v2349
    %v2352 = vadd.f32 %v2348, %v2351
    %2354 = vrot.lane.b32.xlu0 %v2352, 88
    %v2355 = vpop.permute.xlu0 %2354
    %v2357 = vsel %vm56, %v2164, %v2355
    %v2359 = vrot.slane %v2357, 4
    %v2360 = vsel %vm257, %v2359, 0
    %2362 = vmatprep.subr.mxu0 0.0
    %2363 = vmatpush1.msra.mxu0 %v246
    %2364 = vmatprep.subr.mxu0 0.0
    %2365 = vmatpush1.msra.mxu0 %v247
    %2366 = vmatprep.subr.mxu0 0.0
    %2367 = vmatpush1.msra.mxu0 %v248
    %2368 = vmatprep.subr.mxu0 0.0
    %2369 = vmatpush1.msra.mxu0 %v249
    %2370 = vmatprep.subr.mxu0 0.0
    %2371 = vmatpush1.msra.mxu0 %v250
    %2372 = vmatprep.subr.mxu0 0.0
    %2373 = vmatpush1.msra.mxu0 0.0
    %2374 = vmatprep.subr.mxu0 0.0
    %2375 = vmatpush1.msra.mxu0 0.0
    %2376 = vmatprep.subr.mxu0 0.0
    %2377 = vmatpush1.msra.mxu0 0.0
    %2378 = vmatprep.subr.mxu0 0.0
    %2379 = vmatpush1.msra.mxu0 0.0
    %2380 = vmatprep.subr.mxu0 0.0
    %2381 = vmatpush1.msra.mxu0 0.0
    %2382 = vmatprep.subr.mxu0 0.0
    %2383 = vmatpush1.msra.mxu0 0.0
    %2384 = vmatprep.subr.mxu0 0.0
    %2385 = vmatpush1.msra.mxu0 0.0
    %2386 = vmatprep.subr.mxu0 0.0
    %2387 = vmatpush1.msra.mxu0 0.0
    %2388 = vmatprep.subr.mxu0 0.0
    %2389 = vmatpush1.msra.mxu0 0.0
    %2390 = vmatprep.subr.mxu0 0.0
    %2391 = vmatpush1.msra.mxu0 0.0
    %2392 = vmatprep.subr.mxu0 0.0
    %2393 = vmatpush1.msra.mxu0 0.0
    %2394 = vmatprep.subr.mxu0 0.0
    %2395 = vmatpush1.msra.mxu0 0.0
    %2396 = vmatprep.subr.mxu0 0.0
    %2397 = vmatpush1.msra.mxu0 0.0
    %2398 = vmatprep.subr.mxu0 0.0
    %2399 = vmatpush1.msra.mxu0 0.0
    %2400 = vmatprep.subr.mxu0 0.0
    %2401 = vmatpush1.msra.mxu0 0.0
    %2402 = vmatprep.subr.mxu0 0.0
    %2403 = vmatpush1.msra.mxu0 0.0
    %2404 = vmatprep.subr.mxu0 0.0
    %2405 = vmatpush1.msra.mxu0 0.0
    %2406 = vmatprep.subr.mxu0 0.0
    %2407 = vmatpush1.msra.mxu0 0.0
    %2408 = vmatprep.subr.mxu0 0.0
    %2409 = vmatpush1.msra.mxu0 0.0
    %2410 = vmatprep.subr.mxu0 0.0
    %2411 = vmatpush1.msra.mxu0 0.0
    %2412 = vmatprep.subr.mxu0 0.0
    %2413 = vmatpush1.msra.mxu0 0.0
    %2414 = vmatprep.subr.mxu0 0.0
    %2415 = vmatpush1.msra.mxu0 0.0
    %2416 = vmatprep.subr.mxu0 0.0
    %2417 = vmatpush1.msra.mxu0 0.0
    %2418 = vmatprep.subr.mxu0 0.0
    %2419 = vmatpush1.msra.mxu0 0.0
    %2420 = vmatprep.subr.mxu0 0.0
    %2421 = vmatpush1.msra.mxu0 0.0
    %2422 = vmatprep.subr.mxu0 0.0
    %2423 = vmatpush1.msra.mxu0 0.0
    %2424 = vmatprep.subr.mxu0 0.0
    %2425 = vmatpush1.msra.mxu0 0.0
    %2426 = vmatprep.mubr.f32.mxu0 0.0
    %2427 = vmatmul.mubr.f32.gmra.mrb[0].mxu0 %v2360
    %v2428 = vpop.f32.mrb[0].mxu0
    %v2429 = vadd.f32 0.0, %v2428
    %v2430 = vpop.f32.mrb[0].mxu0
    %2431 = vdwg.mxu0
    %v2433 = vrot.slane %v2429, 2
    %v2435 = vadd.f32 %v243, %v2433
    %v2436 = vxor.u32 %v2435, 2147483648
    %v2437 = vmul.f32 %v2436, 1.442695
    %v2438 = vpow.pop %v2437
    %v2439 = vadd.f32 %v2438, 1.0
    %v2440 = vrcp.pop %v2439
    %v2441 = vmul.f32 1.0, %v2440
    %2442 = vrot.lane.b32.xlu0 %v2433, 96
    %v2443 = vpop.permute.xlu0 %2442
    %v2445 = vmul.f32 %v2441, %v2443
    %2447 = vrot.lane.b32.xlu0 %v2445, 32
    %v2448 = vpop.permute.xlu0 %2447
    %v2450 = vadd.f32 %v243, %v2448
    %v2451 = vtanh.pop %v2450
    %v2452 = vsub.f32 1.0, %v2441
    %2454 = vrot.lane.b32.xlu0 %v2451, 112
    %v2455 = vpop.permute.xlu0 %2454
    %v2457 = vmul.f32 %v2452, %v2455
    %v2458 = vrot.slane %v2159, 6
    %v2460 = vmul.f32 %v2441, %v2458
    %v2461 = vadd.f32 %v2457, %v2460
    %2463 = vrot.lane.b32.xlu0 %v2461, 112
    %v2464 = vpop.permute.xlu0 %2463
    %v2466 = vsel %vm50, %v2464, %v48
    %v2468 = vrot.slane %v2466, 6
    %v2469 = vsel %vm56, %v2468, 0
    %2471 = vmatprep.subr.mxu0 0.0
    %2472 = vmatpush1.msra.mxu0 %v251
    %2473 = vmatprep.subr.mxu0 0.0
    %2474 = vmatpush1.msra.mxu0 %v252
    %2475 = vmatprep.subr.mxu0 0.0
    %2476 = vmatpush1.msra.mxu0 %v253
    %2477 = vmatprep.subr.mxu0 0.0
    %2478 = vmatpush1.msra.mxu0 0.0
    %2479 = vmatprep.subr.mxu0 0.0
    %2480 = vmatpush1.msra.mxu0 0.0
    %2481 = vmatprep.subr.mxu0 0.0
    %2482 = vmatpush1.msra.mxu0 0.0
    %2483 = vmatprep.subr.mxu0 0.0
    %2484 = vmatpush1.msra.mxu0 0.0
    %2485 = vmatprep.subr.mxu0 0.0
    %2486 = vmatpush1.msra.mxu0 0.0
    %2487 = vmatprep.subr.mxu0 0.0
    %2488 = vmatpush1.msra.mxu0 0.0
    %2489 = vmatprep.subr.mxu0 0.0
    %2490 = vmatpush1.msra.mxu0 0.0
    %2491 = vmatprep.subr.mxu0 0.0
    %2492 = vmatpush1.msra.mxu0 0.0
    %2493 = vmatprep.subr.mxu0 0.0
    %2494 = vmatpush1.msra.mxu0 0.0
    %2495 = vmatprep.subr.mxu0 0.0
    %2496 = vmatpush1.msra.mxu0 0.0
    %2497 = vmatprep.subr.mxu0 0.0
    %2498 = vmatpush1.msra.mxu0 0.0
    %2499 = vmatprep.subr.mxu0 0.0
    %2500 = vmatpush1.msra.mxu0 0.0
    %2501 = vmatprep.subr.mxu0 0.0
    %2502 = vmatpush1.msra.mxu0 0.0
    %2503 = vmatprep.subr.mxu0 0.0
    %2504 = vmatpush1.msra.mxu0 0.0
    %2505 = vmatprep.subr.mxu0 0.0
    %2506 = vmatpush1.msra.mxu0 0.0
    %2507 = vmatprep.subr.mxu0 0.0
    %2508 = vmatpush1.msra.mxu0 0.0
    %2509 = vmatprep.subr.mxu0 0.0
    %2510 = vmatpush1.msra.mxu0 0.0
    %2511 = vmatprep.subr.mxu0 0.0
    %2512 = vmatpush1.msra.mxu0 0.0
    %2513 = vmatprep.subr.mxu0 0.0
    %2514 = vmatpush1.msra.mxu0 0.0
    %2515 = vmatprep.subr.mxu0 0.0
    %2516 = vmatpush1.msra.mxu0 0.0
    %2517 = vmatprep.subr.mxu0 0.0
    %2518 = vmatpush1.msra.mxu0 0.0
    %2519 = vmatprep.subr.mxu0 0.0
    %2520 = vmatpush1.msra.mxu0 0.0
    %2521 = vmatprep.subr.mxu0 0.0
    %2522 = vmatpush1.msra.mxu0 0.0
    %2523 = vmatprep.subr.mxu0 0.0
    %2524 = vmatpush1.msra.mxu0 0.0
    %2525 = vmatprep.subr.mxu0 0.0
    %2526 = vmatpush1.msra.mxu0 0.0
    %2527 = vmatprep.subr.mxu0 0.0
    %2528 = vmatpush1.msra.mxu0 0.0
    %2529 = vmatprep.subr.mxu0 0.0
    %2530 = vmatpush1.msra.mxu0 0.0
    %2531 = vmatprep.subr.mxu0 0.0
    %2532 = vmatpush1.msra.mxu0 0.0
    %2533 = vmatprep.subr.mxu0 0.0
    %2534 = vmatpush1.msra.mxu0 0.0
    %2535 = vmatprep.mubr.f32.mxu0 0.0
    %2536 = vmatmul.mubr.f32.gmra.mrb[0].mxu0 %v2469
    %v2537 = vpop.f32.mrb[0].mxu0
    %v2538 = vadd.f32 0.0, %v2537
    %v2539 = vpop.f32.mrb[0].mxu0
    %2540 = vdwg.mxu0
    %v2541 = vmax.f32 %v2538, 0.0
    %2543 = vrot.lane.b32.xlu0 %v2541, 120
    %v2544 = vpop.permute.xlu0 %2543
    %v2546 = vmax.f32 %v2541, %v2544
    %2548 = vrot.lane.b32.xlu0 %v2546, 112
    %v2549 = vpop.permute.xlu0 %2548
    %v2551 = vmax.f32 %v2546, %v2549
    %v2553 = vsel %vm446, %v2551, 0
    %2555 = vmatprep.subr.mxu0 0.0
    %2556 = vmatpush1.msra.mxu0 %v254
    %2557 = vmatprep.subr.mxu0 0.0
    %2558 = vmatpush1.msra.mxu0 0.0
    %2559 = vmatprep.subr.mxu0 0.0
    %2560 = vmatpush1.msra.mxu0 0.0
    %2561 = vmatprep.subr.mxu0 0.0
    %2562 = vmatpush1.msra.mxu0 0.0
    %2563 = vmatprep.subr.mxu0 0.0
    %2564 = vmatpush1.msra.mxu0 0.0
    %2565 = vmatprep.subr.mxu0 0.0
    %2566 = vmatpush1.msra.mxu0 0.0
    %2567 = vmatprep.subr.mxu0 0.0
    %2568 = vmatpush1.msra.mxu0 0.0
    %2569 = vmatprep.subr.mxu0 0.0
    %2570 = vmatpush1.msra.mxu0 0.0
    %2571 = vmatprep.subr.mxu0 0.0
    %2572 = vmatpush1.msra.mxu0 0.0
    %2573 = vmatprep.subr.mxu0 0.0
    %2574 = vmatpush1.msra.mxu0 0.0
    %2575 = vmatprep.subr.mxu0 0.0
    %2576 = vmatpush1.msra.mxu0 0.0
    %2577 = vmatprep.subr.mxu0 0.0
    %2578 = vmatpush1.msra.mxu0 0.0
    %2579 = vmatprep.subr.mxu0 0.0
    %2580 = vmatpush1.msra.mxu0 0.0
    %2581 = vmatprep.subr.mxu0 0.0
    %2582 = vmatpush1.msra.mxu0 0.0
    %2583 = vmatprep.subr.mxu0 0.0
    %2584 = vmatpush1.msra.mxu0 0.0
    %2585 = vmatprep.subr.mxu0 0.0
    %2586 = vmatpush1.msra.mxu0 0.0
    %2587 = vmatprep.subr.mxu0 0.0
    %2588 = vmatpush1.msra.mxu0 0.0
    %2589 = vmatprep.subr.mxu0 0.0
    %2590 = vmatpush1.msra.mxu0 0.0
    %2591 = vmatprep.subr.mxu0 0.0
    %2592 = vmatpush1.msra.mxu0 0.0
    %2593 = vmatprep.subr.mxu0 0.0
    %2594 = vmatpush1.msra.mxu0 0.0
    %2595 = vmatprep.subr.mxu0 0.0
    %2596 = vmatpush1.msra.mxu0 0.0
    %2597 = vmatprep.subr.mxu0 0.0
    %2598 = vmatpush1.msra.mxu0 0.0
    %2599 = vmatprep.subr.mxu0 0.0
    %2600 = vmatpush1.msra.mxu0 0.0
    %2601 = vmatprep.subr.mxu0 0.0
    %2602 = vmatpush1.msra.mxu0 0.0
    %2603 = vmatprep.subr.mxu0 0.0
    %2604 = vmatpush1.msra.mxu0 0.0
    %2605 = vmatprep.subr.mxu0 0.0
    %2606 = vmatpush1.msra.mxu0 0.0
    %2607 = vmatprep.subr.mxu0 0.0
    %2608 = vmatpush1.msra.mxu0 0.0
    %2609 = vmatprep.subr.mxu0 0.0
    %2610 = vmatpush1.msra.mxu0 0.0
    %2611 = vmatprep.subr.mxu0 0.0
    %2612 = vmatpush1.msra.mxu0 0.0
    %2613 = vmatprep.subr.mxu0 0.0
    %2614 = vmatpush1.msra.mxu0 0.0
    %2615 = vmatprep.subr.mxu0 0.0
    %2616 = vmatpush1.msra.mxu0 0.0
    %2617 = vmatprep.subr.mxu0 0.0
    %2618 = vmatpush1.msra.mxu0 0.0
    %2619 = vmatprep.mubr.f32.mxu0 0.0
    %2620 = vmatmul.mubr.f32.gmra.mrb[0].mxu0 %v2553
    %v2621 = vpop.f32.mrb[0].mxu0
    %v2622 = vadd.f32 0.0, %v2621
    %v2623 = vpop.f32.mrb[0].mxu0
    %2624 = vdwg.mxu0
    %v2626 = vrot.slane %v2622, 2
    %2627 = vrot.lane.b32.xlu0 %v2626, 48
    %v2628 = vpop.permute.xlu0 %2627
    %v2630 = vadd.f32 %v243, %v2628
    %v2631 = vadd.f32 %v2630, %v2433
    %v2632 = vxor.u32 %v2631, 2147483648
    %v2633 = vmul.f32 %v2632, 1.442695
    %v2634 = vpow.pop %v2633
    %v2635 = vadd.f32 %v2634, 1.0
    %v2636 = vrcp.pop %v2635
    %v2637 = vmul.f32 1.0, %v2636
    %v2638 = vmul.f32 %v2637, %v2443
    %2640 = vrot.lane.b32.xlu0 %v2638, 32
    %v2641 = vpop.permute.xlu0 %2640
    %v2643 = vadd.f32 %v2630, %v2641
    %v2644 = vtanh.pop %v2643
    %v2645 = vsub.f32 1.0, %v2637
    %2647 = vrot.lane.b32.xlu0 %v2644, 112
    %v2648 = vpop.permute.xlu0 %2647
    %v2650 = vmul.f32 %v2645, %v2648
    %v2651 = vrot.slane %v2352, 6
    %v2653 = vmul.f32 %v2637, %v2651
    %v2654 = vadd.f32 %v2650, %v2653
    %2656 = vrot.lane.b32.xlu0 %v2654, 88
    %v2657 = vpop.permute.xlu0 %2656
    %v2659 = vsel %vm56, %v2466, %v2657
    %vm2660 = vcmask 1041408
    %v2661 = vsel %vm2660, %v551, %v852
    %vm2662 = vcmask 1043456
    %v2663 = vsel %vm2662, %v2661, %v1154
    %vm2664 = vcmask 1045504
    %v2665 = vsel %vm2664, %v2663, %v1456
    %v2666 = vsel %vm2660, %v1754, %v2055
    %v2667 = vsel %vm2662, %v2666, %v2357
    %v2668 = vsel %vm2664, %v2667, %v2659
    %v2669 = vld [vmem:[#allocation4 + $0x78] sm:$0xff]
    %v2670 = vld [vmem:[#allocation4 + $0x80] sm:$0xff]
    %v2671 = vld [vmem:[#allocation4 + $0x88] sm:$0xff]
    %v2672 = vld [vmem:[#allocation4 + $0x90] sm:$0xff]
    %v2673 = vld [vmem:[#allocation4 + $0x98] sm:$0xff]
    %v2675 = vsel %vm257, %v2665, 0
    %v2678 = vsel %vm257, %v2668, 0
    %2680 = vmatprep.subr.mxu0 0.0
    %2681 = vmatpush1.msra.mxu0 %v2669
    %2682 = vmatprep.subr.mxu0 0.0
    %2683 = vmatpush1.msra.mxu0 %v2670
    %2684 = vmatprep.subr.mxu0 0.0
    %2685 = vmatpush1.msra.mxu0 %v2671
    %2686 = vmatprep.subr.mxu0 0.0
    %2687 = vmatpush1.msra.mxu0 %v2672
    %2688 = vmatprep.subr.mxu0 0.0
    %2689 = vmatpush1.msra.mxu0 %v2673
    %2690 = vmatprep.subr.mxu0 0.0
    %2691 = vmatpush1.msra.mxu0 0.0
    %2692 = vmatprep.subr.mxu0 0.0
    %2693 = vmatpush1.msra.mxu0 0.0
    %2694 = vmatprep.subr.mxu0 0.0
    %2695 = vmatpush1.msra.mxu0 0.0
    %2696 = vmatprep.subr.mxu0 0.0
    %2697 = vmatpush1.msra.mxu0 0.0
    %2698 = vmatprep.subr.mxu0 0.0
    %2699 = vmatpush1.msra.mxu0 0.0
    %2700 = vmatprep.subr.mxu0 0.0
    %2701 = vmatpush1.msra.mxu0 0.0
    %2702 = vmatprep.subr.mxu0 0.0
    %2703 = vmatpush1.msra.mxu0 0.0
    %2704 = vmatprep.subr.mxu0 0.0
    %2705 = vmatpush1.msra.mxu0 0.0
    %2706 = vmatprep.subr.mxu0 0.0
    %2707 = vmatpush1.msra.mxu0 0.0
    %2708 = vmatprep.subr.mxu0 0.0
    %2709 = vmatpush1.msra.mxu0 0.0
    %2710 = vmatprep.subr.mxu0 0.0
    %2711 = vmatpush1.msra.mxu0 0.0
    %2712 = vmatprep.subr.mxu0 0.0
    %2713 = vmatpush1.msra.mxu0 0.0
    %2714 = vmatprep.subr.mxu0 0.0
    %2715 = vmatpush1.msra.mxu0 0.0
    %2716 = vmatprep.subr.mxu0 0.0
    %2717 = vmatpush1.msra.mxu0 0.0
    %2718 = vmatprep.subr.mxu0 0.0
    %2719 = vmatpush1.msra.mxu0 0.0
    %2720 = vmatprep.subr.mxu0 0.0
    %2721 = vmatpush1.msra.mxu0 0.0
    %2722 = vmatprep.subr.mxu0 0.0
    %2723 = vmatpush1.msra.mxu0 0.0
    %2724 = vmatprep.subr.mxu0 0.0
    %2725 = vmatpush1.msra.mxu0 0.0
    %2726 = vmatprep.subr.mxu0 0.0
    %2727 = vmatpush1.msra.mxu0 0.0
    %2728 = vmatprep.subr.mxu0 0.0
    %2729 = vmatpush1.msra.mxu0 0.0
    %2730 = vmatprep.subr.mxu0 0.0
    %2731 = vmatpush1.msra.mxu0 0.0
    %2732 = vmatprep.subr.mxu0 0.0
    %2733 = vmatpush1.msra.mxu0 0.0
    %2734 = vmatprep.subr.mxu0 0.0
    %2735 = vmatpush1.msra.mxu0 0.0
    %2736 = vmatprep.subr.mxu0 0.0
    %2737 = vmatpush1.msra.mxu0 0.0
    %2738 = vmatprep.subr.mxu0 0.0
    %2739 = vmatpush1.msra.mxu0 0.0
    %2740 = vmatprep.subr.mxu0 0.0
    %2741 = vmatpush1.msra.mxu0 0.0
    %2742 = vmatprep.subr.mxu0 0.0
    %2743 = vmatpush1.msra.mxu0 0.0
    %2744 = vmatprep.mubr.f32.mxu0 0.0
    %2745 = vmatmul.mubr.f32.gmra.mrb[0].mxu0 %v2675
    %v2746 = vpop.f32.mrb[0].mxu0
    %v2747 = vadd.f32 0.0, %v2746
    %v2748 = vpop.f32.mrb[0].mxu0
    %2749 = vmatprep.mubr.f32.mxu0 0.0
    %2750 = vmatmul.mubr.f32.gmra.mrb[0].mxu0 %v2678
    %v2751 = vpop.f32.mrb[0].mxu0
    %v2752 = vadd.f32 0.0, %v2751
    %v2753 = vpop.f32.mrb[0].mxu0
    %2754 = vdwg.mxu0
    %v2755 = vxor.u32 %v2747, 2147483648
    %v2756 = vxor.u32 %v2752, 2147483648
    %v2757 = vmul.f32 %v2755, 1.442695
    %v2758 = vpow.pop %v2757
    %v2759 = vmul.f32 %v2756, 1.442695
    %v2760 = vpow.pop %v2759
    %v2761 = vadd.f32 %v2758, 1.0
    %v2762 = vadd.f32 %v2760, 1.0
    %v2763 = vrcp.pop %v2761
    %v2764 = vmul.f32 1.0, %v2763
    %v2765 = vrcp.pop %v2762
    %v2766 = vmul.f32 1.0, %v2765
    %2767 = vst [vmem:[%s2] sm:$0xff] %v2764
    %2768 = vst [vmem:[%s2 + $0x8] sm:$0xff] %v2766
    // Predicated region
    $region18: #{hedln_cr_forward.1} parent=1 // pred_check
      _
    $region19: #{hedln_cr_forward.1} parent=1 // pred_check_branch
      %2770 = sbr.rel (0) target = $region21
    $region20: #{hedln_cr_forward.1} parent=1 // pred_region
      _
    $region21: #{hedln_cr_forward.1} parent=1 // pred_fallthru
      _
    // Predicated region
    $region22: #{hedln_cr_forward.1} parent=1 // pred_check
      _
    $region23: #{hedln_cr_forward.1} parent=1 // pred_check_branch
      %2772 = sbr.rel (0) target = $region25
    $region24: #{hedln_cr_forward.1} parent=1 // pred_region
      _
    $region25: #{hedln_cr_forward.1} parent=1 // pred_fallthru
      _
    %2773 = vsyncpa [#allocation3], 1
    %2774 = vsyncpa [#allocation5], 1

</llo_original>
